<compile_context>
chip_gen: v7x
topology: tpu7x:2x2x1
jax: 0.10.0
libtpu: 0.0.40
codegen_flags: <defaults>
</compile_context>

<pallas_src>
import functools

import jax
import jax.numpy as jnp
from jax.experimental import pallas as pl
from jax.experimental.pallas import tpu as pltpu

# ----------------------------- scaled-down BERT config -----------------------------
VOCAB = 100
TYPE_VOCAB = 2
MAX_POS = 64
HIDDEN = 128          # stands in for 768 at small scale
N_HEADS = 4
HEAD_DIM = HIDDEN // N_HEADS
FFN = 4 * HIDDEN
N_LAYERS = 2
N_CLASSES = 5         # "number_class"
CLS_PAD = 128         # lane-dense padded classifier width (sliced to N_CLASSES in wrapper)
LN_EPS = 1e-12
ROW_TILE = 8          # token-row tile for LN / FFN kernels (multiple of 8 sublanes)


# ----------------------------- in-kernel helpers -----------------------------
def _gelu(x):
    # TODO(synk): exact BERT uses erf-GELU; tanh approximation used here.
    return 0.5 * x * (1.0 + jnp.tanh(0.7978845608028654 * (x + 0.044715 * x * x * x)))


def _layernorm(y, gamma, beta, eps):
    # single-pass statistics (E[x], E[x^2]) -> one pair of XLU reductions per row
    mean = jnp.mean(y, axis=-1, keepdims=True)
    mean2 = jnp.mean(y * y, axis=-1, keepdims=True)
    var = jnp.maximum(mean2 - mean * mean, 0.0)
    return (y - mean) * jax.lax.rsqrt(var + eps) * gamma + beta


# ----------------------------- Pallas kernels -----------------------------
def layernorm_kernel(x_ref, g_ref, b_ref, o_ref, *, eps):
    o_ref[...] = _layernorm(x_ref[...], g_ref[...], b_ref[...], eps).astype(o_ref.dtype)


def layernorm(x, gamma, beta, eps=LN_EPS):
    """LayerNorm(x) * gamma + beta, no residual input.  x: (M, H) f32."""
    M, H = x.shape
    tm = ROW_TILE if M % ROW_TILE == 0 else M
    return pl.pallas_call(
        functools.partial(layernorm_kernel, eps=eps),
        out_shape=jax.ShapeDtypeStruct((M, H), jnp.float32),
        grid=(M // tm,),
        in_specs=[
            pl.BlockSpec((tm, H), lambda i: (i, 0)),
            pl.BlockSpec((1, H), lambda i: (0, 0)),
            pl.BlockSpec((1, H), lambda i: (0, 0)),
        ],
        out_specs=pl.BlockSpec((tm, H), lambda i: (i, 0)),
        compiler_params=pltpu.CompilerParams(dimension_semantics=("parallel",)),
    )(x, gamma.reshape(1, H), beta.reshape(1, H))


def attn_block_kernel(x_ref, wqkv_ref, bqkv_ref, wo_ref, bo_ref, mask_ref,
                      g_ref, b_ref, o_ref, *, scale, eps):
    """One full attention sub-block for one batch element: fused QKV projection,
    per-head softmax attention, output projection, residual add + LayerNorm."""
    x = x_ref[...]                                                    # (S, H) f32
    # fused Q/K/V projection: single bf16 MXU matmul, f32 accumulate
    qkv = jnp.dot(x.astype(jnp.bfloat16), wqkv_ref[...],
                  preferred_element_type=jnp.float32) + bqkv_ref[...]  # (S, 3H)
    q = qkv[:, 0 * HIDDEN:1 * HIDDEN]
    k = qkv[:, 1 * HIDDEN:2 * HIDDEN]
    v = qkv[:, 2 * HIDDEN:3 * HIDDEN]
    bias = mask_ref[0]                                                # (1, S) additive mask

    ctx_heads = []
    for h in range(N_HEADS):          # static unroll; split/merge heads stays in VMEM
        sl = slice(h * HEAD_DIM, (h + 1) * HEAD_DIM)
        q_h, k_h, v_h = q[:, sl], k[:, sl], v[:, sl]
        s = jax.lax.dot_general(q_h.astype(jnp.bfloat16), k_h.astype(jnp.bfloat16),
                                (((1,), (1,)), ((), ())),
                                preferred_element_type=jnp.float32)    # (S, S)
        s = s * scale + bias
        s = s - jnp.max(s, axis=-1, keepdims=True)
        p = jnp.exp(s)
        p = p * pl.reciprocal(jnp.sum(p, axis=-1, keepdims=True), approx=True)
        ctx_heads.append(jnp.dot(p.astype(jnp.bfloat16), v_h.astype(jnp.bfloat16),
                                 preferred_element_type=jnp.float32))  # (S, Dh)
    ctx = jnp.concatenate(ctx_heads, axis=-1)                          # (S, H) lane-dense

    attn_out = jnp.dot(ctx.astype(jnp.bfloat16), wo_ref[...],
                       preferred_element_type=jnp.float32) + bo_ref[...]
    o_ref[...] = _layernorm(attn_out + x, g_ref[...], b_ref[...], eps).astype(o_ref.dtype)


def attention_block(x, wqkv, bqkv, wo, bo, mask_bias, gamma, beta, batch, seq):
    """x: (B*S, H) f32 -> LayerNorm(attn(x) + x).  One grid step per batch element."""
    M, H = x.shape
    return pl.pallas_call(
        functools.partial(attn_block_kernel,
                          scale=1.0 / (HEAD_DIM ** 0.5), eps=LN_EPS),
        out_shape=jax.ShapeDtypeStruct((M, H), jnp.float32),
        grid=(batch,),
        in_specs=[
            pl.BlockSpec((seq, H), lambda b: (b, 0)),        # rows of batch b
            pl.BlockSpec((H, 3 * H), lambda b: (0, 0)),      # fused QKV weight (bf16)
            pl.BlockSpec((1, 3 * H), lambda b: (0, 0)),
            pl.BlockSpec((H, H), lambda b: (0, 0)),          # output projection (bf16)
            pl.BlockSpec((1, H), lambda b: (0, 0)),
            pl.BlockSpec((1, 1, seq), lambda b: (b, 0, 0)),  # additive attention mask
            pl.BlockSpec((1, H), lambda b: (0, 0)),
            pl.BlockSpec((1, H), lambda b: (0, 0)),
        ],
        out_specs=pl.BlockSpec((seq, H), lambda b: (b, 0)),
        compiler_params=pltpu.CompilerParams(dimension_semantics=("parallel",)),
    )(x, wqkv, bqkv.reshape(1, 3 * H), wo, bo.reshape(1, H),
      mask_bias, gamma.reshape(1, H), beta.reshape(1, H))


def ffn_block_kernel(x_ref, w1_ref, b1_ref, w2_ref, b2_ref, g_ref, b_ref, o_ref, *, eps):
    x = x_ref[...]                                                     # (tm, H)
    h1 = jnp.dot(x.astype(jnp.bfloat16), w1_ref[...],
                 preferred_element_type=jnp.float32) + b1_ref[...]
    h1 = _gelu(h1)
    h2 = jnp.dot(h1.astype(jnp.bfloat16), w2_ref[...],
                 preferred_element_type=jnp.float32) + b2_ref[...]
    o_ref[...] = _layernorm(h2 + x, g_ref[...], b_ref[...], eps).astype(o_ref.dtype)


def ffn_block(x, w1, b1, w2, b2, gamma, beta):
    """LayerNorm(gelu(x@w1+b1)@w2 + b2 + x), tiled over token rows."""
    M, H = x.shape
    F = w1.shape[1]
    tm = ROW_TILE if M % ROW_TILE == 0 else M
    # TODO(synk): at real BERT scale also tile N/K (256-multiples on v6e/v7x) so the
    #             double-buffered FFN operands fit v7x's 64 MiB VMEM.
    return pl.pallas_call(
        functools.partial(ffn_block_kernel, eps=LN_EPS),
        out_shape=jax.ShapeDtypeStruct((M, H), jnp.float32),
        grid=(M // tm,),
        in_specs=[
            pl.BlockSpec((tm, H), lambda i: (i, 0)),
            pl.BlockSpec((H, F), lambda i: (0, 0)),
            pl.BlockSpec((1, F), lambda i: (0, 0)),
            pl.BlockSpec((F, H), lambda i: (0, 0)),
            pl.BlockSpec((1, H), lambda i: (0, 0)),
            pl.BlockSpec((1, H), lambda i: (0, 0)),
            pl.BlockSpec((1, H), lambda i: (0, 0)),
        ],
        out_specs=pl.BlockSpec((tm, H), lambda i: (i, 0)),
        compiler_params=pltpu.CompilerParams(dimension_semantics=("parallel",)),
    )(x, w1, b1.reshape(1, F), w2, b2.reshape(1, H),
      gamma.reshape(1, H), beta.reshape(1, H))


def head_kernel(x_ref, wp_ref, bp_ref, wc_ref, bc_ref, o_ref):
    """Fused pooler (tanh) + classifier + sigmoid with a lane-dense padded output."""
    x = x_ref[...]                                                     # (B, H) f32
    pooled = jnp.tanh(jnp.dot(x.astype(jnp.bfloat16), wp_ref[...],
                              preferred_element_type=jnp.float32) + bp_ref[...])
    logits = jnp.dot(pooled.astype(jnp.bfloat16), wc_ref[...],
                     preferred_element_type=jnp.float32) + bc_ref[...]
    o_ref[...] = jax.nn.sigmoid(logits).astype(o_ref.dtype)


def pooler_classifier_head(cls_tok, wp, bp, wc_pad, bc_pad):
    B, H = cls_tok.shape
    return pl.pallas_call(
        head_kernel,
        out_shape=jax.ShapeDtypeStruct((B, CLS_PAD), jnp.float32),
        grid=(1,),
        in_specs=[
            pl.BlockSpec((B, H), lambda i: (0, 0)),
            pl.BlockSpec((H, H), lambda i: (0, 0)),
            pl.BlockSpec((1, H), lambda i: (0, 0)),
            pl.BlockSpec((H, CLS_PAD), lambda i: (0, 0)),
            pl.BlockSpec((1, CLS_PAD), lambda i: (0, 0)),
        ],
        out_specs=pl.BlockSpec((B, CLS_PAD), lambda i: (0, 0)),
    )(cls_tok, wp, bp.reshape(1, H), wc_pad, bc_pad.reshape(1, CLS_PAD))


# ----------------------------- parameters -----------------------------
def init_params(key):
    keys = iter(jax.random.split(key, 64))

    def nrm(shape, dtype=jnp.float32):
        return (0.02 * jax.random.normal(next(keys), shape, jnp.float32)).astype(dtype)

    def dense(din, dout):
        # weights stored bf16 (MXU operands, half the HBM bytes); biases stay f32
        return {"w": nrm((din, dout), jnp.bfloat16), "b": jnp.zeros((dout,), jnp.float32)}

    cls_w = nrm((HIDDEN, N_CLASSES))
    cls_b = jnp.zeros((N_CLASSES,), jnp.float32)
    params = {
        "word_emb": nrm((VOCAB, HIDDEN)),
        "pos_emb": nrm((MAX_POS, HIDDEN)),
        "type_emb": nrm((TYPE_VOCAB, HIDDEN)),
        "emb_ln_g": jnp.ones((HIDDEN,), jnp.float32),
        "emb_ln_b": jnp.zeros((HIDDEN,), jnp.float32),
        "layers": [],
        "pooler": dense(HIDDEN, HIDDEN),
        # self.linear = nn.Linear(768, number_class): zero-padded to a lane-dense width
        "cls_w_pad": jnp.pad(cls_w, ((0, 0), (0, CLS_PAD - N_CLASSES))).astype(jnp.bfloat16),
        "cls_b_pad": jnp.pad(cls_b, (0, CLS_PAD - N_CLASSES)),
    }
    for _ in range(N_LAYERS):
        params["layers"].append({
            "qkv": dense(HIDDEN, 3 * HIDDEN),   # fused Q/K/V projection weight
            "o": dense(HIDDEN, HIDDEN),
            "ln1_g": jnp.ones((HIDDEN,), jnp.float32),
            "ln1_b": jnp.zeros((HIDDEN,), jnp.float32),
            "ffn1": dense(HIDDEN, FFN),
            "ffn2": dense(FFN, HIDDEN),
            "ln2_g": jnp.ones((HIDDEN,), jnp.float32),
            "ln2_b": jnp.zeros((HIDDEN,), jnp.float32),
        })
    return params


# ----------------------------- forward pass -----------------------------
@jax.jit
def sentence_multiclass_forward(params, input_ids, token_type_ids, attention_mask):
    """Mirrors: x = BERT(...).pooler_output; x = Linear(x); x = Sigmoid(x)."""
    B, S = input_ids.shape

    # --- embeddings: table gathers stay in plain JAX (glue); LayerNorm is Pallas ---
    emb = (params["word_emb"][input_ids]
           + params["pos_emb"][jnp.arange(S)][None, :, :]
           + params["type_emb"][token_type_ids])                       # (B, S, H)
    h = layernorm(emb.reshape(B * S, HIDDEN),
                  params["emb_ln_g"], params["emb_ln_b"])              # (B*S, H)

    # additive attention mask: 0 for attended tokens, -10000 for padding
    mask_bias = ((1.0 - attention_mask.astype(jnp.float32)) * -10000.0).reshape(B, 1, S)

    # --- transformer encoder layers: 2 fused pallas_calls per layer ---
    for layer in params["layers"]:
        h = attention_block(h, layer["qkv"]["w"], layer["qkv"]["b"],
                            layer["o"]["w"], layer["o"]["b"],
                            mask_bias, layer["ln1_g"], layer["ln1_b"], B, S)
        h = ffn_block(h, layer["ffn1"]["w"], layer["ffn1"]["b"],
                      layer["ffn2"]["w"], layer["ffn2"]["b"],
                      layer["ln2_g"], layer["ln2_b"])

    # --- pooler + classification head: tanh(W_p h[:,0] + b_p) -> sigmoid(Linear) ---
    cls_tok = h.reshape(B, S, HIDDEN)[:, 0, :]                         # (B, H)
    probs_pad = pooler_classifier_head(cls_tok,
                                       params["pooler"]["w"], params["pooler"]["b"],
                                       params["cls_w_pad"], params["cls_b_pad"])
    return probs_pad[:, :N_CLASSES]                                    # (B, N_CLASSES)


# ----------------------------- main -----------------------------
if __name__ == "__main__":
    key = jax.random.PRNGKey(0)
    pkey, dkey = jax.random.split(key)
    params = init_params(pkey)

    B, S = 2, 8
    k1, _ = jax.random.split(dkey)
    input_ids = jax.random.randint(k1, (B, S), 0, VOCAB, dtype=jnp.int32)
    token_type_ids = jnp.zeros((B, S), dtype=jnp.int32)
    attention_mask = jnp.ones((B, S), dtype=jnp.int32)

    out = sentence_multiclass_forward(params, input_ids, token_type_ids, attention_mask)
    out = jax.block_until_ready(out)

    assert out.shape == (B, N_CLASSES), out.shape
    assert out.dtype == jnp.float32
    assert bool(jnp.all((out >= 0.0) & (out <= 1.0)))  # sigmoid range
    print("KERNEL_OK")
</pallas_src>

<mosaic_0001>
module attributes {stable_mosaic.version = 11 : i64} {
  func.func @layernorm_kernel(%arg0: i32, %arg1: memref<8x128xf32, #tpu.memory_space<vmem>>, %arg2: memref<1x128xf32, #tpu.memory_space<vmem>>, %arg3: memref<1x128xf32, #tpu.memory_space<vmem>>, %arg4: memref<8x128xf32, #tpu.memory_space<vmem>>) attributes {dimension_semantics = [#tpu.dimension_semantics<parallel>], iteration_bounds = array<i64: 2>, scalar_prefetch = 0 : i64, scratch_operands = 0 : i64, tpu.core_type = #tpu.core_type<tc>, window_params = [{transform_indices = @transform_0, window_bounds = array<i64: 8, 128>}, {pipeline_mode = #tpu.pipeline_mode<synchronous>, transform_indices = @transform_1, window_bounds = array<i64: 1, 128>}, {pipeline_mode = #tpu.pipeline_mode<synchronous>, transform_indices = @transform_2, window_bounds = array<i64: 1, 128>}, {transform_indices = @transform_3, window_bounds = array<i64: 8, 128>}]} {
    %c0 = arith.constant 0 : index
    %c0_0 = arith.constant 0 : index
    %0 = vector.load %arg1[%c0, %c0_0] : memref<8x128xf32, #tpu.memory_space<vmem>>, vector<8x128xf32>
    %c0_1 = arith.constant 0 : index
    %c0_2 = arith.constant 0 : index
    %1 = vector.load %arg2[%c0_1, %c0_2] : memref<1x128xf32, #tpu.memory_space<vmem>>, vector<1x128xf32>
    %c0_3 = arith.constant 0 : index
    %c0_4 = arith.constant 0 : index
    %2 = vector.load %arg3[%c0_3, %c0_4] : memref<1x128xf32, #tpu.memory_space<vmem>>, vector<1x128xf32>
    %cst = arith.constant dense<0.000000e+00> : vector<8xf32>
    %3 = vector.multi_reduction <add>, %0, %cst [1] : vector<8x128xf32> to vector<8xf32>
    %4 = vector.shape_cast %3 : vector<8xf32> to vector<8x1xf32>
    %cst_5 = arith.constant 1.280000e+02 : f32
    %5 = vector.broadcast %cst_5 : f32 to vector<8x1xf32>
    %6 = arith.divf %4, %5 : vector<8x1xf32>
    %7 = arith.mulf %0, %0 : vector<8x128xf32>
    %cst_6 = arith.constant dense<0.000000e+00> : vector<8xf32>
    %8 = vector.multi_reduction <add>, %7, %cst_6 [1] : vector<8x128xf32> to vector<8xf32>
    %9 = vector.shape_cast %8 : vector<8xf32> to vector<8x1xf32>
    %cst_7 = arith.constant 1.280000e+02 : f32
    %10 = vector.broadcast %cst_7 : f32 to vector<8x1xf32>
    %11 = arith.divf %9, %10 : vector<8x1xf32>
    %12 = arith.mulf %6, %6 : vector<8x1xf32>
    %13 = arith.subf %11, %12 : vector<8x1xf32>
    %cst_8 = arith.constant 0.000000e+00 : f32
    %14 = vector.broadcast %cst_8 : f32 to vector<8x1xf32>
    %15 = arith.maximumf %13, %14 : vector<8x1xf32>
    %16 = vector.broadcast %6 : vector<8x1xf32> to vector<8x128xf32>
    %17 = arith.subf %0, %16 : vector<8x128xf32>
    %cst_9 = arith.constant 9.99999996E-13 : f32
    %18 = vector.broadcast %cst_9 : f32 to vector<8x1xf32>
    %19 = arith.addf %15, %18 : vector<8x1xf32>
    %20 = math.rsqrt %19 : vector<8x1xf32>
    %21 = vector.broadcast %20 : vector<8x1xf32> to vector<8x128xf32>
    %22 = arith.mulf %17, %21 : vector<8x128xf32>
    %23 = vector.broadcast %1 : vector<1x128xf32> to vector<8x128xf32>
    %24 = arith.mulf %22, %23 : vector<8x128xf32>
    %25 = vector.broadcast %2 : vector<1x128xf32> to vector<8x128xf32>
    %26 = arith.addf %24, %25 : vector<8x128xf32>
    %c0_10 = arith.constant 0 : index
    %c0_11 = arith.constant 0 : index
    %27 = vector.load %arg4[%c0_10, %c0_11] : memref<8x128xf32, #tpu.memory_space<vmem>>, vector<8x128xf32>
    tpu.vector_store %arg4[%c0_10, %c0_11], %26 {strides = array<i32>} : memref<8x128xf32, #tpu.memory_space<vmem>>, vector<8x128xf32>,
    return
  }
  func.func @transform_0(%arg0: i32) -> (i32, i32) {
    %c0_i32 = arith.constant 0 : i32
    %c0_i32_0 = arith.constant 0 : i32
    return %arg0, %c0_i32 : i32, i32
  }
  func.func @transform_1(%arg0: i32) -> (i32, i32) {
    %c0_i32 = arith.constant 0 : i32
    %c0_i32_0 = arith.constant 0 : i32
    %c0_i32_1 = arith.constant 0 : i32
    return %c0_i32, %c0_i32_0 : i32, i32
  }
  func.func @transform_2(%arg0: i32) -> (i32, i32) {
    %c0_i32 = arith.constant 0 : i32
    %c0_i32_0 = arith.constant 0 : i32
    %c0_i32_1 = arith.constant 0 : i32
    return %c0_i32, %c0_i32_0 : i32, i32
  }
  func.func @transform_3(%arg0: i32) -> (i32, i32) {
    %c0_i32 = arith.constant 0 : i32
    %c0_i32_0 = arith.constant 0 : i32
    return %arg0, %c0_i32 : i32, i32
  }
}

module attributes {stable_mosaic.version = 11 : i64} {
  func.func @ffn_block_kernel(%arg0: i32, %arg1: memref<8x128xf32, #tpu.memory_space<vmem>>, %arg2: memref<128x512xbf16, #tpu.memory_space<vmem>>, %arg3: memref<1x512xf32, #tpu.memory_space<vmem>>, %arg4: memref<512x128xbf16, #tpu.memory_space<vmem>>, %arg5: memref<1x128xf32, #tpu.memory_space<vmem>>, %arg6: memref<1x128xf32, #tpu.memory_space<vmem>>, %arg7: memref<1x128xf32, #tpu.memory_space<vmem>>, %arg8: memref<8x128xf32, #tpu.memory_space<vmem>>) attributes {dimension_semantics = [#tpu.dimension_semantics<parallel>], iteration_bounds = array<i64: 2>, scalar_prefetch = 0 : i64, scratch_operands = 0 : i64, tpu.core_type = #tpu.core_type<tc>, window_params = [{transform_indices = @transform_0, window_bounds = array<i64: 8, 128>}, {pipeline_mode = #tpu.pipeline_mode<synchronous>, transform_indices = @transform_1, window_bounds = array<i64: 128, 512>}, {pipeline_mode = #tpu.pipeline_mode<synchronous>, transform_indices = @transform_2, window_bounds = array<i64: 1, 512>}, {pipeline_mode = #tpu.pipeline_mode<synchronous>, transform_indices = @transform_3, window_bounds = array<i64: 512, 128>}, {pipeline_mode = #tpu.pipeline_mode<synchronous>, transform_indices = @transform_4, window_bounds = array<i64: 1, 128>}, {pipeline_mode = #tpu.pipeline_mode<synchronous>, transform_indices = @transform_5, window_bounds = array<i64: 1, 128>}, {pipeline_mode = #tpu.pipeline_mode<synchronous>, transform_indices = @transform_6, window_bounds = array<i64: 1, 128>}, {transform_indices = @transform_7, window_bounds = array<i64: 8, 128>}]} {
    %c0 = arith.constant 0 : index
    %c0_0 = arith.constant 0 : index
    %0 = vector.load %arg1[%c0, %c0_0] : memref<8x128xf32, #tpu.memory_space<vmem>>, vector<8x128xf32>
    %1 = arith.truncf %0 : vector<8x128xf32> to vector<8x128xbf16>
    %c0_1 = arith.constant 0 : index
    %c0_2 = arith.constant 0 : index
    %2 = vector.load %arg2[%c0_1, %c0_2] : memref<128x512xbf16, #tpu.memory_space<vmem>>, vector<128x512xbf16>
    %cst = arith.constant dense<0.000000e+00> : vector<8x512xf32>
    %3 = tpu.matmul %1, %2, %cst {dimension_numbers = #tpu.dot_dimension_numbers<[1], [0], [0], [1], [0, 0, 1, 1], [], []>} : vector<8x128xbf16>, vector<128x512xbf16>, vector<8x512xf32> -> vector<8x512xf32>
    %c0_3 = arith.constant 0 : index
    %c0_4 = arith.constant 0 : index
    %4 = vector.load %arg3[%c0_3, %c0_4] : memref<1x512xf32, #tpu.memory_space<vmem>>, vector<1x512xf32>
    %5 = vector.broadcast %4 : vector<1x512xf32> to vector<8x512xf32>
    %6 = arith.addf %3, %5 : vector<8x512xf32>
    %cst_5 = arith.constant 5.000000e-01 : f32
    %7 = vector.broadcast %cst_5 : f32 to vector<8x512xf32>
    %8 = arith.mulf %7, %6 : vector<8x512xf32>
    %cst_6 = arith.constant 4.471500e-02 : f32
    %9 = vector.broadcast %cst_6 : f32 to vector<8x512xf32>
    %10 = arith.mulf %9, %6 : vector<8x512xf32>
    %11 = arith.mulf %10, %6 : vector<8x512xf32>
    %12 = arith.mulf %11, %6 : vector<8x512xf32>
    %13 = arith.addf %6, %12 : vector<8x512xf32>
    %cst_7 = arith.constant 0.797884583 : f32
    %14 = vector.broadcast %cst_7 : f32 to vector<8x512xf32>
    %15 = arith.mulf %14, %13 : vector<8x512xf32>
    %16 = math.tanh %15 : vector<8x512xf32>
    %cst_8 = arith.constant 1.000000e+00 : f32
    %17 = vector.broadcast %cst_8 : f32 to vector<8x512xf32>
    %18 = arith.addf %17, %16 : vector<8x512xf32>
    %19 = arith.mulf %8, %18 : vector<8x512xf32>
    %20 = arith.truncf %19 : vector<8x512xf32> to vector<8x512xbf16>
    %c0_9 = arith.constant 0 : index
    %c0_10 = arith.constant 0 : index
    %21 = vector.load %arg4[%c0_9, %c0_10] : memref<512x128xbf16, #tpu.memory_space<vmem>>, vector<512x128xbf16>
    %cst_11 = arith.constant dense<0.000000e+00> : vector<8x128xf32>
    %22 = tpu.matmul %20, %21, %cst_11 {dimension_numbers = #tpu.dot_dimension_numbers<[1], [0], [0], [1], [0, 0, 1, 1], [], []>} : vector<8x512xbf16>, vector<512x128xbf16>, vector<8x128xf32> -> vector<8x128xf32>
    %c0_12 = arith.constant 0 : index
    %c0_13 = arith.constant 0 : index
    %23 = vector.load %arg5[%c0_12, %c0_13] : memref<1x128xf32, #tpu.memory_space<vmem>>, vector<1x128xf32>
    %24 = vector.broadcast %23 : vector<1x128xf32> to vector<8x128xf32>
    %25 = arith.addf %22, %24 : vector<8x128xf32>
    %26 = arith.addf %25, %0 : vector<8x128xf32>
    %c0_14 = arith.constant 0 : index
    %c0_15 = arith.constant 0 : index
    %27 = vector.load %arg6[%c0_14, %c0_15] : memref<1x128xf32, #tpu.memory_space<vmem>>, vector<1x128xf32>
    %c0_16 = arith.constant 0 : index
    %c0_17 = arith.constant 0 : index
    %28 = vector.load %arg7[%c0_16, %c0_17] : memref<1x128xf32, #tpu.memory_space<vmem>>, vector<1x128xf32>
    %cst_18 = arith.constant dense<0.000000e+00> : vector<8xf32>
    %29 = vector.multi_reduction <add>, %26, %cst_18 [1] : vector<8x128xf32> to vector<8xf32>
    %30 = vector.shape_cast %29 : vector<8xf32> to vector<8x1xf32>
    %cst_19 = arith.constant 1.280000e+02 : f32
    %31 = vector.broadcast %cst_19 : f32 to vector<8x1xf32>
    %32 = arith.divf %30, %31 : vector<8x1xf32>
    %33 = arith.mulf %26, %26 : vector<8x128xf32>
    %cst_20 = arith.constant dense<0.000000e+00> : vector<8xf32>
    %34 = vector.multi_reduction <add>, %33, %cst_20 [1] : vector<8x128xf32> to vector<8xf32>
    %35 = vector.shape_cast %34 : vector<8xf32> to vector<8x1xf32>
    %cst_21 = arith.constant 1.280000e+02 : f32
    %36 = vector.broadcast %cst_21 : f32 to vector<8x1xf32>
    %37 = arith.divf %35, %36 : vector<8x1xf32>
    %38 = arith.mulf %32, %32 : vector<8x1xf32>
    %39 = arith.subf %37, %38 : vector<8x1xf32>
    %cst_22 = arith.constant 0.000000e+00 : f32
    %40 = vector.broadcast %cst_22 : f32 to vector<8x1xf32>
    %41 = arith.maximumf %39, %40 : vector<8x1xf32>
    %42 = vector.broadcast %32 : vector<8x1xf32> to vector<8x128xf32>
    %43 = arith.subf %26, %42 : vector<8x128xf32>
    %cst_23 = arith.constant 9.99999996E-13 : f32
    %44 = vector.broadcast %cst_23 : f32 to vector<8x1xf32>
    %45 = arith.addf %41, %44 : vector<8x1xf32>
    %46 = math.rsqrt %45 : vector<8x1xf32>
    %47 = vector.broadcast %46 : vector<8x1xf32> to vector<8x128xf32>
    %48 = arith.mulf %43, %47 : vector<8x128xf32>
    %49 = vector.broadcast %27 : vector<1x128xf32> to vector<8x128xf32>
    %50 = arith.mulf %48, %49 : vector<8x128xf32>
    %51 = vector.broadcast %28 : vector<1x128xf32> to vector<8x128xf32>
    %52 = arith.addf %50, %51 : vector<8x128xf32>
    %c0_24 = arith.constant 0 : index
    %c0_25 = arith.constant 0 : index
    %53 = vector.load %arg8[%c0_24, %c0_25] : memref<8x128xf32, #tpu.memory_space<vmem>>, vector<8x128xf32>
    tpu.vector_store %arg8[%c0_24, %c0_25], %52 {strides = array<i32>} : memref<8x128xf32, #tpu.memory_space<vmem>>, vector<8x128xf32>,
    return
  }
  func.func @transform_0(%arg0: i32) -> (i32, i32) {
    %c0_i32 = arith.constant 0 : i32
    %c0_i32_0 = arith.constant 0 : i32
    return %arg0, %c0_i32 : i32, i32
  }
  func.func @transform_1(%arg0: i32) -> (i32, i32) {
    %c0_i32 = arith.constant 0 : i32
    %c0_i32_0 = arith.constant 0 : i32
    %c0_i32_1 = arith.constant 0 : i32
    return %c0_i32, %c0_i32_0 : i32, i32
  }
  func.func @transform_2(%arg0: i32) -> (i32, i32) {
    %c0_i32 = arith.constant 0 : i32
    %c0_i32_0 = arith.constant 0 : i32
    %c0_i32_1 = arith.constant 0 : i32
    return %c0_i32, %c0_i32_0 : i32, i32
  }
  func.func @transform_3(%arg0: i32) -> (i32, i32) {
    %c0_i32 = arith.constant 0 : i32
    %c0_i32_0 = arith.constant 0 : i32
    %c0_i32_1 = arith.constant 0 : i32
    return %c0_i32, %c0_i32_0 : i32, i32
  }
  func.func @transform_4(%arg0: i32) -> (i32, i32) {
    %c0_i32 = arith.constant 0 : i32
    %c0_i32_0 = arith.constant 0 : i32
    %c0_i32_1 = arith.constant 0 : i32
    return %c0_i32, %c0_i32_0 : i32, i32
  }
  func.func @transform_5(%arg0: i32) -> (i32, i32) {
    %c0_i32 = arith.constant 0 : i32
    %c0_i32_0 = arith.constant 0 : i32
    %c0_i32_1 = arith.constant 0 : i32
    return %c0_i32, %c0_i32_0 : i32, i32
  }
  func.func @transform_6(%arg0: i32) -> (i32, i32) {
    %c0_i32 = arith.constant 0 : i32
    %c0_i32_0 = arith.constant 0 : i32
    %c0_i32_1 = arith.constant 0 : i32
    return %c0_i32, %c0_i32_0 : i32, i32
  }
  func.func @transform_7(%arg0: i32) -> (i32, i32) {
    %c0_i32 = arith.constant 0 : i32
    %c0_i32_0 = arith.constant 0 : i32
    return %arg0, %c0_i32 : i32, i32
  }
}

module attributes {stable_mosaic.version = 11 : i64} {
  func.func @head_kernel(%arg0: i32, %arg1: memref<2x128xf32, #tpu.memory_space<vmem>>, %arg2: memref<128x128xbf16, #tpu.memory_space<vmem>>, %arg3: memref<1x128xf32, #tpu.memory_space<vmem>>, %arg4: memref<128x128xbf16, #tpu.memory_space<vmem>>, %arg5: memref<1x128xf32, #tpu.memory_space<vmem>>, %arg6: memref<2x128xf32, #tpu.memory_space<vmem>>) attributes {dimension_semantics = [#tpu.dimension_semantics<arbitrary>], iteration_bounds = array<i64: 1>, scalar_prefetch = 0 : i64, scratch_operands = 0 : i64, tpu.core_type = #tpu.core_type<tc>, window_params = [{pipeline_mode = #tpu.pipeline_mode<synchronous>, transform_indices = @transform_0, window_bounds = array<i64: 2, 128>}, {pipeline_mode = #tpu.pipeline_mode<synchronous>, transform_indices = @transform_1, window_bounds = array<i64: 128, 128>}, {pipeline_mode = #tpu.pipeline_mode<synchronous>, transform_indices = @transform_2, window_bounds = array<i64: 1, 128>}, {pipeline_mode = #tpu.pipeline_mode<synchronous>, transform_indices = @transform_3, window_bounds = array<i64: 128, 128>}, {pipeline_mode = #tpu.pipeline_mode<synchronous>, transform_indices = @transform_4, window_bounds = array<i64: 1, 128>}, {pipeline_mode = #tpu.pipeline_mode<synchronous>, transform_indices = @transform_5, window_bounds = array<i64: 2, 128>}]} {
    %c0 = arith.constant 0 : index
    %c0_0 = arith.constant 0 : index
    %0 = vector.load %arg1[%c0, %c0_0] : memref<2x128xf32, #tpu.memory_space<vmem>>, vector<2x128xf32>
    %1 = arith.truncf %0 : vector<2x128xf32> to vector<2x128xbf16>
    %c0_1 = arith.constant 0 : index
    %c0_2 = arith.constant 0 : index
    %2 = vector.load %arg2[%c0_1, %c0_2] : memref<128x128xbf16, #tpu.memory_space<vmem>>, vector<128x128xbf16>
    %cst = arith.constant dense<0.000000e+00> : vector<2x128xf32>
    %3 = tpu.matmul %1, %2, %cst {dimension_numbers = #tpu.dot_dimension_numbers<[1], [0], [0], [1], [0, 0, 1, 1], [], []>} : vector<2x128xbf16>, vector<128x128xbf16>, vector<2x128xf32> -> vector<2x128xf32>
    %c0_3 = arith.constant 0 : index
    %c0_4 = arith.constant 0 : index
    %4 = vector.load %arg3[%c0_3, %c0_4] : memref<1x128xf32, #tpu.memory_space<vmem>>, vector<1x128xf32>
    %5 = vector.broadcast %4 : vector<1x128xf32> to vector<2x128xf32>
    %6 = arith.addf %3, %5 : vector<2x128xf32>
    %7 = math.tanh %6 : vector<2x128xf32>
    %8 = arith.truncf %7 : vector<2x128xf32> to vector<2x128xbf16>
    %c0_5 = arith.constant 0 : index
    %c0_6 = arith.constant 0 : index
    %9 = vector.load %arg4[%c0_5, %c0_6] : memref<128x128xbf16, #tpu.memory_space<vmem>>, vector<128x128xbf16>
    %cst_7 = arith.constant dense<0.000000e+00> : vector<2x128xf32>
    %10 = tpu.matmul %8, %9, %cst_7 {dimension_numbers = #tpu.dot_dimension_numbers<[1], [0], [0], [1], [0, 0, 1, 1], [], []>} : vector<2x128xbf16>, vector<128x128xbf16>, vector<2x128xf32> -> vector<2x128xf32>
    %c0_8 = arith.constant 0 : index
    %c0_9 = arith.constant 0 : index
    %11 = vector.load %arg5[%c0_8, %c0_9] : memref<1x128xf32, #tpu.memory_space<vmem>>, vector<1x128xf32>
    %12 = vector.broadcast %11 : vector<1x128xf32> to vector<2x128xf32>
    %13 = arith.addf %10, %12 : vector<2x128xf32>
    %14 = arith.negf %13 : vector<2x128xf32>
    %15 = math.exp %14 : vector<2x128xf32>
    %cst_10 = arith.constant 1.000000e+00 : f32
    %16 = vector.broadcast %cst_10 : f32 to vector<2x128xf32>
    %17 = arith.addf %16, %15 : vector<2x128xf32>
    %18 = arith.divf %16, %17 : vector<2x128xf32>
    %c0_11 = arith.constant 0 : index
    %c0_12 = arith.constant 0 : index
    %19 = vector.load %arg6[%c0_11, %c0_12] : memref<2x128xf32, #tpu.memory_space<vmem>>, vector<2x128xf32>
    tpu.vector_store %arg6[%c0_11, %c0_12], %18 {strides = array<i32>} : memref<2x128xf32, #tpu.memory_space<vmem>>, vector<2x128xf32>,
    return
  }
  func.func @transform_0(%arg0: i32) -> (i32, i32) {
    %c0_i32 = arith.constant 0 : i32
    %c0_i32_0 = arith.constant 0 : i32
    %c0_i32_1 = arith.constant 0 : i32
    return %c0_i32, %c0_i32_0 : i32, i32
  }
  func.func @transform_1(%arg0: i32) -> (i32, i32) {
    %c0_i32 = arith.constant 0 : i32
    %c0_i32_0 = arith.constant 0 : i32
    %c0_i32_1 = arith.constant 0 : i32
    return %c0_i32, %c0_i32_0 : i32, i32
  }
  func.func @transform_2(%arg0: i32) -> (i32, i32) {
    %c0_i32 = arith.constant 0 : i32
    %c0_i32_0 = arith.constant 0 : i32
    %c0_i32_1 = arith.constant 0 : i32
    return %c0_i32, %c0_i32_0 : i32, i32
  }
  func.func @transform_3(%arg0: i32) -> (i32, i32) {
    %c0_i32 = arith.constant 0 : i32
    %c0_i32_0 = arith.constant 0 : i32
    %c0_i32_1 = arith.constant 0 : i32
    return %c0_i32, %c0_i32_0 : i32, i32
  }
  func.func @transform_4(%arg0: i32) -> (i32, i32) {
    %c0_i32 = arith.constant 0 : i32
    %c0_i32_0 = arith.constant 0 : i32
    %c0_i32_1 = arith.constant 0 : i32
    return %c0_i32, %c0_i32_0 : i32, i32
  }
  func.func @transform_5(%arg0: i32) -> (i32, i32) {
    %c0_i32 = arith.constant 0 : i32
    %c0_i32_0 = arith.constant 0 : i32
    %c0_i32_1 = arith.constant 0 : i32
    return %c0_i32, %c0_i32_0 : i32, i32
  }
}

module attributes {stable_mosaic.version = 11 : i64} {
  func.func @attn_block_kernel(%arg0: i32, %arg1: memref<8x128xf32, #tpu.memory_space<vmem>>, %arg2: memref<128x384xbf16, #tpu.memory_space<vmem>>, %arg3: memref<1x384xf32, #tpu.memory_space<vmem>>, %arg4: memref<128x128xbf16, #tpu.memory_space<vmem>>, %arg5: memref<1x128xf32, #tpu.memory_space<vmem>>, %arg6: memref<1x1x8xf32, #tpu.memory_space<vmem>>, %arg7: memref<1x128xf32, #tpu.memory_space<vmem>>, %arg8: memref<1x128xf32, #tpu.memory_space<vmem>>, %arg9: memref<8x128xf32, #tpu.memory_space<vmem>>) attributes {dimension_semantics = [#tpu.dimension_semantics<parallel>], iteration_bounds = array<i64: 2>, scalar_prefetch = 0 : i64, scratch_operands = 0 : i64, tpu.core_type = #tpu.core_type<tc>, window_params = [{transform_indices = @transform_0, window_bounds = array<i64: 8, 128>}, {pipeline_mode = #tpu.pipeline_mode<synchronous>, transform_indices = @transform_1, window_bounds = array<i64: 128, 384>}, {pipeline_mode = #tpu.pipeline_mode<synchronous>, transform_indices = @transform_2, window_bounds = array<i64: 1, 384>}, {pipeline_mode = #tpu.pipeline_mode<synchronous>, transform_indices = @transform_3, window_bounds = array<i64: 128, 128>}, {pipeline_mode = #tpu.pipeline_mode<synchronous>, transform_indices = @transform_4, window_bounds = array<i64: 1, 128>}, {transform_indices = @transform_5, window_bounds = array<i64: 1, 1, 8>}, {pipeline_mode = #tpu.pipeline_mode<synchronous>, transform_indices = @transform_6, window_bounds = array<i64: 1, 128>}, {pipeline_mode = #tpu.pipeline_mode<synchronous>, transform_indices = @transform_7, window_bounds = array<i64: 1, 128>}, {transform_indices = @transform_8, window_bounds = array<i64: 8, 128>}]} {
    %c0 = arith.constant 0 : index
    %c0_0 = arith.constant 0 : index
    %0 = vector.load %arg1[%c0, %c0_0] : memref<8x128xf32, #tpu.memory_space<vmem>>, vector<8x128xf32>
    %1 = arith.truncf %0 : vector<8x128xf32> to vector<8x128xbf16>
    %c0_1 = arith.constant 0 : index
    %c0_2 = arith.constant 0 : index
    %2 = vector.load %arg2[%c0_1, %c0_2] : memref<128x384xbf16, #tpu.memory_space<vmem>>, vector<128x384xbf16>
    %cst = arith.constant dense<0.000000e+00> : vector<8x384xf32>
    %3 = tpu.matmul %1, %2, %cst {dimension_numbers = #tpu.dot_dimension_numbers<[1], [0], [0], [1], [0, 0, 1, 1], [], []>} : vector<8x128xbf16>, vector<128x384xbf16>, vector<8x384xf32> -> vector<8x384xf32>
    %c0_3 = arith.constant 0 : index
    %c0_4 = arith.constant 0 : index
    %4 = vector.load %arg3[%c0_3, %c0_4] : memref<1x384xf32, #tpu.memory_space<vmem>>, vector<1x384xf32>
    %5 = vector.broadcast %4 : vector<1x384xf32> to vector<8x384xf32>
    %6 = arith.addf %3, %5 : vector<8x384xf32>
    %7 = vector.extract_strided_slice %6 {offsets = [0, 0], sizes = [8, 128], strides = [1, 1]} : vector<8x384xf32> to vector<8x128xf32>
    %8 = vector.extract_strided_slice %6 {offsets = [0, 128], sizes = [8, 128], strides = [1, 1]} : vector<8x384xf32> to vector<8x128xf32>
    %9 = vector.extract_strided_slice %6 {offsets = [0, 256], sizes = [8, 128], strides = [1, 1]} : vector<8x384xf32> to vector<8x128xf32>
    %c0_5 = arith.constant 0 : index
    %c0_6 = arith.constant 0 : index
    %c0_7 = arith.constant 0 : index
    %10 = vector.load %arg6[%c0_5, %c0_6, %c0_7] : memref<1x1x8xf32, #tpu.memory_space<vmem>>, vector<1x1x8xf32>
    %11 = vector.shape_cast %10 : vector<1x1x8xf32> to vector<1x8xf32>
    %12 = vector.extract_strided_slice %7 {offsets = [0, 0], sizes = [8, 32], strides = [1, 1]} : vector<8x128xf32> to vector<8x32xf32>
    %13 = vector.extract_strided_slice %8 {offsets = [0, 0], sizes = [8, 32], strides = [1, 1]} : vector<8x128xf32> to vector<8x32xf32>
    %14 = vector.extract_strided_slice %9 {offsets = [0, 0], sizes = [8, 32], strides = [1, 1]} : vector<8x128xf32> to vector<8x32xf32>
    %15 = arith.truncf %12 : vector<8x32xf32> to vector<8x32xbf16>
    %16 = arith.truncf %13 : vector<8x32xf32> to vector<8x32xbf16>
    %cst_8 = arith.constant dense<0.000000e+00> : vector<8x8xf32>
    %17 = tpu.matmul %15, %16, %cst_8 {dimension_numbers = #tpu.dot_dimension_numbers<[1], [1], [0], [0], [0, 0, 1, 0], [], []>} : vector<8x32xbf16>, vector<8x32xbf16>, vector<8x8xf32> -> vector<8x8xf32>
    %cst_9 = arith.constant 0.176776692 : f32
    %18 = vector.broadcast %cst_9 : f32 to vector<8x8xf32>
    %19 = arith.mulf %17, %18 : vector<8x8xf32>
    %20 = vector.broadcast %11 : vector<1x8xf32> to vector<8x8xf32>
    %21 = arith.addf %19, %20 : vector<8x8xf32>
    %cst_10 = arith.constant dense<0xFF800000> : vector<8xf32>
    %22 = vector.multi_reduction <maximumf>, %21, %cst_10 [1] : vector<8x8xf32> to vector<8xf32>
    %23 = vector.shape_cast %22 : vector<8xf32> to vector<8x1xf32>
    %24 = vector.broadcast %23 : vector<8x1xf32> to vector<8x8xf32>
    %25 = arith.subf %21, %24 : vector<8x8xf32>
    %26 = math.exp %25 : vector<8x8xf32>
    %cst_11 = arith.constant dense<0.000000e+00> : vector<8xf32>
    %27 = vector.multi_reduction <add>, %26, %cst_11 [1] : vector<8x8xf32> to vector<8xf32>
    %28 = vector.shape_cast %27 : vector<8xf32> to vector<8x1xf32>
    %29 = tpu.reciprocal %28 {approx = true} : vector<8x1xf32> -> vector<8x1xf32>
    %30 = vector.broadcast %29 : vector<8x1xf32> to vector<8x8xf32>
    %31 = arith.mulf %26, %30 : vector<8x8xf32>
    %32 = arith.truncf %31 : vector<8x8xf32> to vector<8x8xbf16>
    %33 = arith.truncf %14 : vector<8x32xf32> to vector<8x32xbf16>
    %cst_12 = arith.constant dense<0.000000e+00> : vector<8x32xf32>
    %34 = tpu.matmul %32, %33, %cst_12 {dimension_numbers = #tpu.dot_dimension_numbers<[1], [0], [0], [1], [0, 0, 1, 1], [], []>} : vector<8x8xbf16>, vector<8x32xbf16>, vector<8x32xf32> -> vector<8x32xf32>
    %35 = vector.extract_strided_slice %7 {offsets = [0, 32], sizes = [8, 32], strides = [1, 1]} : vector<8x128xf32> to vector<8x32xf32>
    %36 = vector.extract_strided_slice %8 {offsets = [0, 32], sizes = [8, 32], strides = [1, 1]} : vector<8x128xf32> to vector<8x32xf32>
    %37 = vector.extract_strided_slice %9 {offsets = [0, 32], sizes = [8, 32], strides = [1, 1]} : vector<8x128xf32> to vector<8x32xf32>
    %38 = arith.truncf %35 : vector<8x32xf32> to vector<8x32xbf16>
    %39 = arith.truncf %36 : vector<8x32xf32> to vector<8x32xbf16>
    %cst_13 = arith.constant dense<0.000000e+00> : vector<8x8xf32>
    %40 = tpu.matmul %38, %39, %cst_13 {dimension_numbers = #tpu.dot_dimension_numbers<[1], [1], [0], [0], [0, 0, 1, 0], [], []>} : vector<8x32xbf16>, vector<8x32xbf16>, vector<8x8xf32> -> vector<8x8xf32>
    %cst_14 = arith.constant 0.176776692 : f32
    %41 = vector.broadcast %cst_14 : f32 to vector<8x8xf32>
    %42 = arith.mulf %40, %41 : vector<8x8xf32>
    %43 = vector.broadcast %11 : vector<1x8xf32> to vector<8x8xf32>
    %44 = arith.addf %42, %43 : vector<8x8xf32>
    %cst_15 = arith.constant dense<0xFF800000> : vector<8xf32>
    %45 = vector.multi_reduction <maximumf>, %44, %cst_15 [1] : vector<8x8xf32> to vector<8xf32>
    %46 = vector.shape_cast %45 : vector<8xf32> to vector<8x1xf32>
    %47 = vector.broadcast %46 : vector<8x1xf32> to vector<8x8xf32>
    %48 = arith.subf %44, %47 : vector<8x8xf32>
    %49 = math.exp %48 : vector<8x8xf32>
    %cst_16 = arith.constant dense<0.000000e+00> : vector<8xf32>
    %50 = vector.multi_reduction <add>, %49, %cst_16 [1] : vector<8x8xf32> to vector<8xf32>
    %51 = vector.shape_cast %50 : vector<8xf32> to vector<8x1xf32>
    %52 = tpu.reciprocal %51 {approx = true} : vector<8x1xf32> -> vector<8x1xf32>
    %53 = vector.broadcast %52 : vector<8x1xf32> to vector<8x8xf32>
    %54 = arith.mulf %49, %53 : vector<8x8xf32>
    %55 = arith.truncf %54 : vector<8x8xf32> to vector<8x8xbf16>
    %56 = arith.truncf %37 : vector<8x32xf32> to vector<8x32xbf16>
    %cst_17 = arith.constant dense<0.000000e+00> : vector<8x32xf32>
    %57 = tpu.matmul %55, %56, %cst_17 {dimension_numbers = #tpu.dot_dimension_numbers<[1], [0], [0], [1], [0, 0, 1, 1], [], []>} : vector<8x8xbf16>, vector<8x32xbf16>, vector<8x32xf32> -> vector<8x32xf32>
    %58 = vector.extract_strided_slice %7 {offsets = [0, 64], sizes = [8, 32], strides = [1, 1]} : vector<8x128xf32> to vector<8x32xf32>
    %59 = vector.extract_strided_slice %8 {offsets = [0, 64], sizes = [8, 32], strides = [1, 1]} : vector<8x128xf32> to vector<8x32xf32>
    %60 = vector.extract_strided_slice %9 {offsets = [0, 64], sizes = [8, 32], strides = [1, 1]} : vector<8x128xf32> to vector<8x32xf32>
    %61 = arith.truncf %58 : vector<8x32xf32> to vector<8x32xbf16>
    %62 = arith.truncf %59 : vector<8x32xf32> to vector<8x32xbf16>
    %cst_18 = arith.constant dense<0.000000e+00> : vector<8x8xf32>
    %63 = tpu.matmul %61, %62, %cst_18 {dimension_numbers = #tpu.dot_dimension_numbers<[1], [1], [0], [0], [0, 0, 1, 0], [], []>} : vector<8x32xbf16>, vector<8x32xbf16>, vector<8x8xf32> -> vector<8x8xf32>
    %cst_19 = arith.constant 0.176776692 : f32
    %64 = vector.broadcast %cst_19 : f32 to vector<8x8xf32>
    %65 = arith.mulf %63, %64 : vector<8x8xf32>
    %66 = vector.broadcast %11 : vector<1x8xf32> to vector<8x8xf32>
    %67 = arith.addf %65, %66 : vector<8x8xf32>
    %cst_20 = arith.constant dense<0xFF800000> : vector<8xf32>
    %68 = vector.multi_reduction <maximumf>, %67, %cst_20 [1] : vector<8x8xf32> to vector<8xf32>
    %69 = vector.shape_cast %68 : vector<8xf32> to vector<8x1xf32>
    %70 = vector.broadcast %69 : vector<8x1xf32> to vector<8x8xf32>
    %71 = arith.subf %67, %70 : vector<8x8xf32>
    %72 = math.exp %71 : vector<8x8xf32>
    %cst_21 = arith.constant dense<0.000000e+00> : vector<8xf32>
    %73 = vector.multi_reduction <add>, %72, %cst_21 [1] : vector<8x8xf32> to vector<8xf32>
    %74 = vector.shape_cast %73 : vector<8xf32> to vector<8x1xf32>
    %75 = tpu.reciprocal %74 {approx = true} : vector<8x1xf32> -> vector<8x1xf32>
    %76 = vector.broadcast %75 : vector<8x1xf32> to vector<8x8xf32>
    %77 = arith.mulf %72, %76 : vector<8x8xf32>
    %78 = arith.truncf %77 : vector<8x8xf32> to vector<8x8xbf16>
    %79 = arith.truncf %60 : vector<8x32xf32> to vector<8x32xbf16>
    %cst_22 = arith.constant dense<0.000000e+00> : vector<8x32xf32>
    %80 = tpu.matmul %78, %79, %cst_22 {dimension_numbers = #tpu.dot_dimension_numbers<[1], [0], [0], [1], [0, 0, 1, 1], [], []>} : vector<8x8xbf16>, vector<8x32xbf16>, vector<8x32xf32> -> vector<8x32xf32>
    %81 = vector.extract_strided_slice %7 {offsets = [0, 96], sizes = [8, 32], strides = [1, 1]} : vector<8x128xf32> to vector<8x32xf32>
    %82 = vector.extract_strided_slice %8 {offsets = [0, 96], sizes = [8, 32], strides = [1, 1]} : vector<8x128xf32> to vector<8x32xf32>
    %83 = vector.extract_strided_slice %9 {offsets = [0, 96], sizes = [8, 32], strides = [1, 1]} : vector<8x128xf32> to vector<8x32xf32>
    %84 = arith.truncf %81 : vector<8x32xf32> to vector<8x32xbf16>
    %85 = arith.truncf %82 : vector<8x32xf32> to vector<8x32xbf16>
    %cst_23 = arith.constant dense<0.000000e+00> : vector<8x8xf32>
    %86 = tpu.matmul %84, %85, %cst_23 {dimension_numbers = #tpu.dot_dimension_numbers<[1], [1], [0], [0], [0, 0, 1, 0], [], []>} : vector<8x32xbf16>, vector<8x32xbf16>, vector<8x8xf32> -> vector<8x8xf32>
    %cst_24 = arith.constant 0.176776692 : f32
    %87 = vector.broadcast %cst_24 : f32 to vector<8x8xf32>
    %88 = arith.mulf %86, %87 : vector<8x8xf32>
    %89 = vector.broadcast %11 : vector<1x8xf32> to vector<8x8xf32>
    %90 = arith.addf %88, %89 : vector<8x8xf32>
    %cst_25 = arith.constant dense<0xFF800000> : vector<8xf32>
    %91 = vector.multi_reduction <maximumf>, %90, %cst_25 [1] : vector<8x8xf32> to vector<8xf32>
    %92 = vector.shape_cast %91 : vector<8xf32> to vector<8x1xf32>
    %93 = vector.broadcast %92 : vector<8x1xf32> to vector<8x8xf32>
    %94 = arith.subf %90, %93 : vector<8x8xf32>
    %95 = math.exp %94 : vector<8x8xf32>
    %cst_26 = arith.constant dense<0.000000e+00> : vector<8xf32>
    %96 = vector.multi_reduction <add>, %95, %cst_26 [1] : vector<8x8xf32> to vector<8xf32>
    %97 = vector.shape_cast %96 : vector<8xf32> to vector<8x1xf32>
    %98 = tpu.reciprocal %97 {approx = true} : vector<8x1xf32> -> vector<8x1xf32>
    %99 = vector.broadcast %98 : vector<8x1xf32> to vector<8x8xf32>
    %100 = arith.mulf %95, %99 : vector<8x8xf32>
    %101 = arith.truncf %100 : vector<8x8xf32> to vector<8x8xbf16>
    %102 = arith.truncf %83 : vector<8x32xf32> to vector<8x32xbf16>
    %cst_27 = arith.constant dense<0.000000e+00> : vector<8x32xf32>
    %103 = tpu.matmul %101, %102, %cst_27 {dimension_numbers = #tpu.dot_dimension_numbers<[1], [0], [0], [1], [0, 0, 1, 1], [], []>} : vector<8x8xbf16>, vector<8x32xbf16>, vector<8x32xf32> -> vector<8x32xf32>
    %104 = tpu.concatenate %34, %57, %80, %103 in 1 : vector<8x32xf32>, vector<8x32xf32>, vector<8x32xf32>, vector<8x32xf32> -> vector<8x128xf32>
    %105 = arith.truncf %104 : vector<8x128xf32> to vector<8x128xbf16>
    %c0_28 = arith.constant 0 : index
    %c0_29 = arith.constant 0 : index
    %106 = vector.load %arg4[%c0_28, %c0_29] : memref<128x128xbf16, #tpu.memory_space<vmem>>, vector<128x128xbf16>
    %cst_30 = arith.constant dense<0.000000e+00> : vector<8x128xf32>
    %107 = tpu.matmul %105, %106, %cst_30 {dimension_numbers = #tpu.dot_dimension_numbers<[1], [0], [0], [1], [0, 0, 1, 1], [], []>} : vector<8x128xbf16>, vector<128x128xbf16>, vector<8x128xf32> -> vector<8x128xf32>
    %c0_31 = arith.constant 0 : index
    %c0_32 = arith.constant 0 : index
    %108 = vector.load %arg5[%c0_31, %c0_32] : memref<1x128xf32, #tpu.memory_space<vmem>>, vector<1x128xf32>
    %109 = vector.broadcast %108 : vector<1x128xf32> to vector<8x128xf32>
    %110 = arith.addf %107, %109 : vector<8x128xf32>
    %111 = arith.addf %110, %0 : vector<8x128xf32>
    %c0_33 = arith.constant 0 : index
    %c0_34 = arith.constant 0 : index
    %112 = vector.load %arg7[%c0_33, %c0_34] : memref<1x128xf32, #tpu.memory_space<vmem>>, vector<1x128xf32>
    %c0_35 = arith.constant 0 : index
    %c0_36 = arith.constant 0 : index
    %113 = vector.load %arg8[%c0_35, %c0_36] : memref<1x128xf32, #tpu.memory_space<vmem>>, vector<1x128xf32>
    %cst_37 = arith.constant dense<0.000000e+00> : vector<8xf32>
    %114 = vector.multi_reduction <add>, %111, %cst_37 [1] : vector<8x128xf32> to vector<8xf32>
    %115 = vector.shape_cast %114 : vector<8xf32> to vector<8x1xf32>
    %cst_38 = arith.constant 1.280000e+02 : f32
    %116 = vector.broadcast %cst_38 : f32 to vector<8x1xf32>
    %117 = arith.divf %115, %116 : vector<8x1xf32>
    %118 = arith.mulf %111, %111 : vector<8x128xf32>
    %cst_39 = arith.constant dense<0.000000e+00> : vector<8xf32>
    %119 = vector.multi_reduction <add>, %118, %cst_39 [1] : vector<8x128xf32> to vector<8xf32>
    %120 = vector.shape_cast %119 : vector<8xf32> to vector<8x1xf32>
    %cst_40 = arith.constant 1.280000e+02 : f32
    %121 = vector.broadcast %cst_40 : f32 to vector<8x1xf32>
    %122 = arith.divf %120, %121 : vector<8x1xf32>
    %123 = arith.mulf %117, %117 : vector<8x1xf32>
    %124 = arith.subf %122, %123 : vector<8x1xf32>
    %cst_41 = arith.constant 0.000000e+00 : f32
    %125 = vector.broadcast %cst_41 : f32 to vector<8x1xf32>
    %126 = arith.maximumf %124, %125 : vector<8x1xf32>
    %127 = vector.broadcast %117 : vector<8x1xf32> to vector<8x128xf32>
    %128 = arith.subf %111, %127 : vector<8x128xf32>
    %cst_42 = arith.constant 9.99999996E-13 : f32
    %129 = vector.broadcast %cst_42 : f32 to vector<8x1xf32>
    %130 = arith.addf %126, %129 : vector<8x1xf32>
    %131 = math.rsqrt %130 : vector<8x1xf32>
    %132 = vector.broadcast %131 : vector<8x1xf32> to vector<8x128xf32>
    %133 = arith.mulf %128, %132 : vector<8x128xf32>
    %134 = vector.broadcast %112 : vector<1x128xf32> to vector<8x128xf32>
    %135 = arith.mulf %133, %134 : vector<8x128xf32>
    %136 = vector.broadcast %113 : vector<1x128xf32> to vector<8x128xf32>
    %137 = arith.addf %135, %136 : vector<8x128xf32>
    %c0_43 = arith.constant 0 : index
    %c0_44 = arith.constant 0 : index
    %138 = vector.load %arg9[%c0_43, %c0_44] : memref<8x128xf32, #tpu.memory_space<vmem>>, vector<8x128xf32>
    tpu.vector_store %arg9[%c0_43, %c0_44], %137 {strides = array<i32>} : memref<8x128xf32, #tpu.memory_space<vmem>>, vector<8x128xf32>,
    return
  }
  func.func @transform_0(%arg0: i32) -> (i32, i32) {
    %c0_i32 = arith.constant 0 : i32
    %c0_i32_0 = arith.constant 0 : i32
    return %arg0, %c0_i32 : i32, i32
  }
  func.func @transform_1(%arg0: i32) -> (i32, i32) {
    %c0_i32 = arith.constant 0 : i32
    %c0_i32_0 = arith.constant 0 : i32
    %c0_i32_1 = arith.constant 0 : i32
    return %c0_i32, %c0_i32_0 : i32, i32
  }
  func.func @transform_2(%arg0: i32) -> (i32, i32) {
    %c0_i32 = arith.constant 0 : i32
    %c0_i32_0 = arith.constant 0 : i32
    %c0_i32_1 = arith.constant 0 : i32
    return %c0_i32, %c0_i32_0 : i32, i32
  }
  func.func @transform_3(%arg0: i32) -> (i32, i32) {
    %c0_i32 = arith.constant 0 : i32
    %c0_i32_0 = arith.constant 0 : i32
    %c0_i32_1 = arith.constant 0 : i32
    return %c0_i32, %c0_i32_0 : i32, i32
  }
  func.func @transform_4(%arg0: i32) -> (i32, i32) {
    %c0_i32 = arith.constant 0 : i32
    %c0_i32_0 = arith.constant 0 : i32
    %c0_i32_1 = arith.constant 0 : i32
    return %c0_i32, %c0_i32_0 : i32, i32
  }
  func.func @transform_5(%arg0: i32) -> (i32, i32, i32) {
    %c0_i32 = arith.constant 0 : i32
    %c0_i32_0 = arith.constant 0 : i32
    %c0_i32_1 = arith.constant 0 : i32
    return %arg0, %c0_i32, %c0_i32_0 : i32, i32, i32
  }
  func.func @transform_6(%arg0: i32) -> (i32, i32) {
    %c0_i32 = arith.constant 0 : i32
    %c0_i32_0 = arith.constant 0 : i32
    %c0_i32_1 = arith.constant 0 : i32
    return %c0_i32, %c0_i32_0 : i32, i32
  }
  func.func @transform_7(%arg0: i32) -> (i32, i32) {
    %c0_i32 = arith.constant 0 : i32
    %c0_i32_0 = arith.constant 0 : i32
    %c0_i32_1 = arith.constant 0 : i32
    return %c0_i32, %c0_i32_0 : i32, i32
  }
  func.func @transform_8(%arg0: i32) -> (i32, i32) {
    %c0_i32 = arith.constant 0 : i32
    %c0_i32_0 = arith.constant 0 : i32
    return %arg0, %c0_i32 : i32, i32
  }
}

</mosaic_0001>

<llo_original>
// kernel: sentence_multiclass_forward.6
$region0: #{sentence_multiclass_forward.6}
  #allocation0 [shape = 'u32[]', space=smem, size = 0x4, offset = 0x4, fixed_abs, tag = 'smem constant byte address 0x4 - core index']
  #allocation1 [shape = 'u32[144,128]{1,0:T(1,128)}', space=vmem, size = 0x12000, scoped, tag = 'internal scratch']
  %s0 = inlined_call_operand.vmem [shape: f32[16,128], index: 0, kind: input, shape index: {}]
  %s1 = inlined_call_operand.vmem [shape: f32[1,128], index: 1, kind: input, shape index: {}]
  %s2 = inlined_call_operand.vmem [shape: f32[1,128], index: 2, kind: input, shape index: {}]
  %s3 = inlined_call_operand.vmem [shape: f32[16,128], index: 3, kind: output, shape index: {}]
  %s4 = sld [smem:[#allocation0]]
  $region45: #{sentence_multiclass_forward.6} parent=0
    _
  %s6 = ssub.s32 1, %s4
  %s7 = scalar_select 0, %s6, %s4
  loop: start=0, step=1, limit=4
  $region2: #{sentence_multiclass_forward.6} parent=0 // loop_pre_header
    _
  $region3: #{sentence_multiclass_forward.6} parent=0 // loop_header
    %s9 = sphi 0, %s13
    %p10 = scmp.ge.s32.totalorder %s9, 4
    %s19 = sphi 0, %s21
    %s22 = sphi 0, %s19
    %s23 = sphi 0, %s22
    %s39 = sphi 0, %s23
    %s43 = sphi 0, %s43
    %s45 = sphi 0, %s43
    %s46 = sphi 0, %s45
    %s60 = sphi 0, %s46
    %s64 = sphi 0, %s64
    %s66 = sphi 0, %s64
    %s67 = sphi 0, %s66
    %s81 = sphi 0, %s67
    %s87 = sphi 0, %s89
    %s90 = sphi 0, %s87
    %s91 = sphi 0, %s90
    %s107 = sphi 0, %s91
  $region4: #{sentence_multiclass_forward.6} parent=0 // loop_header_branch
    %12 = sbr.rel (%p10) target = $region8
  $region5: #{sentence_multiclass_forward.6} parent=0 // loop_body
    %s14 = ssub.s32 %s9, 1
    %s15 = ssub.s32 %s9, 2
    %s16 = sadd.s32 %s9, 1
    %s17 = ssub.s32 %s9, %s16
    %p18 = scmp.eq.s32.totalorder %s17, 0
    %s20 = sadd.s32 %s19, 1
    %s21 = scalar_select %p18, %s19, %s20
    %p24 = pneg %p18
    %p25 = scmp.eq.s32.totalorder %s9, 1
    %p26 = por %p24, %p25
    %p27 = scmp.ne.s32.totalorder %s19, %s22
    %p28 = scmp.eq.s32.totalorder %s9, 0
    %p29 = por %p27, %p28
    %p30 = scmp.ne.s32.totalorder %s19, %s22
    %p31 = scmp.eq.s32.totalorder %s14, 1
    %p32 = por %p30, %p31
    %p33 = scmp.ne.s32.totalorder %s22, %s23
    %p34 = scmp.eq.s32.totalorder %s14, 0
    %p35 = por %p33, %p34
    %p36 = scmp.ne.s32.totalorder %s22, %s23
    %p37 = scmp.eq.s32.totalorder %s15, 1
    %p38 = por %p36, %p37
    %p40 = scmp.ne.s32.totalorder %s23, %s39
    %p41 = scmp.eq.s32.totalorder %s15, 0
    %p42 = por %p40, %p41
    %s44 = sadd.s32 %s43, 1
    %p47 = scmp.eq.s32.totalorder %s9, 1
    %p48 = scmp.ne.s32.totalorder %s43, %s45
    %p49 = scmp.eq.s32.totalorder %s9, 0
    %p50 = por %p48, %p49
    %p51 = scmp.ne.s32.totalorder %s43, %s45
    %p52 = scmp.eq.s32.totalorder %s14, 1
    %p53 = por %p51, %p52
    %p54 = scmp.ne.s32.totalorder %s45, %s46
    %p55 = scmp.eq.s32.totalorder %s14, 0
    %p56 = por %p54, %p55
    %p57 = scmp.ne.s32.totalorder %s45, %s46
    %p58 = scmp.eq.s32.totalorder %s15, 1
    %p59 = por %p57, %p58
    %p61 = scmp.ne.s32.totalorder %s46, %s60
    %p62 = scmp.eq.s32.totalorder %s15, 0
    %p63 = por %p61, %p62
    %s65 = sadd.s32 %s64, 1
    %p68 = scmp.eq.s32.totalorder %s9, 1
    %p69 = scmp.ne.s32.totalorder %s64, %s66
    %p70 = scmp.eq.s32.totalorder %s9, 0
    %p71 = por %p69, %p70
    %p72 = scmp.ne.s32.totalorder %s64, %s66
    %p73 = scmp.eq.s32.totalorder %s14, 1
    %p74 = por %p72, %p73
    %p75 = scmp.ne.s32.totalorder %s66, %s67
    %p76 = scmp.eq.s32.totalorder %s14, 0
    %p77 = por %p75, %p76
    %p78 = scmp.ne.s32.totalorder %s66, %s67
    %p79 = scmp.eq.s32.totalorder %s15, 1
    %p80 = por %p78, %p79
    %p82 = scmp.ne.s32.totalorder %s67, %s81
    %p83 = scmp.eq.s32.totalorder %s15, 0
    %p84 = por %p82, %p83
    %s85 = ssub.s32 %s9, %s16
    %p86 = scmp.eq.s32.totalorder %s85, 0
    %s88 = sadd.s32 %s87, 1
    %s89 = scalar_select %p86, %s87, %s88
    %p92 = pneg %p86
    %p93 = scmp.eq.s32.totalorder %s9, 1
    %p94 = por %p92, %p93
    %p95 = scmp.ne.s32.totalorder %s87, %s90
    %p96 = scmp.eq.s32.totalorder %s9, 0
    %p97 = por %p95, %p96
    %p98 = scmp.ne.s32.totalorder %s87, %s90
    %p99 = scmp.eq.s32.totalorder %s14, 1
    %p100 = por %p98, %p99
    %p101 = scmp.ne.s32.totalorder %s90, %s91
    %p102 = scmp.eq.s32.totalorder %s14, 0
    %p103 = por %p101, %p102
    %p104 = scmp.ne.s32.totalorder %s90, %s91
    %p105 = scmp.eq.s32.totalorder %s15, 1
    %p106 = por %p104, %p105
    %p108 = scmp.ne.s32.totalorder %s91, %s107
    %p109 = scmp.eq.s32.totalorder %s15, 0
    %p110 = por %p108, %p109
    %p111 = scmp.le.s32.totalorder 1, %s9
    %p112 = scmp.lt.s32.totalorder %s9, 3
    %p113 = pnand %p111, %p112
    %p114 = pneg %p113
    // Predicated region
    $region9: #{sentence_multiclass_forward.6} parent=5 // pred_check
      _
    $region10: #{sentence_multiclass_forward.6} parent=5 // pred_check_branch
      %116 = sbr.rel (%p113) target = $region12
    $region11: #{sentence_multiclass_forward.6} parent=5 // pred_region
      %s117 = ssub.s32 %s9, 1
      // Predicated region
      $region13: #{sentence_multiclass_forward.6} parent=11 // pred_check
        %p118 = pneg %p56
      $region14: #{sentence_multiclass_forward.6} parent=11 // pred_check_branch
        %120 = sbr.rel (%p118) target = $region16
      $region15: #{sentence_multiclass_forward.6} parent=11 // pred_region
        _
      $region16: #{sentence_multiclass_forward.6} parent=11 // pred_fallthru
        _
      // Predicated region
      $region17: #{sentence_multiclass_forward.6} parent=11 // pred_check
        %p121 = pneg %p77
      $region18: #{sentence_multiclass_forward.6} parent=11 // pred_check_branch
        %123 = sbr.rel (%p121) target = $region20
      $region19: #{sentence_multiclass_forward.6} parent=11 // pred_region
        _
      $region20: #{sentence_multiclass_forward.6} parent=11 // pred_fallthru
        _
    $region12: #{sentence_multiclass_forward.6} parent=5 // pred_fallthru
      _
    %p124 = scmp.lt.s32.totalorder %s9, 2
    // Predicated region
    $region21: #{sentence_multiclass_forward.6} parent=5 // pred_check
      %p125 = pneg %p124
    $region22: #{sentence_multiclass_forward.6} parent=5 // pred_check_branch
      %127 = sbr.rel (%p125) target = $region24
    $region23: #{sentence_multiclass_forward.6} parent=5 // pred_region
      // Predicated region
      $region25: #{sentence_multiclass_forward.6} parent=23 // pred_check
        %p128 = pneg %p29
      $region26: #{sentence_multiclass_forward.6} parent=23 // pred_check_branch
        %130 = sbr.rel (%p128) target = $region28
      $region27: #{sentence_multiclass_forward.6} parent=23 // pred_region
        %p131 = scmp.lt.s32.totalorder %s9, 1
        %s132 = scalar_select %p131, %s9, 1
        %s133 = smul.addr %s132, 8
        %s134 = scalar_lea.vmem %s0, %s133
      $region28: #{sentence_multiclass_forward.6} parent=23 // pred_fallthru
        _
    $region24: #{sentence_multiclass_forward.6} parent=5 // pred_fallthru
      _
    %p135 = scmp.le.s32.totalorder 1, %s9
    %p136 = scmp.lt.s32.totalorder %s9, 3
    %p137 = pnand %p135, %p136
    %p138 = pneg %p137
    // Predicated region
    $region29: #{sentence_multiclass_forward.6} parent=5 // pred_check
      _
    $region30: #{sentence_multiclass_forward.6} parent=5 // pred_check_branch
      %140 = sbr.rel (%p137) target = $region32
    $region31: #{sentence_multiclass_forward.6} parent=5 // pred_region
      %s141 = ssub.s32 %s9, 1
      %p142 = scmp.lt.s32.totalorder %s14, 1
      %s143 = scalar_select %p142, %s14, 1
      %s144 = smul.addr %s143, 8
      %s145 = scalar_lea.vmem %s0, %s144
      %p146 = pneg %p35
      %p147 = pneg %p32
      %p148 = pneg %p56
      %p149 = pneg %p53
      %p150 = pneg %p77
      %p151 = pneg %p74
      %p152 = pneg %p103
      %p153 = pneg %p100
      %p154 = scmp.lt.s32.totalorder %s14, 1
      %s155 = scalar_select %p154, %s14, 1
      %s156 = smul.addr %s155, 8
      %s157 = scalar_lea.vmem %s3, %s156
      %p158 = scmp.lt.s32.totalorder %s14, 1
      %s159 = scalar_select %p158, %s14, 1
      %s160 = smul.addr %s159, 8
      %s161 = scalar_lea.vmem %s0, %s160
      %p162 = scmp.lt.s32.totalorder %s14, 1
      %s163 = scalar_select %p162, %s14, 1
      %s164 = smul.addr %s163, 8
      %s165 = scalar_lea.vmem %s3, %s164
      %v166 = vld [vmem:[%s161] sm:$0xff]
      %v167 = vld [vmem:[%s1] sm:$0x1]
      %v168 = vld [vmem:[%s2] sm:$0x1]
      %169 = vadd.xlane.f32.xlu0 %v166
      %v170 = vpop.xlane.xlu0 %169
      %v171 = vrcp.pop 128.0
      %v172 = vmul.f32 %v170, %v171
      %v173 = vmul.f32 %v166, %v166
      %174 = vadd.xlane.f32.xlu0 %v173
      %v175 = vpop.xlane.xlu0 %174
      %v176 = vmul.f32 %v175, %v171
      %v177 = vmul.f32 %v172, %v172
      %v178 = vsub.f32 %v176, %v177
      %v179 = vmax.f32 %v178, 0.0
      %v180 = vsub.f32 %v166, %v172
      %v181 = vadd.f32 %v179, 1e-12
      %v182 = vrsqrt.pop %v181
      %v183 = vmul.f32 %v180, %v182
      %v185 = vlaneseq
      %v186 = vshrl.u32 %v185, 7
      %v187 = vsub.s32 0, %v186
      %v188 = vrot.slane %v167, %v187
      %v190 = vmul.f32 %v183, %v188
      %v192 = vlaneseq
      %v193 = vshrl.u32 %v192, 7
      %v194 = vsub.s32 0, %v193
      %v195 = vrot.slane %v168, %v194
      %v197 = vadd.f32 %v190, %v195
      %198 = vst [vmem:[%s165] sm:$0xff] %v197
      %p199 = scmp.lt.s32.totalorder %s14, 1
      %s200 = scalar_select %p199, %s14, 1
      %s201 = smul.addr %s200, 8
      %s202 = scalar_lea.vmem %s3, %s201
      // Predicated region
      $region33: #{sentence_multiclass_forward.6} parent=31 // pred_check
        %p203 = pneg %p100
      $region34: #{sentence_multiclass_forward.6} parent=31 // pred_check_branch
        %205 = sbr.rel (%p203) target = $region36
      $region35: #{sentence_multiclass_forward.6} parent=31 // pred_region
        _
      $region36: #{sentence_multiclass_forward.6} parent=31 // pred_fallthru
        _
    $region32: #{sentence_multiclass_forward.6} parent=5 // pred_fallthru
      _
    %p206 = scmp.le.s32.totalorder 2, %s9
    // Predicated region
    $region37: #{sentence_multiclass_forward.6} parent=5 // pred_check
      %p207 = pneg %p206
    $region38: #{sentence_multiclass_forward.6} parent=5 // pred_check_branch
      %209 = sbr.rel (%p207) target = $region40
    $region39: #{sentence_multiclass_forward.6} parent=5 // pred_region
      %s210 = ssub.s32 %s9, 2
      // Predicated region
      $region41: #{sentence_multiclass_forward.6} parent=39 // pred_check
        %p211 = pneg %p106
      $region42: #{sentence_multiclass_forward.6} parent=39 // pred_check_branch
        %213 = sbr.rel (%p211) target = $region44
      $region43: #{sentence_multiclass_forward.6} parent=39 // pred_region
        %p214 = scmp.lt.s32.totalorder %s15, 1
        %s215 = scalar_select %p214, %s15, 1
        %s216 = smul.addr %s215, 8
        %s217 = scalar_lea.vmem %s3, %s216
      $region44: #{sentence_multiclass_forward.6} parent=39 // pred_fallthru
        _
    $region40: #{sentence_multiclass_forward.6} parent=5 // pred_fallthru
      _
  $region6: #{sentence_multiclass_forward.6} parent=0 // loop_footer
    %s13 = sadd.s32 1, %s9
  $region7: #{sentence_multiclass_forward.6} parent=0 // loop_footer_branch
    %8 = sbr.rel target = $region3
  $region8: #{sentence_multiclass_forward.6} parent=0 // loop_exit
    _

// kernel: sentence_multiclass_forward.11
$region0: #{sentence_multiclass_forward.11}
  #allocation0 [shape = 'u32[]', space=smem, size = 0x4, offset = 0x4, fixed_abs, tag = 'smem constant byte address 0x4 - core index']
  #allocation1 [shape = 'u32[144,128]{1,0:T(1,128)}', space=vmem, size = 0x12000, scoped, tag = 'internal scratch']
  %s0 = inlined_call_operand.vmem [shape: f32[2,128], index: 0, kind: input, shape index: {}]
  %s1 = inlined_call_operand.vmem [shape: bf16[128,128], index: 1, kind: input, shape index: {}]
  %s2 = inlined_call_operand.vmem [shape: f32[1,128], index: 2, kind: input, shape index: {}]
  %s3 = inlined_call_operand.vmem [shape: bf16[128,128], index: 3, kind: input, shape index: {}]
  %s4 = inlined_call_operand.vmem [shape: f32[1,128], index: 4, kind: input, shape index: {}]
  %s5 = inlined_call_operand.hbm [shape: f32[2,128], index: 5, kind: output, shape index: {}]
  %s6 = sld [smem:[#allocation0]]
  $region30: #{sentence_multiclass_forward.11} parent=0
    _
  %s8 = ssub.s32 1, %s6
  %s9 = scalar_select 0, %s8, %s6
  $region1: #{sentence_multiclass_forward.11} parent=0
    #allocation2 [shape = 'u8[1024]{0}', space=vmem, size = 0x400, scoped, tag = 'output window, operand 0, single buffered']
    #allocation3 [shape = 's32[1]{0}', space=sflag, size = 0x4, scoped, tag = 'scoped memory for sentence_multiclass_forward.11']
    %10 = vsyncpa [#allocation3], 0
    // Predicated region
    $region2: #{sentence_multiclass_forward.11} parent=1 // pred_check
      _
    $region3: #{sentence_multiclass_forward.11} parent=1 // pred_check_branch
      %12 = sbr.rel (0) target = $region5
    $region4: #{sentence_multiclass_forward.11} parent=1 // pred_region
      _
    $region5: #{sentence_multiclass_forward.11} parent=1 // pred_fallthru
      _
    // Predicated region
    $region6: #{sentence_multiclass_forward.11} parent=1 // pred_check
      _
    $region7: #{sentence_multiclass_forward.11} parent=1 // pred_check_branch
      %14 = sbr.rel (0) target = $region9
    $region8: #{sentence_multiclass_forward.11} parent=1 // pred_region
      _
    $region9: #{sentence_multiclass_forward.11} parent=1 // pred_fallthru
      _
    // Predicated region
    $region10: #{sentence_multiclass_forward.11} parent=1 // pred_check
      _
    $region11: #{sentence_multiclass_forward.11} parent=1 // pred_check_branch
      %16 = sbr.rel (0) target = $region13
    $region12: #{sentence_multiclass_forward.11} parent=1 // pred_region
      _
    $region13: #{sentence_multiclass_forward.11} parent=1 // pred_fallthru
      _
    // Predicated region
    $region14: #{sentence_multiclass_forward.11} parent=1 // pred_check
      _
    $region15: #{sentence_multiclass_forward.11} parent=1 // pred_check_branch
      %18 = sbr.rel (0) target = $region17
    $region16: #{sentence_multiclass_forward.11} parent=1 // pred_region
      _
    $region17: #{sentence_multiclass_forward.11} parent=1 // pred_fallthru
      _
    // Predicated region
    $region18: #{sentence_multiclass_forward.11} parent=1 // pred_check
      _
    $region19: #{sentence_multiclass_forward.11} parent=1 // pred_check_branch
      %20 = sbr.rel (0) target = $region21
    $region20: #{sentence_multiclass_forward.11} parent=1 // pred_region
      _
    $region21: #{sentence_multiclass_forward.11} parent=1 // pred_fallthru
      _
    %v22 = vld [vmem:[%s0] sm:$0x3]
    %v23 = vpack.c.bf16 %v22, %v22
    %v24 = vld [vmem:[%s1] sm:$0xf]
    %v25 = vld [vmem:[%s1 + $0x4] sm:$0xf]
    %v26 = vld [vmem:[%s1 + $0x8] sm:$0xf]
    %v27 = vld [vmem:[%s1 + $0xc] sm:$0xf]
    %v28 = vld [vmem:[%s1 + $0x10] sm:$0xf]
    %v29 = vld [vmem:[%s1 + $0x14] sm:$0xf]
    %v30 = vld [vmem:[%s1 + $0x18] sm:$0xf]
    %v31 = vld [vmem:[%s1 + $0x1c] sm:$0xf]
    %v32 = vld [vmem:[%s1 + $0x20] sm:$0xf]
    %v33 = vld [vmem:[%s1 + $0x24] sm:$0xf]
    %v34 = vld [vmem:[%s1 + $0x28] sm:$0xf]
    %v35 = vld [vmem:[%s1 + $0x2c] sm:$0xf]
    %v36 = vld [vmem:[%s1 + $0x30] sm:$0xf]
    %v37 = vld [vmem:[%s1 + $0x34] sm:$0xf]
    %v38 = vld [vmem:[%s1 + $0x38] sm:$0xf]
    %v39 = vld [vmem:[%s1 + $0x3c] sm:$0xf]
    %v40 = vld [vmem:[%s2] sm:$0x1]
    %v42 = vlaneseq
    %v43 = vshrl.u32 %v42, 7
    %v44 = vsub.s32 0, %v43
    %v45 = vrot.slane %v40, %v44
    %v63 = vunpack.c.l.b16 %v24
    %v64 = vunpack.c.l.b16 %v25
    %v65 = vunpack.c.l.b16 %v26
    %v66 = vunpack.c.l.b16 %v27
    %v67 = vunpack.c.l.b16 %v28
    %v68 = vunpack.c.l.b16 %v29
    %v69 = vunpack.c.l.b16 %v30
    %v70 = vunpack.c.l.b16 %v31
    %v71 = vunpack.c.l.b16 %v32
    %v72 = vunpack.c.l.b16 %v33
    %v73 = vunpack.c.l.b16 %v34
    %v74 = vunpack.c.l.b16 %v35
    %v75 = vunpack.c.l.b16 %v36
    %v76 = vunpack.c.l.b16 %v37
    %v77 = vunpack.c.l.b16 %v38
    %v78 = vunpack.c.l.b16 %v39
    %v79 = vpack.c.b16 %v64, %v63
    %v80 = vpack.c.b16 %v66, %v65
    %v81 = vpack.c.b16 %v68, %v67
    %v82 = vpack.c.b16 %v70, %v69
    %v83 = vpack.c.b16 %v72, %v71
    %v84 = vpack.c.b16 %v74, %v73
    %v85 = vpack.c.b16 %v76, %v75
    %v86 = vpack.c.b16 %v78, %v77
    %95 = vmatprep.subr.bf16.mxu0 0
    %96 = vmatpush1.bf16.msra.mxu0 %v79
    %97 = vmatprep.subr.bf16.mxu0 0
    %98 = vmatpush1.bf16.msra.mxu0 %v80
    %99 = vmatprep.subr.bf16.mxu0 0
    %100 = vmatpush1.bf16.msra.mxu0 %v81
    %101 = vmatprep.subr.bf16.mxu0 0
    %102 = vmatpush1.bf16.msra.mxu0 %v82
    %103 = vmatprep.subr.bf16.mxu0 0
    %104 = vmatpush1.bf16.msra.mxu0 %v83
    %105 = vmatprep.subr.bf16.mxu0 0
    %106 = vmatpush1.bf16.msra.mxu0 %v84
    %107 = vmatprep.subr.bf16.mxu0 0
    %108 = vmatpush1.bf16.msra.mxu0 %v85
    %109 = vmatprep.subr.bf16.mxu0 0
    %110 = vmatpush1.bf16.msra.mxu0 %v86
    %111 = vmatprep.subr.bf16.mxu0 0
    %112 = vmatpush1.bf16.msra.mxu0 0
    %113 = vmatprep.subr.bf16.mxu0 0
    %114 = vmatpush1.bf16.msra.mxu0 0
    %115 = vmatprep.subr.bf16.mxu0 0
    %116 = vmatpush1.bf16.msra.mxu0 0
    %117 = vmatprep.subr.bf16.mxu0 0
    %118 = vmatpush1.bf16.msra.mxu0 0
    %119 = vmatprep.subr.bf16.mxu0 0
    %120 = vmatpush1.bf16.msra.mxu0 0
    %121 = vmatprep.subr.bf16.mxu0 0
    %122 = vmatpush1.bf16.msra.mxu0 0
    %123 = vmatprep.subr.bf16.mxu0 0
    %124 = vmatpush1.bf16.msra.mxu0 0
    %125 = vmatprep.subr.bf16.mxu0 0
    %126 = vmatpush1.bf16.msra.mxu0 0
    %127 = vmatprep.mubr.bf16.mxu0 0
    %128 = vmatmul.mubr.bf16.gmra.mrb[0].mxu0 %v23
    %v129 = vpop.f32.mrb[0].mxu0
    %v130 = vadd.f32 %v45, %v129
    %v131 = vpop.f32.mrb[0].mxu0
    %v132 = vpop.f32.mrb[0].mxu0
    %v133 = vpop.f32.mrb[0].mxu0
    %134 = vdwg.mxu0
    %v135 = vtanh.pop %v130
    %v136 = vpack.c.bf16 %v135, %v135
    %v137 = vld [vmem:[%s3] sm:$0xf]
    %v138 = vld [vmem:[%s3 + $0x4] sm:$0xf]
    %v139 = vld [vmem:[%s3 + $0x8] sm:$0xf]
    %v140 = vld [vmem:[%s3 + $0xc] sm:$0xf]
    %v141 = vld [vmem:[%s3 + $0x10] sm:$0xf]
    %v142 = vld [vmem:[%s3 + $0x14] sm:$0xf]
    %v143 = vld [vmem:[%s3 + $0x18] sm:$0xf]
    %v144 = vld [vmem:[%s3 + $0x1c] sm:$0xf]
    %v145 = vld [vmem:[%s3 + $0x20] sm:$0xf]
    %v146 = vld [vmem:[%s3 + $0x24] sm:$0xf]
    %v147 = vld [vmem:[%s3 + $0x28] sm:$0xf]
    %v148 = vld [vmem:[%s3 + $0x2c] sm:$0xf]
    %v149 = vld [vmem:[%s3 + $0x30] sm:$0xf]
    %v150 = vld [vmem:[%s3 + $0x34] sm:$0xf]
    %v151 = vld [vmem:[%s3 + $0x38] sm:$0xf]
    %v152 = vld [vmem:[%s3 + $0x3c] sm:$0xf]
    %v153 = vld [vmem:[%s4] sm:$0x1]
    %v155 = vlaneseq
    %v156 = vshrl.u32 %v155, 7
    %v157 = vsub.s32 0, %v156
    %v158 = vrot.slane %v153, %v157
    %v176 = vunpack.c.l.b16 %v137
    %v177 = vunpack.c.l.b16 %v138
    %v178 = vunpack.c.l.b16 %v139
    %v179 = vunpack.c.l.b16 %v140
    %v180 = vunpack.c.l.b16 %v141
    %v181 = vunpack.c.l.b16 %v142
    %v182 = vunpack.c.l.b16 %v143
    %v183 = vunpack.c.l.b16 %v144
    %v184 = vunpack.c.l.b16 %v145
    %v185 = vunpack.c.l.b16 %v146
    %v186 = vunpack.c.l.b16 %v147
    %v187 = vunpack.c.l.b16 %v148
    %v188 = vunpack.c.l.b16 %v149
    %v189 = vunpack.c.l.b16 %v150
    %v190 = vunpack.c.l.b16 %v151
    %v191 = vunpack.c.l.b16 %v152
    %v192 = vpack.c.b16 %v177, %v176
    %v193 = vpack.c.b16 %v179, %v178
    %v194 = vpack.c.b16 %v181, %v180
    %v195 = vpack.c.b16 %v183, %v182
    %v196 = vpack.c.b16 %v185, %v184
    %v197 = vpack.c.b16 %v187, %v186
    %v198 = vpack.c.b16 %v189, %v188
    %v199 = vpack.c.b16 %v191, %v190
    %208 = vmatprep.subr.bf16.mxu0 0
    %209 = vmatpush1.bf16.msra.mxu0 %v192
    %210 = vmatprep.subr.bf16.mxu0 0
    %211 = vmatpush1.bf16.msra.mxu0 %v193
    %212 = vmatprep.subr.bf16.mxu0 0
    %213 = vmatpush1.bf16.msra.mxu0 %v194
    %214 = vmatprep.subr.bf16.mxu0 0
    %215 = vmatpush1.bf16.msra.mxu0 %v195
    %216 = vmatprep.subr.bf16.mxu0 0
    %217 = vmatpush1.bf16.msra.mxu0 %v196
    %218 = vmatprep.subr.bf16.mxu0 0
    %219 = vmatpush1.bf16.msra.mxu0 %v197
    %220 = vmatprep.subr.bf16.mxu0 0
    %221 = vmatpush1.bf16.msra.mxu0 %v198
    %222 = vmatprep.subr.bf16.mxu0 0
    %223 = vmatpush1.bf16.msra.mxu0 %v199
    %224 = vmatprep.subr.bf16.mxu0 0
    %225 = vmatpush1.bf16.msra.mxu0 0
    %226 = vmatprep.subr.bf16.mxu0 0
    %227 = vmatpush1.bf16.msra.mxu0 0
    %228 = vmatprep.subr.bf16.mxu0 0
    %229 = vmatpush1.bf16.msra.mxu0 0
    %230 = vmatprep.subr.bf16.mxu0 0
    %231 = vmatpush1.bf16.msra.mxu0 0
    %232 = vmatprep.subr.bf16.mxu0 0
    %233 = vmatpush1.bf16.msra.mxu0 0
    %234 = vmatprep.subr.bf16.mxu0 0
    %235 = vmatpush1.bf16.msra.mxu0 0
    %236 = vmatprep.subr.bf16.mxu0 0
    %237 = vmatpush1.bf16.msra.mxu0 0
    %238 = vmatprep.subr.bf16.mxu0 0
    %239 = vmatpush1.bf16.msra.mxu0 0
    %240 = vmatprep.mubr.bf16.mxu0 0
    %241 = vmatmul.mubr.bf16.gmra.mrb[0].mxu0 %v136
    %v242 = vpop.f32.mrb[0].mxu0
    %v243 = vadd.f32 %v158, %v242
    %v244 = vpop.f32.mrb[0].mxu0
    %v245 = vpop.f32.mrb[0].mxu0
    %v246 = vpop.f32.mrb[0].mxu0
    %247 = vdwg.mxu0
    %v248 = vxor.u32 %v243, 2147483648
    %v249 = vmul.f32 %v248, 1.442695
    %v250 = vpow.pop %v249
    %v251 = vadd.f32 %v250, 1.0
    %v252 = vrcp.pop %v251
    %v253 = vmul.f32 1.0, %v252
    %254 = vst [vmem:[#allocation2] sm:$0x3] %v253
    // Predicated region
    $region22: #{sentence_multiclass_forward.11} parent=1 // pred_check
      _
    $region23: #{sentence_multiclass_forward.11} parent=1 // pred_check_branch
      %256 = sbr.rel (0) target = $region25
    $region24: #{sentence_multiclass_forward.11} parent=1 // pred_region
      %s258 = ssub.s32 32, 32
      %259 = vsyncadd [#allocation3], %s258
      %s261 = sshll.u32 [#allocation2], 4
      %s262 = int_to_ptr.vmem [resolvable:$true] %s261
      %264 = dma.vmem_to_hbm [thread:$0]  %s262, 32, %s5, [#allocation3]
    $region25: #{sentence_multiclass_forward.11} parent=1 // pred_fallthru
      _
    // Predicated region
    $region26: #{sentence_multiclass_forward.11} parent=1 // pred_check
      _
    $region27: #{sentence_multiclass_forward.11} parent=1 // pred_check_branch
      %266 = sbr.rel (0) target = $region29
    $region28: #{sentence_multiclass_forward.11} parent=1 // pred_region
      %267 = dma.done [#allocation3], 32
    $region29: #{sentence_multiclass_forward.11} parent=1 // pred_fallthru
      _
    %268 = vsyncpa [#allocation3], 1

// kernel: sentence_multiclass_forward.8
$region0: #{sentence_multiclass_forward.8}
  #allocation0 [shape = 'u32[]', space=smem, size = 0x4, offset = 0x4, fixed_abs, tag = 'smem constant byte address 0x4 - core index']
  #allocation1 [shape = 'u32[144,128]{1,0:T(1,128)}', space=vmem, size = 0x12000, scoped, tag = 'internal scratch']
  %s0 = inlined_call_operand.vmem [shape: f32[16,128], index: 0, kind: input, shape index: {}]
  %s1 = inlined_call_operand.vmem [shape: bf16[128,512], index: 1, kind: input, shape index: {}]
  %s2 = inlined_call_operand.vmem [shape: f32[1,512], index: 2, kind: input, shape index: {}]
  %s3 = inlined_call_operand.vmem [shape: bf16[512,128], index: 3, kind: input, shape index: {}]
  %s4 = inlined_call_operand.vmem [shape: f32[1,128], index: 4, kind: input, shape index: {}]
  %s5 = inlined_call_operand.vmem [shape: f32[1,128], index: 5, kind: input, shape index: {}]
  %s6 = inlined_call_operand.vmem [shape: f32[1,128], index: 6, kind: input, shape index: {}]
  %s7 = inlined_call_operand.vmem [shape: f32[16,128], index: 7, kind: output, shape index: {}]
  %s8 = sld [smem:[#allocation0]]
  $region61: #{sentence_multiclass_forward.8} parent=0
    _
  %s10 = ssub.s32 1, %s8
  %s11 = scalar_select 0, %s10, %s8
  loop: start=0, step=1, limit=4
  $region2: #{sentence_multiclass_forward.8} parent=0 // loop_pre_header
    _
  $region3: #{sentence_multiclass_forward.8} parent=0 // loop_header
    %s13 = sphi 0, %s17
    %p14 = scmp.ge.s32.totalorder %s13, 4
    %s23 = sphi 0, %s25
    %s26 = sphi 0, %s23
    %s27 = sphi 0, %s26
    %s43 = sphi 0, %s27
    %s47 = sphi 0, %s47
    %s49 = sphi 0, %s47
    %s50 = sphi 0, %s49
    %s64 = sphi 0, %s50
    %s68 = sphi 0, %s68
    %s70 = sphi 0, %s68
    %s71 = sphi 0, %s70
    %s85 = sphi 0, %s71
    %s89 = sphi 0, %s89
    %s91 = sphi 0, %s89
    %s92 = sphi 0, %s91
    %s106 = sphi 0, %s92
    %s110 = sphi 0, %s110
    %s112 = sphi 0, %s110
    %s113 = sphi 0, %s112
    %s127 = sphi 0, %s113
    %s131 = sphi 0, %s131
    %s133 = sphi 0, %s131
    %s134 = sphi 0, %s133
    %s148 = sphi 0, %s134
    %s152 = sphi 0, %s152
    %s154 = sphi 0, %s152
    %s155 = sphi 0, %s154
    %s169 = sphi 0, %s155
    %s175 = sphi 0, %s177
    %s178 = sphi 0, %s175
    %s179 = sphi 0, %s178
    %s195 = sphi 0, %s179
  $region4: #{sentence_multiclass_forward.8} parent=0 // loop_header_branch
    %16 = sbr.rel (%p14) target = $region8
  $region5: #{sentence_multiclass_forward.8} parent=0 // loop_body
    %s18 = ssub.s32 %s13, 1
    %s19 = ssub.s32 %s13, 2
    %s20 = sadd.s32 %s13, 1
    %s21 = ssub.s32 %s13, %s20
    %p22 = scmp.eq.s32.totalorder %s21, 0
    %s24 = sadd.s32 %s23, 1
    %s25 = scalar_select %p22, %s23, %s24
    %p28 = pneg %p22
    %p29 = scmp.eq.s32.totalorder %s13, 1
    %p30 = por %p28, %p29
    %p31 = scmp.ne.s32.totalorder %s23, %s26
    %p32 = scmp.eq.s32.totalorder %s13, 0
    %p33 = por %p31, %p32
    %p34 = scmp.ne.s32.totalorder %s23, %s26
    %p35 = scmp.eq.s32.totalorder %s18, 1
    %p36 = por %p34, %p35
    %p37 = scmp.ne.s32.totalorder %s26, %s27
    %p38 = scmp.eq.s32.totalorder %s18, 0
    %p39 = por %p37, %p38
    %p40 = scmp.ne.s32.totalorder %s26, %s27
    %p41 = scmp.eq.s32.totalorder %s19, 1
    %p42 = por %p40, %p41
    %p44 = scmp.ne.s32.totalorder %s27, %s43
    %p45 = scmp.eq.s32.totalorder %s19, 0
    %p46 = por %p44, %p45
    %s48 = sadd.s32 %s47, 1
    %p51 = scmp.eq.s32.totalorder %s13, 1
    %p52 = scmp.ne.s32.totalorder %s47, %s49
    %p53 = scmp.eq.s32.totalorder %s13, 0
    %p54 = por %p52, %p53
    %p55 = scmp.ne.s32.totalorder %s47, %s49
    %p56 = scmp.eq.s32.totalorder %s18, 1
    %p57 = por %p55, %p56
    %p58 = scmp.ne.s32.totalorder %s49, %s50
    %p59 = scmp.eq.s32.totalorder %s18, 0
    %p60 = por %p58, %p59
    %p61 = scmp.ne.s32.totalorder %s49, %s50
    %p62 = scmp.eq.s32.totalorder %s19, 1
    %p63 = por %p61, %p62
    %p65 = scmp.ne.s32.totalorder %s50, %s64
    %p66 = scmp.eq.s32.totalorder %s19, 0
    %p67 = por %p65, %p66
    %s69 = sadd.s32 %s68, 1
    %p72 = scmp.eq.s32.totalorder %s13, 1
    %p73 = scmp.ne.s32.totalorder %s68, %s70
    %p74 = scmp.eq.s32.totalorder %s13, 0
    %p75 = por %p73, %p74
    %p76 = scmp.ne.s32.totalorder %s68, %s70
    %p77 = scmp.eq.s32.totalorder %s18, 1
    %p78 = por %p76, %p77
    %p79 = scmp.ne.s32.totalorder %s70, %s71
    %p80 = scmp.eq.s32.totalorder %s18, 0
    %p81 = por %p79, %p80
    %p82 = scmp.ne.s32.totalorder %s70, %s71
    %p83 = scmp.eq.s32.totalorder %s19, 1
    %p84 = por %p82, %p83
    %p86 = scmp.ne.s32.totalorder %s71, %s85
    %p87 = scmp.eq.s32.totalorder %s19, 0
    %p88 = por %p86, %p87
    %s90 = sadd.s32 %s89, 1
    %p93 = scmp.eq.s32.totalorder %s13, 1
    %p94 = scmp.ne.s32.totalorder %s89, %s91
    %p95 = scmp.eq.s32.totalorder %s13, 0
    %p96 = por %p94, %p95
    %p97 = scmp.ne.s32.totalorder %s89, %s91
    %p98 = scmp.eq.s32.totalorder %s18, 1
    %p99 = por %p97, %p98
    %p100 = scmp.ne.s32.totalorder %s91, %s92
    %p101 = scmp.eq.s32.totalorder %s18, 0
    %p102 = por %p100, %p101
    %p103 = scmp.ne.s32.totalorder %s91, %s92
    %p104 = scmp.eq.s32.totalorder %s19, 1
    %p105 = por %p103, %p104
    %p107 = scmp.ne.s32.totalorder %s92, %s106
    %p108 = scmp.eq.s32.totalorder %s19, 0
    %p109 = por %p107, %p108
    %s111 = sadd.s32 %s110, 1
    %p114 = scmp.eq.s32.totalorder %s13, 1
    %p115 = scmp.ne.s32.totalorder %s110, %s112
    %p116 = scmp.eq.s32.totalorder %s13, 0
    %p117 = por %p115, %p116
    %p118 = scmp.ne.s32.totalorder %s110, %s112
    %p119 = scmp.eq.s32.totalorder %s18, 1
    %p120 = por %p118, %p119
    %p121 = scmp.ne.s32.totalorder %s112, %s113
    %p122 = scmp.eq.s32.totalorder %s18, 0
    %p123 = por %p121, %p122
    %p124 = scmp.ne.s32.totalorder %s112, %s113
    %p125 = scmp.eq.s32.totalorder %s19, 1
    %p126 = por %p124, %p125
    %p128 = scmp.ne.s32.totalorder %s113, %s127
    %p129 = scmp.eq.s32.totalorder %s19, 0
    %p130 = por %p128, %p129
    %s132 = sadd.s32 %s131, 1
    %p135 = scmp.eq.s32.totalorder %s13, 1
    %p136 = scmp.ne.s32.totalorder %s131, %s133
    %p137 = scmp.eq.s32.totalorder %s13, 0
    %p138 = por %p136, %p137
    %p139 = scmp.ne.s32.totalorder %s131, %s133
    %p140 = scmp.eq.s32.totalorder %s18, 1
    %p141 = por %p139, %p140
    %p142 = scmp.ne.s32.totalorder %s133, %s134
    %p143 = scmp.eq.s32.totalorder %s18, 0
    %p144 = por %p142, %p143
    %p145 = scmp.ne.s32.totalorder %s133, %s134
    %p146 = scmp.eq.s32.totalorder %s19, 1
    %p147 = por %p145, %p146
    %p149 = scmp.ne.s32.totalorder %s134, %s148
    %p150 = scmp.eq.s32.totalorder %s19, 0
    %p151 = por %p149, %p150
    %s153 = sadd.s32 %s152, 1
    %p156 = scmp.eq.s32.totalorder %s13, 1
    %p157 = scmp.ne.s32.totalorder %s152, %s154
    %p158 = scmp.eq.s32.totalorder %s13, 0
    %p159 = por %p157, %p158
    %p160 = scmp.ne.s32.totalorder %s152, %s154
    %p161 = scmp.eq.s32.totalorder %s18, 1
    %p162 = por %p160, %p161
    %p163 = scmp.ne.s32.totalorder %s154, %s155
    %p164 = scmp.eq.s32.totalorder %s18, 0
    %p165 = por %p163, %p164
    %p166 = scmp.ne.s32.totalorder %s154, %s155
    %p167 = scmp.eq.s32.totalorder %s19, 1
    %p168 = por %p166, %p167
    %p170 = scmp.ne.s32.totalorder %s155, %s169
    %p171 = scmp.eq.s32.totalorder %s19, 0
    %p172 = por %p170, %p171
    %s173 = ssub.s32 %s13, %s20
    %p174 = scmp.eq.s32.totalorder %s173, 0
    %s176 = sadd.s32 %s175, 1
    %s177 = scalar_select %p174, %s175, %s176
    %p180 = pneg %p174
    %p181 = scmp.eq.s32.totalorder %s13, 1
    %p182 = por %p180, %p181
    %p183 = scmp.ne.s32.totalorder %s175, %s178
    %p184 = scmp.eq.s32.totalorder %s13, 0
    %p185 = por %p183, %p184
    %p186 = scmp.ne.s32.totalorder %s175, %s178
    %p187 = scmp.eq.s32.totalorder %s18, 1
    %p188 = por %p186, %p187
    %p189 = scmp.ne.s32.totalorder %s178, %s179
    %p190 = scmp.eq.s32.totalorder %s18, 0
    %p191 = por %p189, %p190
    %p192 = scmp.ne.s32.totalorder %s178, %s179
    %p193 = scmp.eq.s32.totalorder %s19, 1
    %p194 = por %p192, %p193
    %p196 = scmp.ne.s32.totalorder %s179, %s195
    %p197 = scmp.eq.s32.totalorder %s19, 0
    %p198 = por %p196, %p197
    %p199 = scmp.le.s32.totalorder 1, %s13
    %p200 = scmp.lt.s32.totalorder %s13, 3
    %p201 = pnand %p199, %p200
    %p202 = pneg %p201
    // Predicated region
    $region9: #{sentence_multiclass_forward.8} parent=5 // pred_check
      _
    $region10: #{sentence_multiclass_forward.8} parent=5 // pred_check_branch
      %204 = sbr.rel (%p201) target = $region12
    $region11: #{sentence_multiclass_forward.8} parent=5 // pred_region
      %s205 = ssub.s32 %s13, 1
      // Predicated region
      $region13: #{sentence_multiclass_forward.8} parent=11 // pred_check
        %p206 = pneg %p60
      $region14: #{sentence_multiclass_forward.8} parent=11 // pred_check_branch
        %208 = sbr.rel (%p206) target = $region16
      $region15: #{sentence_multiclass_forward.8} parent=11 // pred_region
        _
      $region16: #{sentence_multiclass_forward.8} parent=11 // pred_fallthru
        _
      // Predicated region
      $region17: #{sentence_multiclass_forward.8} parent=11 // pred_check
        %p209 = pneg %p81
      $region18: #{sentence_multiclass_forward.8} parent=11 // pred_check_branch
        %211 = sbr.rel (%p209) target = $region20
      $region19: #{sentence_multiclass_forward.8} parent=11 // pred_region
        _
      $region20: #{sentence_multiclass_forward.8} parent=11 // pred_fallthru
        _
      // Predicated region
      $region21: #{sentence_multiclass_forward.8} parent=11 // pred_check
        %p212 = pneg %p102
      $region22: #{sentence_multiclass_forward.8} parent=11 // pred_check_branch
        %214 = sbr.rel (%p212) target = $region24
      $region23: #{sentence_multiclass_forward.8} parent=11 // pred_region
        _
      $region24: #{sentence_multiclass_forward.8} parent=11 // pred_fallthru
        _
      // Predicated region
      $region25: #{sentence_multiclass_forward.8} parent=11 // pred_check
        %p215 = pneg %p123
      $region26: #{sentence_multiclass_forward.8} parent=11 // pred_check_branch
        %217 = sbr.rel (%p215) target = $region28
      $region27: #{sentence_multiclass_forward.8} parent=11 // pred_region
        _
      $region28: #{sentence_multiclass_forward.8} parent=11 // pred_fallthru
        _
      // Predicated region
      $region29: #{sentence_multiclass_forward.8} parent=11 // pred_check
        %p218 = pneg %p144
      $region30: #{sentence_multiclass_forward.8} parent=11 // pred_check_branch
        %220 = sbr.rel (%p218) target = $region32
      $region31: #{sentence_multiclass_forward.8} parent=11 // pred_region
        _
      $region32: #{sentence_multiclass_forward.8} parent=11 // pred_fallthru
        _
      // Predicated region
      $region33: #{sentence_multiclass_forward.8} parent=11 // pred_check
        %p221 = pneg %p165
      $region34: #{sentence_multiclass_forward.8} parent=11 // pred_check_branch
        %223 = sbr.rel (%p221) target = $region36
      $region35: #{sentence_multiclass_forward.8} parent=11 // pred_region
        _
      $region36: #{sentence_multiclass_forward.8} parent=11 // pred_fallthru
        _
    $region12: #{sentence_multiclass_forward.8} parent=5 // pred_fallthru
      _
    %p224 = scmp.lt.s32.totalorder %s13, 2
    // Predicated region
    $region37: #{sentence_multiclass_forward.8} parent=5 // pred_check
      %p225 = pneg %p224
    $region38: #{sentence_multiclass_forward.8} parent=5 // pred_check_branch
      %227 = sbr.rel (%p225) target = $region40
    $region39: #{sentence_multiclass_forward.8} parent=5 // pred_region
      // Predicated region
      $region41: #{sentence_multiclass_forward.8} parent=39 // pred_check
        %p228 = pneg %p33
      $region42: #{sentence_multiclass_forward.8} parent=39 // pred_check_branch
        %230 = sbr.rel (%p228) target = $region44
      $region43: #{sentence_multiclass_forward.8} parent=39 // pred_region
        %p231 = scmp.lt.s32.totalorder %s13, 1
        %s232 = scalar_select %p231, %s13, 1
        %s233 = smul.addr %s232, 8
        %s234 = scalar_lea.vmem %s0, %s233
      $region44: #{sentence_multiclass_forward.8} parent=39 // pred_fallthru
        _
    $region40: #{sentence_multiclass_forward.8} parent=5 // pred_fallthru
      _
    %p235 = scmp.le.s32.totalorder 1, %s13
    %p236 = scmp.lt.s32.totalorder %s13, 3
    %p237 = pnand %p235, %p236
    %p238 = pneg %p237
    // Predicated region
    $region45: #{sentence_multiclass_forward.8} parent=5 // pred_check
      _
    $region46: #{sentence_multiclass_forward.8} parent=5 // pred_check_branch
      %240 = sbr.rel (%p237) target = $region48
    $region47: #{sentence_multiclass_forward.8} parent=5 // pred_region
      %s241 = ssub.s32 %s13, 1
      %p242 = scmp.lt.s32.totalorder %s18, 1
      %s243 = scalar_select %p242, %s18, 1
      %s244 = smul.addr %s243, 8
      %s245 = scalar_lea.vmem %s0, %s244
      %p246 = pneg %p39
      %p247 = pneg %p36
      %p248 = pneg %p60
      %p249 = pneg %p57
      %p250 = pneg %p81
      %p251 = pneg %p78
      %p252 = pneg %p102
      %p253 = pneg %p99
      %p254 = pneg %p123
      %p255 = pneg %p120
      %p256 = pneg %p144
      %p257 = pneg %p141
      %p258 = pneg %p165
      %p259 = pneg %p162
      %p260 = pneg %p191
      %p261 = pneg %p188
      %p262 = scmp.lt.s32.totalorder %s18, 1
      %s263 = scalar_select %p262, %s18, 1
      %s264 = smul.addr %s263, 8
      %s265 = scalar_lea.vmem %s7, %s264
      %p266 = scmp.lt.s32.totalorder %s18, 1
      %s267 = scalar_select %p266, %s18, 1
      %s268 = smul.addr %s267, 8
      %s269 = scalar_lea.vmem %s0, %s268
      %p270 = scmp.lt.s32.totalorder %s18, 1
      %s271 = scalar_select %p270, %s18, 1
      %s272 = smul.addr %s271, 8
      %s273 = scalar_lea.vmem %s7, %s272
      %v275 = vld [vmem:[%s269] sm:$0xff]
      %v276 = vpack.c.bf16 %v275, %v275
      %v277 = vld [vmem:[%s1] sm:$0xff]
      %v278 = vld [vmem:[%s1 + $0x8] sm:$0xff]
      %v279 = vld [vmem:[%s1 + $0x10] sm:$0xff]
      %v280 = vld [vmem:[%s1 + $0x18] sm:$0xff]
      %v281 = vld [vmem:[%s1 + $0x20] sm:$0xff]
      %v282 = vld [vmem:[%s1 + $0x28] sm:$0xff]
      %v283 = vld [vmem:[%s1 + $0x30] sm:$0xff]
      %v284 = vld [vmem:[%s1 + $0x38] sm:$0xff]
      %v285 = vld [vmem:[%s1 + $0x40] sm:$0xff]
      %v286 = vld [vmem:[%s1 + $0x48] sm:$0xff]
      %v287 = vld [vmem:[%s1 + $0x50] sm:$0xff]
      %v288 = vld [vmem:[%s1 + $0x58] sm:$0xff]
      %v289 = vld [vmem:[%s1 + $0x60] sm:$0xff]
      %v290 = vld [vmem:[%s1 + $0x68] sm:$0xff]
      %v291 = vld [vmem:[%s1 + $0x70] sm:$0xff]
      %v292 = vld [vmem:[%s1 + $0x78] sm:$0xff]
      %v293 = vld [vmem:[%s1 + $0x80] sm:$0xff]
      %v294 = vld [vmem:[%s1 + $0x88] sm:$0xff]
      %v295 = vld [vmem:[%s1 + $0x90] sm:$0xff]
      %v296 = vld [vmem:[%s1 + $0x98] sm:$0xff]
      %v297 = vld [vmem:[%s1 + $0xa0] sm:$0xff]
      %v298 = vld [vmem:[%s1 + $0xa8] sm:$0xff]
      %v299 = vld [vmem:[%s1 + $0xb0] sm:$0xff]
      %v300 = vld [vmem:[%s1 + $0xb8] sm:$0xff]
      %v301 = vld [vmem:[%s1 + $0xc0] sm:$0xff]
      %v302 = vld [vmem:[%s1 + $0xc8] sm:$0xff]
      %v303 = vld [vmem:[%s1 + $0xd0] sm:$0xff]
      %v304 = vld [vmem:[%s1 + $0xd8] sm:$0xff]
      %v305 = vld [vmem:[%s1 + $0xe0] sm:$0xff]
      %v306 = vld [vmem:[%s1 + $0xe8] sm:$0xff]
      %v307 = vld [vmem:[%s1 + $0xf0] sm:$0xff]
      %v308 = vld [vmem:[%s1 + $0xf8] sm:$0xff]
      %v309 = vld [vmem:[%s2] sm:$0xf]
      %v311 = vlaneseq
      %v312 = vshrl.u32 %v311, 7
      %v313 = vsub.s32 0, %v312
      %v314 = vrot.slane %v309, %v313
      %v315 = vlaneseq
      %v316 = vshrl.u32 %v315, 7
      %v317 = vsub.s32 1, %v316
      %v318 = vrot.slane %v309, %v317
      %v319 = vlaneseq
      %v320 = vshrl.u32 %v319, 7
      %v321 = vsub.s32 2, %v320
      %v322 = vrot.slane %v309, %v321
      %v323 = vlaneseq
      %v324 = vshrl.u32 %v323, 7
      %v325 = vsub.s32 3, %v324
      %v326 = vrot.slane %v309, %v325
      %v363 = vunpack.c.l.b16 %v277
      %v364 = vunpack.c.h.b16 %v277
      %v365 = vunpack.c.l.b16 %v278
      %v366 = vunpack.c.h.b16 %v278
      %v367 = vunpack.c.l.b16 %v279
      %v368 = vunpack.c.h.b16 %v279
      %v369 = vunpack.c.l.b16 %v280
      %v370 = vunpack.c.h.b16 %v280
      %v371 = vunpack.c.l.b16 %v281
      %v372 = vunpack.c.h.b16 %v281
      %v373 = vunpack.c.l.b16 %v282
      %v374 = vunpack.c.h.b16 %v282
      %v375 = vunpack.c.l.b16 %v283
      %v376 = vunpack.c.h.b16 %v283
      %v377 = vunpack.c.l.b16 %v284
      %v378 = vunpack.c.h.b16 %v284
      %v379 = vunpack.c.l.b16 %v285
      %v380 = vunpack.c.h.b16 %v285
      %v381 = vunpack.c.l.b16 %v286
      %v382 = vunpack.c.h.b16 %v286
      %v383 = vunpack.c.l.b16 %v287
      %v384 = vunpack.c.h.b16 %v287
      %v385 = vunpack.c.l.b16 %v288
      %v386 = vunpack.c.h.b16 %v288
      %v387 = vunpack.c.l.b16 %v289
      %v388 = vunpack.c.h.b16 %v289
      %v389 = vunpack.c.l.b16 %v290
      %v390 = vunpack.c.h.b16 %v290
      %v391 = vunpack.c.l.b16 %v291
      %v392 = vunpack.c.h.b16 %v291
      %v393 = vunpack.c.l.b16 %v292
      %v394 = vunpack.c.h.b16 %v292
      %v395 = vunpack.c.l.b16 %v293
      %v396 = vunpack.c.h.b16 %v293
      %v397 = vunpack.c.l.b16 %v294
      %v398 = vunpack.c.h.b16 %v294
      %v399 = vunpack.c.l.b16 %v295
      %v400 = vunpack.c.h.b16 %v295
      %v401 = vunpack.c.l.b16 %v296
      %v402 = vunpack.c.h.b16 %v296
      %v403 = vunpack.c.l.b16 %v297
      %v404 = vunpack.c.h.b16 %v297
      %v405 = vunpack.c.l.b16 %v298
      %v406 = vunpack.c.h.b16 %v298
      %v407 = vunpack.c.l.b16 %v299
      %v408 = vunpack.c.h.b16 %v299
      %v409 = vunpack.c.l.b16 %v300
      %v410 = vunpack.c.h.b16 %v300
      %v411 = vunpack.c.l.b16 %v301
      %v412 = vunpack.c.h.b16 %v301
      %v413 = vunpack.c.l.b16 %v302
      %v414 = vunpack.c.h.b16 %v302
      %v415 = vunpack.c.l.b16 %v303
      %v416 = vunpack.c.h.b16 %v303
      %v417 = vunpack.c.l.b16 %v304
      %v418 = vunpack.c.h.b16 %v304
      %v419 = vunpack.c.l.b16 %v305
      %v420 = vunpack.c.h.b16 %v305
      %v421 = vunpack.c.l.b16 %v306
      %v422 = vunpack.c.h.b16 %v306
      %v423 = vunpack.c.l.b16 %v307
      %v424 = vunpack.c.h.b16 %v307
      %v425 = vunpack.c.l.b16 %v308
      %v426 = vunpack.c.h.b16 %v308
      %v427 = vpack.c.b16 %v367, %v363
      %v428 = vpack.c.b16 %v368, %v364
      %v429 = vpack.c.b16 %v369, %v365
      %v430 = vpack.c.b16 %v370, %v366
      %v431 = vpack.c.b16 %v375, %v371
      %v432 = vpack.c.b16 %v376, %v372
      %v433 = vpack.c.b16 %v377, %v373
      %v434 = vpack.c.b16 %v378, %v374
      %v435 = vpack.c.b16 %v383, %v379
      %v436 = vpack.c.b16 %v384, %v380
      %v437 = vpack.c.b16 %v385, %v381
      %v438 = vpack.c.b16 %v386, %v382
      %v439 = vpack.c.b16 %v391, %v387
      %v440 = vpack.c.b16 %v392, %v388
      %v441 = vpack.c.b16 %v393, %v389
      %v442 = vpack.c.b16 %v394, %v390
      %v443 = vpack.c.b16 %v399, %v395
      %v444 = vpack.c.b16 %v400, %v396
      %v445 = vpack.c.b16 %v401, %v397
      %v446 = vpack.c.b16 %v402, %v398
      %v447 = vpack.c.b16 %v407, %v403
      %v448 = vpack.c.b16 %v408, %v404
      %v449 = vpack.c.b16 %v409, %v405
      %v450 = vpack.c.b16 %v410, %v406
      %v451 = vpack.c.b16 %v415, %v411
      %v452 = vpack.c.b16 %v416, %v412
      %v453 = vpack.c.b16 %v417, %v413
      %v454 = vpack.c.b16 %v418, %v414
      %v455 = vpack.c.b16 %v423, %v419
      %v456 = vpack.c.b16 %v424, %v420
      %v457 = vpack.c.b16 %v425, %v421
      %v458 = vpack.c.b16 %v426, %v422
      %491 = vmatprep.subr.bf16.mxu0 %v428
      %492 = vmatpush1.bf16.msra.mxu0 %v427
      %493 = vmatprep.subr.bf16.mxu0 %v432
      %494 = vmatpush1.bf16.msra.mxu0 %v431
      %495 = vmatprep.subr.bf16.mxu0 %v436
      %496 = vmatpush1.bf16.msra.mxu0 %v435
      %497 = vmatprep.subr.bf16.mxu0 %v440
      %498 = vmatpush1.bf16.msra.mxu0 %v439
      %499 = vmatprep.subr.bf16.mxu0 %v444
      %500 = vmatpush1.bf16.msra.mxu0 %v443
      %501 = vmatprep.subr.bf16.mxu0 %v448
      %502 = vmatpush1.bf16.msra.mxu0 %v447
      %503 = vmatprep.subr.bf16.mxu0 %v452
      %504 = vmatpush1.bf16.msra.mxu0 %v451
      %505 = vmatprep.subr.bf16.mxu0 %v456
      %506 = vmatpush1.bf16.msra.mxu0 %v455
      %507 = vmatprep.subr.bf16.mxu0 0
      %508 = vmatpush1.bf16.msra.mxu0 0
      %509 = vmatprep.subr.bf16.mxu0 0
      %510 = vmatpush1.bf16.msra.mxu0 0
      %511 = vmatprep.subr.bf16.mxu0 0
      %512 = vmatpush1.bf16.msra.mxu0 0
      %513 = vmatprep.subr.bf16.mxu0 0
      %514 = vmatpush1.bf16.msra.mxu0 0
      %515 = vmatprep.subr.bf16.mxu0 0
      %516 = vmatpush1.bf16.msra.mxu0 0
      %517 = vmatprep.subr.bf16.mxu0 0
      %518 = vmatpush1.bf16.msra.mxu0 0
      %519 = vmatprep.subr.bf16.mxu0 0
      %520 = vmatpush1.bf16.msra.mxu0 0
      %521 = vmatprep.subr.bf16.mxu0 0
      %522 = vmatpush1.bf16.msra.mxu0 0
      %523 = vmatprep.mubr.bf16.mxu0 0
      %524 = vmatmul.mubr.bf16.gmra.mrb[0].mxu0 %v276
      %v525 = vpop.f32.mrb[0].mxu0
      %v526 = vadd.f32 %v314, %v525
      %v527 = vpop.f32.mrb[0].mxu0
      %v528 = vadd.f32 %v318, %v527
      %v529 = vpop.f32.mrb[0].mxu0
      %v530 = vpop.f32.mrb[0].mxu0
      %531 = vdwg.mxu0
      %532 = vmatprep.subr.bf16.mxu0 %v430
      %533 = vmatpush1.bf16.msra.mxu0 %v429
      %534 = vmatprep.subr.bf16.mxu0 %v434
      %535 = vmatpush1.bf16.msra.mxu0 %v433
      %536 = vmatprep.subr.bf16.mxu0 %v438
      %537 = vmatpush1.bf16.msra.mxu0 %v437
      %538 = vmatprep.subr.bf16.mxu0 %v442
      %539 = vmatpush1.bf16.msra.mxu0 %v441
      %540 = vmatprep.subr.bf16.mxu0 %v446
      %541 = vmatpush1.bf16.msra.mxu0 %v445
      %542 = vmatprep.subr.bf16.mxu0 %v450
      %543 = vmatpush1.bf16.msra.mxu0 %v449
      %544 = vmatprep.subr.bf16.mxu0 %v454
      %545 = vmatpush1.bf16.msra.mxu0 %v453
      %546 = vmatprep.subr.bf16.mxu0 %v458
      %547 = vmatpush1.bf16.msra.mxu0 %v457
      %548 = vmatprep.subr.bf16.mxu0 0
      %549 = vmatpush1.bf16.msra.mxu0 0
      %550 = vmatprep.subr.bf16.mxu0 0
      %551 = vmatpush1.bf16.msra.mxu0 0
      %552 = vmatprep.subr.bf16.mxu0 0
      %553 = vmatpush1.bf16.msra.mxu0 0
      %554 = vmatprep.subr.bf16.mxu0 0
      %555 = vmatpush1.bf16.msra.mxu0 0
      %556 = vmatprep.subr.bf16.mxu0 0
      %557 = vmatpush1.bf16.msra.mxu0 0
      %558 = vmatprep.subr.bf16.mxu0 0
      %559 = vmatpush1.bf16.msra.mxu0 0
      %560 = vmatprep.subr.bf16.mxu0 0
      %561 = vmatpush1.bf16.msra.mxu0 0
      %562 = vmatprep.subr.bf16.mxu0 0
      %563 = vmatpush1.bf16.msra.mxu0 0
      %564 = vmatprep.mubr.bf16.mxu0 0
      %565 = vmatmul.mubr.bf16.gmra.mrb[0].mxu0 %v276
      %v566 = vpop.f32.mrb[0].mxu0
      %v567 = vadd.f32 %v322, %v566
      %v568 = vpop.f32.mrb[0].mxu0
      %v569 = vadd.f32 %v326, %v568
      %v570 = vpop.f32.mrb[0].mxu0
      %v571 = vpop.f32.mrb[0].mxu0
      %572 = vdwg.mxu0
      %v573 = vmul.f32 %v526, 0.5
      %v574 = vmul.f32 %v528, 0.5
      %v575 = vmul.f32 %v567, 0.5
      %v576 = vmul.f32 %v569, 0.5
      %v577 = vmul.f32 %v526, 0.044715
      %v578 = vmul.f32 %v528, 0.044715
      %v579 = vmul.f32 %v567, 0.044715
      %v580 = vmul.f32 %v569, 0.044715
      %v581 = vmul.f32 %v577, %v526
      %v582 = vmul.f32 %v578, %v528
      %v583 = vmul.f32 %v579, %v567
      %v584 = vmul.f32 %v580, %v569
      %v585 = vmul.f32 %v581, %v526
      %v586 = vmul.f32 %v582, %v528
      %v587 = vmul.f32 %v583, %v567
      %v588 = vmul.f32 %v584, %v569
      %v589 = vadd.f32 %v526, %v585
      %v590 = vadd.f32 %v528, %v586
      %v591 = vadd.f32 %v567, %v587
      %v592 = vadd.f32 %v569, %v588
      %v593 = vmul.f32 %v589, 0.7978846
      %v594 = vmul.f32 %v590, 0.7978846
      %v595 = vmul.f32 %v591, 0.7978846
      %v596 = vmul.f32 %v592, 0.7978846
      %v597 = vtanh.pop %v593
      %v598 = vtanh.pop %v594
      %v599 = vtanh.pop %v595
      %v600 = vtanh.pop %v596
      %v601 = vadd.f32 %v597, 1.0
      %v602 = vadd.f32 %v598, 1.0
      %v603 = vadd.f32 %v599, 1.0
      %v604 = vadd.f32 %v600, 1.0
      %v605 = vmul.f32 %v573, %v601
      %v606 = vmul.f32 %v574, %v602
      %v607 = vmul.f32 %v575, %v603
      %v608 = vmul.f32 %v576, %v604
      %v609 = vpack.c.bf16 %v605, %v605
      %v610 = vpack.c.bf16 %v606, %v606
      %v611 = vpack.c.bf16 %v607, %v607
      %v612 = vpack.c.bf16 %v608, %v608
      %v613 = vld [vmem:[%s3] sm:$0xf]
      %v614 = vld [vmem:[%s3 + $0x4] sm:$0xf]
      %v615 = vld [vmem:[%s3 + $0x8] sm:$0xf]
      %v616 = vld [vmem:[%s3 + $0xc] sm:$0xf]
      %v617 = vld [vmem:[%s3 + $0x10] sm:$0xf]
      %v618 = vld [vmem:[%s3 + $0x14] sm:$0xf]
      %v619 = vld [vmem:[%s3 + $0x18] sm:$0xf]
      %v620 = vld [vmem:[%s3 + $0x1c] sm:$0xf]
      %v621 = vld [vmem:[%s3 + $0x20] sm:$0xf]
      %v622 = vld [vmem:[%s3 + $0x24] sm:$0xf]
      %v623 = vld [vmem:[%s3 + $0x28] sm:$0xf]
      %v624 = vld [vmem:[%s3 + $0x2c] sm:$0xf]
      %v625 = vld [vmem:[%s3 + $0x30] sm:$0xf]
      %v626 = vld [vmem:[%s3 + $0x34] sm:$0xf]
      %v627 = vld [vmem:[%s3 + $0x38] sm:$0xf]
      %v628 = vld [vmem:[%s3 + $0x3c] sm:$0xf]
      %v629 = vld [vmem:[%s3 + $0x40] sm:$0xf]
      %v630 = vld [vmem:[%s3 + $0x44] sm:$0xf]
      %v631 = vld [vmem:[%s3 + $0x48] sm:$0xf]
      %v632 = vld [vmem:[%s3 + $0x4c] sm:$0xf]
      %v633 = vld [vmem:[%s3 + $0x50] sm:$0xf]
      %v634 = vld [vmem:[%s3 + $0x54] sm:$0xf]
      %v635 = vld [vmem:[%s3 + $0x58] sm:$0xf]
      %v636 = vld [vmem:[%s3 + $0x5c] sm:$0xf]
      %v637 = vld [vmem:[%s3 + $0x60] sm:$0xf]
      %v638 = vld [vmem:[%s3 + $0x64] sm:$0xf]
      %v639 = vld [vmem:[%s3 + $0x68] sm:$0xf]
      %v640 = vld [vmem:[%s3 + $0x6c] sm:$0xf]
      %v641 = vld [vmem:[%s3 + $0x70] sm:$0xf]
      %v642 = vld [vmem:[%s3 + $0x74] sm:$0xf]
      %v643 = vld [vmem:[%s3 + $0x78] sm:$0xf]
      %v644 = vld [vmem:[%s3 + $0x7c] sm:$0xf]
      %v645 = vld [vmem:[%s3 + $0x80] sm:$0xf]
      %v646 = vld [vmem:[%s3 + $0x84] sm:$0xf]
      %v647 = vld [vmem:[%s3 + $0x88] sm:$0xf]
      %v648 = vld [vmem:[%s3 + $0x8c] sm:$0xf]
      %v649 = vld [vmem:[%s3 + $0x90] sm:$0xf]
      %v650 = vld [vmem:[%s3 + $0x94] sm:$0xf]
      %v651 = vld [vmem:[%s3 + $0x98] sm:$0xf]
      %v652 = vld [vmem:[%s3 + $0x9c] sm:$0xf]
      %v653 = vld [vmem:[%s3 + $0xa0] sm:$0xf]
      %v654 = vld [vmem:[%s3 + $0xa4] sm:$0xf]
      %v655 = vld [vmem:[%s3 + $0xa8] sm:$0xf]
      %v656 = vld [vmem:[%s3 + $0xac] sm:$0xf]
      %v657 = vld [vmem:[%s3 + $0xb0] sm:$0xf]
      %v658 = vld [vmem:[%s3 + $0xb4] sm:$0xf]
      %v659 = vld [vmem:[%s3 + $0xb8] sm:$0xf]
      %v660 = vld [vmem:[%s3 + $0xbc] sm:$0xf]
      %v661 = vld [vmem:[%s3 + $0xc0] sm:$0xf]
      %v662 = vld [vmem:[%s3 + $0xc4] sm:$0xf]
      %v663 = vld [vmem:[%s3 + $0xc8] sm:$0xf]
      %v664 = vld [vmem:[%s3 + $0xcc] sm:$0xf]
      %v665 = vld [vmem:[%s3 + $0xd0] sm:$0xf]
      %v666 = vld [vmem:[%s3 + $0xd4] sm:$0xf]
      %v667 = vld [vmem:[%s3 + $0xd8] sm:$0xf]
      %v668 = vld [vmem:[%s3 + $0xdc] sm:$0xf]
      %v669 = vld [vmem:[%s3 + $0xe0] sm:$0xf]
      %v670 = vld [vmem:[%s3 + $0xe4] sm:$0xf]
      %v671 = vld [vmem:[%s3 + $0xe8] sm:$0xf]
      %v672 = vld [vmem:[%s3 + $0xec] sm:$0xf]
      %v673 = vld [vmem:[%s3 + $0xf0] sm:$0xf]
      %v674 = vld [vmem:[%s3 + $0xf4] sm:$0xf]
      %v675 = vld [vmem:[%s3 + $0xf8] sm:$0xf]
      %v676 = vld [vmem:[%s3 + $0xfc] sm:$0xf]
      %v677 = vld [vmem:[%s4] sm:$0x1]
      %v679 = vlaneseq
      %v680 = vshrl.u32 %v679, 7
      %v681 = vsub.s32 0, %v680
      %v682 = vrot.slane %v677, %v681
      %v748 = vunpack.c.l.b16 %v613
      %v749 = vunpack.c.l.b16 %v614
      %v750 = vunpack.c.l.b16 %v615
      %v751 = vunpack.c.l.b16 %v616
      %v752 = vunpack.c.l.b16 %v617
      %v753 = vunpack.c.l.b16 %v618
      %v754 = vunpack.c.l.b16 %v619
      %v755 = vunpack.c.l.b16 %v620
      %v756 = vunpack.c.l.b16 %v621
      %v757 = vunpack.c.l.b16 %v622
      %v758 = vunpack.c.l.b16 %v623
      %v759 = vunpack.c.l.b16 %v624
      %v760 = vunpack.c.l.b16 %v625
      %v761 = vunpack.c.l.b16 %v626
      %v762 = vunpack.c.l.b16 %v627
      %v763 = vunpack.c.l.b16 %v628
      %v764 = vunpack.c.l.b16 %v629
      %v765 = vunpack.c.l.b16 %v630
      %v766 = vunpack.c.l.b16 %v631
      %v767 = vunpack.c.l.b16 %v632
      %v768 = vunpack.c.l.b16 %v633
      %v769 = vunpack.c.l.b16 %v634
      %v770 = vunpack.c.l.b16 %v635
      %v771 = vunpack.c.l.b16 %v636
      %v772 = vunpack.c.l.b16 %v637
      %v773 = vunpack.c.l.b16 %v638
      %v774 = vunpack.c.l.b16 %v639
      %v775 = vunpack.c.l.b16 %v640
      %v776 = vunpack.c.l.b16 %v641
      %v777 = vunpack.c.l.b16 %v642
      %v778 = vunpack.c.l.b16 %v643
      %v779 = vunpack.c.l.b16 %v644
      %v780 = vunpack.c.l.b16 %v645
      %v781 = vunpack.c.l.b16 %v646
      %v782 = vunpack.c.l.b16 %v647
      %v783 = vunpack.c.l.b16 %v648
      %v784 = vunpack.c.l.b16 %v649
      %v785 = vunpack.c.l.b16 %v650
      %v786 = vunpack.c.l.b16 %v651
      %v787 = vunpack.c.l.b16 %v652
      %v788 = vunpack.c.l.b16 %v653
      %v789 = vunpack.c.l.b16 %v654
      %v790 = vunpack.c.l.b16 %v655
      %v791 = vunpack.c.l.b16 %v656
      %v792 = vunpack.c.l.b16 %v657
      %v793 = vunpack.c.l.b16 %v658
      %v794 = vunpack.c.l.b16 %v659
      %v795 = vunpack.c.l.b16 %v660
      %v796 = vunpack.c.l.b16 %v661
      %v797 = vunpack.c.l.b16 %v662
      %v798 = vunpack.c.l.b16 %v663
      %v799 = vunpack.c.l.b16 %v664
      %v800 = vunpack.c.l.b16 %v665
      %v801 = vunpack.c.l.b16 %v666
      %v802 = vunpack.c.l.b16 %v667
      %v803 = vunpack.c.l.b16 %v668
      %v804 = vunpack.c.l.b16 %v669
      %v805 = vunpack.c.l.b16 %v670
      %v806 = vunpack.c.l.b16 %v671
      %v807 = vunpack.c.l.b16 %v672
      %v808 = vunpack.c.l.b16 %v673
      %v809 = vunpack.c.l.b16 %v674
      %v810 = vunpack.c.l.b16 %v675
      %v811 = vunpack.c.l.b16 %v676
      %v812 = vpack.c.b16 %v749, %v748
      %v813 = vpack.c.b16 %v751, %v750
      %v814 = vpack.c.b16 %v753, %v752
      %v815 = vpack.c.b16 %v755, %v754
      %v816 = vpack.c.b16 %v757, %v756
      %v817 = vpack.c.b16 %v759, %v758
      %v818 = vpack.c.b16 %v761, %v760
      %v819 = vpack.c.b16 %v763, %v762
      %v820 = vpack.c.b16 %v765, %v764
      %v821 = vpack.c.b16 %v767, %v766
      %v822 = vpack.c.b16 %v769, %v768
      %v823 = vpack.c.b16 %v771, %v770
      %v824 = vpack.c.b16 %v773, %v772
      %v825 = vpack.c.b16 %v775, %v774
      %v826 = vpack.c.b16 %v777, %v776
      %v827 = vpack.c.b16 %v779, %v778
      %v828 = vpack.c.b16 %v781, %v780
      %v829 = vpack.c.b16 %v783, %v782
      %v830 = vpack.c.b16 %v785, %v784
      %v831 = vpack.c.b16 %v787, %v786
      %v832 = vpack.c.b16 %v789, %v788
      %v833 = vpack.c.b16 %v791, %v790
      %v834 = vpack.c.b16 %v793, %v792
      %v835 = vpack.c.b16 %v795, %v794
      %v836 = vpack.c.b16 %v797, %v796
      %v837 = vpack.c.b16 %v799, %v798
      %v838 = vpack.c.b16 %v801, %v800
      %v839 = vpack.c.b16 %v803, %v802
      %v840 = vpack.c.b16 %v805, %v804
      %v841 = vpack.c.b16 %v807, %v806
      %v842 = vpack.c.b16 %v809, %v808
      %v843 = vpack.c.b16 %v811, %v810
      %876 = vmatprep.subr.bf16.mxu0 0
      %877 = vmatpush1.bf16.msra.mxu0 %v812
      %878 = vmatprep.subr.bf16.mxu0 0
      %879 = vmatpush1.bf16.msra.mxu0 %v813
      %880 = vmatprep.subr.bf16.mxu0 0
      %881 = vmatpush1.bf16.msra.mxu0 %v814
      %882 = vmatprep.subr.bf16.mxu0 0
      %883 = vmatpush1.bf16.msra.mxu0 %v815
      %884 = vmatprep.subr.bf16.mxu0 0
      %885 = vmatpush1.bf16.msra.mxu0 %v816
      %886 = vmatprep.subr.bf16.mxu0 0
      %887 = vmatpush1.bf16.msra.mxu0 %v817
      %888 = vmatprep.subr.bf16.mxu0 0
      %889 = vmatpush1.bf16.msra.mxu0 %v818
      %890 = vmatprep.subr.bf16.mxu0 0
      %891 = vmatpush1.bf16.msra.mxu0 %v819
      %892 = vmatprep.subr.bf16.mxu0 0
      %893 = vmatpush1.bf16.msra.mxu0 %v820
      %894 = vmatprep.subr.bf16.mxu0 0
      %895 = vmatpush1.bf16.msra.mxu0 %v821
      %896 = vmatprep.subr.bf16.mxu0 0
      %897 = vmatpush1.bf16.msra.mxu0 %v822
      %898 = vmatprep.subr.bf16.mxu0 0
      %899 = vmatpush1.bf16.msra.mxu0 %v823
      %900 = vmatprep.subr.bf16.mxu0 0
      %901 = vmatpush1.bf16.msra.mxu0 %v824
      %902 = vmatprep.subr.bf16.mxu0 0
      %903 = vmatpush1.bf16.msra.mxu0 %v825
      %904 = vmatprep.subr.bf16.mxu0 0
      %905 = vmatpush1.bf16.msra.mxu0 %v826
      %906 = vmatprep.subr.bf16.mxu0 0
      %907 = vmatpush1.bf16.msra.mxu0 %v827
      %908 = vmatprep.mubr.bf16.mxu0 %v610
      %909 = vmatmul.mubr.bf16.gmra.mrb[0].mxu0 %v609
      %v910 = vpop.f32.mrb[0].mxu0
      %v911 = vadd.f32 %v682, %v910
      %v912 = vpop.f32.mrb[0].mxu0
      %v913 = vpop.f32.mrb[0].mxu0
      %v914 = vpop.f32.mrb[0].mxu0
      %915 = vdwg.mxu0
      %916 = vmatprep.subr.bf16.mxu0 0
      %917 = vmatpush1.bf16.msra.mxu0 %v828
      %918 = vmatprep.subr.bf16.mxu0 0
      %919 = vmatpush1.bf16.msra.mxu0 %v829
      %920 = vmatprep.subr.bf16.mxu0 0
      %921 = vmatpush1.bf16.msra.mxu0 %v830
      %922 = vmatprep.subr.bf16.mxu0 0
      %923 = vmatpush1.bf16.msra.mxu0 %v831
      %924 = vmatprep.subr.bf16.mxu0 0
      %925 = vmatpush1.bf16.msra.mxu0 %v832
      %926 = vmatprep.subr.bf16.mxu0 0
      %927 = vmatpush1.bf16.msra.mxu0 %v833
      %928 = vmatprep.subr.bf16.mxu0 0
      %929 = vmatpush1.bf16.msra.mxu0 %v834
      %930 = vmatprep.subr.bf16.mxu0 0
      %931 = vmatpush1.bf16.msra.mxu0 %v835
      %932 = vmatprep.subr.bf16.mxu0 0
      %933 = vmatpush1.bf16.msra.mxu0 %v836
      %934 = vmatprep.subr.bf16.mxu0 0
      %935 = vmatpush1.bf16.msra.mxu0 %v837
      %936 = vmatprep.subr.bf16.mxu0 0
      %937 = vmatpush1.bf16.msra.mxu0 %v838
      %938 = vmatprep.subr.bf16.mxu0 0
      %939 = vmatpush1.bf16.msra.mxu0 %v839
      %940 = vmatprep.subr.bf16.mxu0 0
      %941 = vmatpush1.bf16.msra.mxu0 %v840
      %942 = vmatprep.subr.bf16.mxu0 0
      %943 = vmatpush1.bf16.msra.mxu0 %v841
      %944 = vmatprep.subr.bf16.mxu0 0
      %945 = vmatpush1.bf16.msra.mxu0 %v842
      %946 = vmatprep.subr.bf16.mxu0 0
      %947 = vmatpush1.bf16.msra.mxu0 %v843
      %948 = vmatprep.mubr.bf16.mxu0 %v612
      %949 = vmatmul.mubr.bf16.gmra.mrb[0].mxu0 %v611
      %v950 = vpop.f32.mrb[0].mxu0
      %v951 = vadd.f32 %v911, %v950
      %v952 = vpop.f32.mrb[0].mxu0
      %v953 = vpop.f32.mrb[0].mxu0
      %v954 = vpop.f32.mrb[0].mxu0
      %955 = vdwg.mxu0
      %v956 = vadd.f32 %v951, %v275
      %v957 = vld [vmem:[%s5] sm:$0x1]
      %v958 = vld [vmem:[%s6] sm:$0x1]
      %959 = vadd.xlane.f32.xlu0 %v956
      %v960 = vpop.xlane.xlu0 %959
      %v961 = vrcp.pop 128.0
      %v962 = vmul.f32 %v960, %v961
      %v963 = vmul.f32 %v956, %v956
      %964 = vadd.xlane.f32.xlu0 %v963
      %v965 = vpop.xlane.xlu0 %964
      %v966 = vmul.f32 %v965, %v961
      %v967 = vmul.f32 %v962, %v962
      %v968 = vsub.f32 %v966, %v967
      %v969 = vmax.f32 %v968, 0.0
      %v970 = vsub.f32 %v956, %v962
      %v971 = vadd.f32 %v969, 1e-12
      %v972 = vrsqrt.pop %v971
      %v973 = vmul.f32 %v970, %v972
      %v975 = vlaneseq
      %v976 = vshrl.u32 %v975, 7
      %v977 = vsub.s32 0, %v976
      %v978 = vrot.slane %v957, %v977
      %v980 = vmul.f32 %v973, %v978
      %v982 = vlaneseq
      %v983 = vshrl.u32 %v982, 7
      %v984 = vsub.s32 0, %v983
      %v985 = vrot.slane %v958, %v984
      %v987 = vadd.f32 %v980, %v985
      %988 = vst [vmem:[%s273] sm:$0xff] %v987
      %p989 = scmp.lt.s32.totalorder %s18, 1
      %s990 = scalar_select %p989, %s18, 1
      %s991 = smul.addr %s990, 8
      %s992 = scalar_lea.vmem %s7, %s991
      // Predicated region
      $region49: #{sentence_multiclass_forward.8} parent=47 // pred_check
        %p993 = pneg %p188
      $region50: #{sentence_multiclass_forward.8} parent=47 // pred_check_branch
        %995 = sbr.rel (%p993) target = $region52
      $region51: #{sentence_multiclass_forward.8} parent=47 // pred_region
        _
      $region52: #{sentence_multiclass_forward.8} parent=47 // pred_fallthru
        _
    $region48: #{sentence_multiclass_forward.8} parent=5 // pred_fallthru
      _
    %p996 = scmp.le.s32.totalorder 2, %s13
    // Predicated region
    $region53: #{sentence_multiclass_forward.8} parent=5 // pred_check
      %p997 = pneg %p996
    $region54: #{sentence_multiclass_forward.8} parent=5 // pred_check_branch
      %999 = sbr.rel (%p997) target = $region56
    $region55: #{sentence_multiclass_forward.8} parent=5 // pred_region
      %s1000 = ssub.s32 %s13, 2
      // Predicated region
      $region57: #{sentence_multiclass_forward.8} parent=55 // pred_check
        %p1001 = pneg %p194
      $region58: #{sentence_multiclass_forward.8} parent=55 // pred_check_branch
        %1003 = sbr.rel (%p1001) target = $region60
      $region59: #{sentence_multiclass_forward.8} parent=55 // pred_region
        %p1004 = scmp.lt.s32.totalorder %s19, 1
        %s1005 = scalar_select %p1004, %s19, 1
        %s1006 = smul.addr %s1005, 8
        %s1007 = scalar_lea.vmem %s7, %s1006
      $region60: #{sentence_multiclass_forward.8} parent=55 // pred_fallthru
        _
    $region56: #{sentence_multiclass_forward.8} parent=5 // pred_fallthru
      _
  $region6: #{sentence_multiclass_forward.8} parent=0 // loop_footer
    %s17 = sadd.s32 1, %s13
  $region7: #{sentence_multiclass_forward.8} parent=0 // loop_footer_branch
    %12 = sbr.rel target = $region3
  $region8: #{sentence_multiclass_forward.8} parent=0 // loop_exit
    _

// kernel: sentence_multiclass_forward.7
$region0: #{sentence_multiclass_forward.7}
  #allocation0 [shape = 'u32[]', space=smem, size = 0x4, offset = 0x4, fixed_abs, tag = 'smem constant byte address 0x4 - core index']
  #allocation1 [shape = 'u32[144,128]{1,0:T(1,128)}', space=vmem, size = 0x12000, scoped, tag = 'internal scratch']
  %s0 = inlined_call_operand.vmem [shape: f32[16,128], index: 0, kind: input, shape index: {}]
  %s1 = inlined_call_operand.vmem [shape: bf16[128,384], index: 1, kind: input, shape index: {}]
  %s2 = inlined_call_operand.vmem [shape: f32[1,384], index: 2, kind: input, shape index: {}]
  %s3 = inlined_call_operand.vmem [shape: bf16[128,128], index: 3, kind: input, shape index: {}]
  %s4 = inlined_call_operand.vmem [shape: f32[1,128], index: 4, kind: input, shape index: {}]
  %s5 = inlined_call_operand.vmem [shape: f32[2,1,8], index: 5, kind: input, shape index: {}]
  %s6 = inlined_call_operand.vmem [shape: f32[1,128], index: 6, kind: input, shape index: {}]
  %s7 = inlined_call_operand.vmem [shape: f32[1,128], index: 7, kind: input, shape index: {}]
  %s8 = inlined_call_operand.vmem [shape: f32[16,128], index: 8, kind: output, shape index: {}]
  %s9 = sld [smem:[#allocation0]]
  $region65: #{sentence_multiclass_forward.7} parent=0
    _
  %s11 = ssub.s32 1, %s9
  %s12 = scalar_select 0, %s11, %s9
  loop: start=0, step=1, limit=4
  $region2: #{sentence_multiclass_forward.7} parent=0 // loop_pre_header
    _
  $region3: #{sentence_multiclass_forward.7} parent=0 // loop_header
    %s14 = sphi 0, %s18
    %p15 = scmp.ge.s32.totalorder %s14, 4
    %s24 = sphi 0, %s26
    %s27 = sphi 0, %s24
    %s28 = sphi 0, %s27
    %s44 = sphi 0, %s28
    %s48 = sphi 0, %s48
    %s50 = sphi 0, %s48
    %s51 = sphi 0, %s50
    %s65 = sphi 0, %s51
    %s69 = sphi 0, %s69
    %s71 = sphi 0, %s69
    %s72 = sphi 0, %s71
    %s86 = sphi 0, %s72
    %s90 = sphi 0, %s90
    %s92 = sphi 0, %s90
    %s93 = sphi 0, %s92
    %s107 = sphi 0, %s93
    %s111 = sphi 0, %s111
    %s113 = sphi 0, %s111
    %s114 = sphi 0, %s113
    %s128 = sphi 0, %s114
    %s134 = sphi 0, %s136
    %s137 = sphi 0, %s134
    %s138 = sphi 0, %s137
    %s154 = sphi 0, %s138
    %s158 = sphi 0, %s158
    %s160 = sphi 0, %s158
    %s161 = sphi 0, %s160
    %s175 = sphi 0, %s161
    %s179 = sphi 0, %s179
    %s181 = sphi 0, %s179
    %s182 = sphi 0, %s181
    %s196 = sphi 0, %s182
    %s202 = sphi 0, %s204
    %s205 = sphi 0, %s202
    %s206 = sphi 0, %s205
    %s222 = sphi 0, %s206
  $region4: #{sentence_multiclass_forward.7} parent=0 // loop_header_branch
    %17 = sbr.rel (%p15) target = $region8
  $region5: #{sentence_multiclass_forward.7} parent=0 // loop_body
    %s19 = ssub.s32 %s14, 1
    %s20 = ssub.s32 %s14, 2
    %s21 = sadd.s32 %s14, 1
    %s22 = ssub.s32 %s14, %s21
    %p23 = scmp.eq.s32.totalorder %s22, 0
    %s25 = sadd.s32 %s24, 1
    %s26 = scalar_select %p23, %s24, %s25
    %p29 = pneg %p23
    %p30 = scmp.eq.s32.totalorder %s14, 1
    %p31 = por %p29, %p30
    %p32 = scmp.ne.s32.totalorder %s24, %s27
    %p33 = scmp.eq.s32.totalorder %s14, 0
    %p34 = por %p32, %p33
    %p35 = scmp.ne.s32.totalorder %s24, %s27
    %p36 = scmp.eq.s32.totalorder %s19, 1
    %p37 = por %p35, %p36
    %p38 = scmp.ne.s32.totalorder %s27, %s28
    %p39 = scmp.eq.s32.totalorder %s19, 0
    %p40 = por %p38, %p39
    %p41 = scmp.ne.s32.totalorder %s27, %s28
    %p42 = scmp.eq.s32.totalorder %s20, 1
    %p43 = por %p41, %p42
    %p45 = scmp.ne.s32.totalorder %s28, %s44
    %p46 = scmp.eq.s32.totalorder %s20, 0
    %p47 = por %p45, %p46
    %s49 = sadd.s32 %s48, 1
    %p52 = scmp.eq.s32.totalorder %s14, 1
    %p53 = scmp.ne.s32.totalorder %s48, %s50
    %p54 = scmp.eq.s32.totalorder %s14, 0
    %p55 = por %p53, %p54
    %p56 = scmp.ne.s32.totalorder %s48, %s50
    %p57 = scmp.eq.s32.totalorder %s19, 1
    %p58 = por %p56, %p57
    %p59 = scmp.ne.s32.totalorder %s50, %s51
    %p60 = scmp.eq.s32.totalorder %s19, 0
    %p61 = por %p59, %p60
    %p62 = scmp.ne.s32.totalorder %s50, %s51
    %p63 = scmp.eq.s32.totalorder %s20, 1
    %p64 = por %p62, %p63
    %p66 = scmp.ne.s32.totalorder %s51, %s65
    %p67 = scmp.eq.s32.totalorder %s20, 0
    %p68 = por %p66, %p67
    %s70 = sadd.s32 %s69, 1
    %p73 = scmp.eq.s32.totalorder %s14, 1
    %p74 = scmp.ne.s32.totalorder %s69, %s71
    %p75 = scmp.eq.s32.totalorder %s14, 0
    %p76 = por %p74, %p75
    %p77 = scmp.ne.s32.totalorder %s69, %s71
    %p78 = scmp.eq.s32.totalorder %s19, 1
    %p79 = por %p77, %p78
    %p80 = scmp.ne.s32.totalorder %s71, %s72
    %p81 = scmp.eq.s32.totalorder %s19, 0
    %p82 = por %p80, %p81
    %p83 = scmp.ne.s32.totalorder %s71, %s72
    %p84 = scmp.eq.s32.totalorder %s20, 1
    %p85 = por %p83, %p84
    %p87 = scmp.ne.s32.totalorder %s72, %s86
    %p88 = scmp.eq.s32.totalorder %s20, 0
    %p89 = por %p87, %p88
    %s91 = sadd.s32 %s90, 1
    %p94 = scmp.eq.s32.totalorder %s14, 1
    %p95 = scmp.ne.s32.totalorder %s90, %s92
    %p96 = scmp.eq.s32.totalorder %s14, 0
    %p97 = por %p95, %p96
    %p98 = scmp.ne.s32.totalorder %s90, %s92
    %p99 = scmp.eq.s32.totalorder %s19, 1
    %p100 = por %p98, %p99
    %p101 = scmp.ne.s32.totalorder %s92, %s93
    %p102 = scmp.eq.s32.totalorder %s19, 0
    %p103 = por %p101, %p102
    %p104 = scmp.ne.s32.totalorder %s92, %s93
    %p105 = scmp.eq.s32.totalorder %s20, 1
    %p106 = por %p104, %p105
    %p108 = scmp.ne.s32.totalorder %s93, %s107
    %p109 = scmp.eq.s32.totalorder %s20, 0
    %p110 = por %p108, %p109
    %s112 = sadd.s32 %s111, 1
    %p115 = scmp.eq.s32.totalorder %s14, 1
    %p116 = scmp.ne.s32.totalorder %s111, %s113
    %p117 = scmp.eq.s32.totalorder %s14, 0
    %p118 = por %p116, %p117
    %p119 = scmp.ne.s32.totalorder %s111, %s113
    %p120 = scmp.eq.s32.totalorder %s19, 1
    %p121 = por %p119, %p120
    %p122 = scmp.ne.s32.totalorder %s113, %s114
    %p123 = scmp.eq.s32.totalorder %s19, 0
    %p124 = por %p122, %p123
    %p125 = scmp.ne.s32.totalorder %s113, %s114
    %p126 = scmp.eq.s32.totalorder %s20, 1
    %p127 = por %p125, %p126
    %p129 = scmp.ne.s32.totalorder %s114, %s128
    %p130 = scmp.eq.s32.totalorder %s20, 0
    %p131 = por %p129, %p130
    %s132 = ssub.s32 %s14, %s21
    %p133 = scmp.eq.s32.totalorder %s132, 0
    %s135 = sadd.s32 %s134, 1
    %s136 = scalar_select %p133, %s134, %s135
    %p139 = pneg %p133
    %p140 = scmp.eq.s32.totalorder %s14, 1
    %p141 = por %p139, %p140
    %p142 = scmp.ne.s32.totalorder %s134, %s137
    %p143 = scmp.eq.s32.totalorder %s14, 0
    %p144 = por %p142, %p143
    %p145 = scmp.ne.s32.totalorder %s134, %s137
    %p146 = scmp.eq.s32.totalorder %s19, 1
    %p147 = por %p145, %p146
    %p148 = scmp.ne.s32.totalorder %s137, %s138
    %p149 = scmp.eq.s32.totalorder %s19, 0
    %p150 = por %p148, %p149
    %p151 = scmp.ne.s32.totalorder %s137, %s138
    %p152 = scmp.eq.s32.totalorder %s20, 1
    %p153 = por %p151, %p152
    %p155 = scmp.ne.s32.totalorder %s138, %s154
    %p156 = scmp.eq.s32.totalorder %s20, 0
    %p157 = por %p155, %p156
    %s159 = sadd.s32 %s158, 1
    %p162 = scmp.eq.s32.totalorder %s14, 1
    %p163 = scmp.ne.s32.totalorder %s158, %s160
    %p164 = scmp.eq.s32.totalorder %s14, 0
    %p165 = por %p163, %p164
    %p166 = scmp.ne.s32.totalorder %s158, %s160
    %p167 = scmp.eq.s32.totalorder %s19, 1
    %p168 = por %p166, %p167
    %p169 = scmp.ne.s32.totalorder %s160, %s161
    %p170 = scmp.eq.s32.totalorder %s19, 0
    %p171 = por %p169, %p170
    %p172 = scmp.ne.s32.totalorder %s160, %s161
    %p173 = scmp.eq.s32.totalorder %s20, 1
    %p174 = por %p172, %p173
    %p176 = scmp.ne.s32.totalorder %s161, %s175
    %p177 = scmp.eq.s32.totalorder %s20, 0
    %p178 = por %p176, %p177
    %s180 = sadd.s32 %s179, 1
    %p183 = scmp.eq.s32.totalorder %s14, 1
    %p184 = scmp.ne.s32.totalorder %s179, %s181
    %p185 = scmp.eq.s32.totalorder %s14, 0
    %p186 = por %p184, %p185
    %p187 = scmp.ne.s32.totalorder %s179, %s181
    %p188 = scmp.eq.s32.totalorder %s19, 1
    %p189 = por %p187, %p188
    %p190 = scmp.ne.s32.totalorder %s181, %s182
    %p191 = scmp.eq.s32.totalorder %s19, 0
    %p192 = por %p190, %p191
    %p193 = scmp.ne.s32.totalorder %s181, %s182
    %p194 = scmp.eq.s32.totalorder %s20, 1
    %p195 = por %p193, %p194
    %p197 = scmp.ne.s32.totalorder %s182, %s196
    %p198 = scmp.eq.s32.totalorder %s20, 0
    %p199 = por %p197, %p198
    %s200 = ssub.s32 %s14, %s21
    %p201 = scmp.eq.s32.totalorder %s200, 0
    %s203 = sadd.s32 %s202, 1
    %s204 = scalar_select %p201, %s202, %s203
    %p207 = pneg %p201
    %p208 = scmp.eq.s32.totalorder %s14, 1
    %p209 = por %p207, %p208
    %p210 = scmp.ne.s32.totalorder %s202, %s205
    %p211 = scmp.eq.s32.totalorder %s14, 0
    %p212 = por %p210, %p211
    %p213 = scmp.ne.s32.totalorder %s202, %s205
    %p214 = scmp.eq.s32.totalorder %s19, 1
    %p215 = por %p213, %p214
    %p216 = scmp.ne.s32.totalorder %s205, %s206
    %p217 = scmp.eq.s32.totalorder %s19, 0
    %p218 = por %p216, %p217
    %p219 = scmp.ne.s32.totalorder %s205, %s206
    %p220 = scmp.eq.s32.totalorder %s20, 1
    %p221 = por %p219, %p220
    %p223 = scmp.ne.s32.totalorder %s206, %s222
    %p224 = scmp.eq.s32.totalorder %s20, 0
    %p225 = por %p223, %p224
    %p226 = scmp.le.s32.totalorder 1, %s14
    %p227 = scmp.lt.s32.totalorder %s14, 3
    %p228 = pnand %p226, %p227
    %p229 = pneg %p228
    // Predicated region
    $region9: #{sentence_multiclass_forward.7} parent=5 // pred_check
      _
    $region10: #{sentence_multiclass_forward.7} parent=5 // pred_check_branch
      %231 = sbr.rel (%p228) target = $region12
    $region11: #{sentence_multiclass_forward.7} parent=5 // pred_region
      %s232 = ssub.s32 %s14, 1
      // Predicated region
      $region13: #{sentence_multiclass_forward.7} parent=11 // pred_check
        %p233 = pneg %p61
      $region14: #{sentence_multiclass_forward.7} parent=11 // pred_check_branch
        %235 = sbr.rel (%p233) target = $region16
      $region15: #{sentence_multiclass_forward.7} parent=11 // pred_region
        _
      $region16: #{sentence_multiclass_forward.7} parent=11 // pred_fallthru
        _
      // Predicated region
      $region17: #{sentence_multiclass_forward.7} parent=11 // pred_check
        %p236 = pneg %p82
      $region18: #{sentence_multiclass_forward.7} parent=11 // pred_check_branch
        %238 = sbr.rel (%p236) target = $region20
      $region19: #{sentence_multiclass_forward.7} parent=11 // pred_region
        _
      $region20: #{sentence_multiclass_forward.7} parent=11 // pred_fallthru
        _
      // Predicated region
      $region21: #{sentence_multiclass_forward.7} parent=11 // pred_check
        %p239 = pneg %p103
      $region22: #{sentence_multiclass_forward.7} parent=11 // pred_check_branch
        %241 = sbr.rel (%p239) target = $region24
      $region23: #{sentence_multiclass_forward.7} parent=11 // pred_region
        _
      $region24: #{sentence_multiclass_forward.7} parent=11 // pred_fallthru
        _
      // Predicated region
      $region25: #{sentence_multiclass_forward.7} parent=11 // pred_check
        %p242 = pneg %p124
      $region26: #{sentence_multiclass_forward.7} parent=11 // pred_check_branch
        %244 = sbr.rel (%p242) target = $region28
      $region27: #{sentence_multiclass_forward.7} parent=11 // pred_region
        _
      $region28: #{sentence_multiclass_forward.7} parent=11 // pred_fallthru
        _
      // Predicated region
      $region29: #{sentence_multiclass_forward.7} parent=11 // pred_check
        %p245 = pneg %p171
      $region30: #{sentence_multiclass_forward.7} parent=11 // pred_check_branch
        %247 = sbr.rel (%p245) target = $region32
      $region31: #{sentence_multiclass_forward.7} parent=11 // pred_region
        _
      $region32: #{sentence_multiclass_forward.7} parent=11 // pred_fallthru
        _
      // Predicated region
      $region33: #{sentence_multiclass_forward.7} parent=11 // pred_check
        %p248 = pneg %p192
      $region34: #{sentence_multiclass_forward.7} parent=11 // pred_check_branch
        %250 = sbr.rel (%p248) target = $region36
      $region35: #{sentence_multiclass_forward.7} parent=11 // pred_region
        _
      $region36: #{sentence_multiclass_forward.7} parent=11 // pred_fallthru
        _
    $region12: #{sentence_multiclass_forward.7} parent=5 // pred_fallthru
      _
    %p251 = scmp.lt.s32.totalorder %s14, 2
    // Predicated region
    $region37: #{sentence_multiclass_forward.7} parent=5 // pred_check
      %p252 = pneg %p251
    $region38: #{sentence_multiclass_forward.7} parent=5 // pred_check_branch
      %254 = sbr.rel (%p252) target = $region40
    $region39: #{sentence_multiclass_forward.7} parent=5 // pred_region
      // Predicated region
      $region41: #{sentence_multiclass_forward.7} parent=39 // pred_check
        %p255 = pneg %p34
      $region42: #{sentence_multiclass_forward.7} parent=39 // pred_check_branch
        %257 = sbr.rel (%p255) target = $region44
      $region43: #{sentence_multiclass_forward.7} parent=39 // pred_region
        %p258 = scmp.lt.s32.totalorder %s14, 1
        %s259 = scalar_select %p258, %s14, 1
        %s260 = smul.addr %s259, 8
        %s261 = scalar_lea.vmem %s0, %s260
      $region44: #{sentence_multiclass_forward.7} parent=39 // pred_fallthru
        _
      // Predicated region
      $region45: #{sentence_multiclass_forward.7} parent=39 // pred_check
        %p262 = pneg %p144
      $region46: #{sentence_multiclass_forward.7} parent=39 // pred_check_branch
        %264 = sbr.rel (%p262) target = $region48
      $region47: #{sentence_multiclass_forward.7} parent=39 // pred_region
        %p265 = scmp.lt.s32.totalorder %s14, 1
        %s266 = scalar_select %p265, %s14, 1
        %s267 = scalar_lea.vmem %s5, %s266
      $region48: #{sentence_multiclass_forward.7} parent=39 // pred_fallthru
        _
    $region40: #{sentence_multiclass_forward.7} parent=5 // pred_fallthru
      _
    %p268 = scmp.le.s32.totalorder 1, %s14
    %p269 = scmp.lt.s32.totalorder %s14, 3
    %p270 = pnand %p268, %p269
    %p271 = pneg %p270
    // Predicated region
    $region49: #{sentence_multiclass_forward.7} parent=5 // pred_check
      _
    $region50: #{sentence_multiclass_forward.7} parent=5 // pred_check_branch
      %273 = sbr.rel (%p270) target = $region52
    $region51: #{sentence_multiclass_forward.7} parent=5 // pred_region
      %s274 = ssub.s32 %s14, 1
      %p275 = scmp.lt.s32.totalorder %s19, 1
      %s276 = scalar_select %p275, %s19, 1
      %s277 = smul.addr %s276, 8
      %s278 = scalar_lea.vmem %s0, %s277
      %p279 = pneg %p40
      %p280 = pneg %p37
      %p281 = pneg %p61
      %p282 = pneg %p58
      %p283 = pneg %p82
      %p284 = pneg %p79
      %p285 = pneg %p103
      %p286 = pneg %p100
      %p287 = pneg %p124
      %p288 = pneg %p121
      %p289 = scmp.lt.s32.totalorder %s19, 1
      %s290 = scalar_select %p289, %s19, 1
      %s291 = scalar_lea.vmem %s5, %s290
      %p292 = pneg %p150
      %p293 = pneg %p147
      %p294 = pneg %p171
      %p295 = pneg %p168
      %p296 = pneg %p192
      %p297 = pneg %p189
      %p298 = pneg %p218
      %p299 = pneg %p215
      %p300 = scmp.lt.s32.totalorder %s19, 1
      %s301 = scalar_select %p300, %s19, 1
      %s302 = smul.addr %s301, 8
      %s303 = scalar_lea.vmem %s8, %s302
      %p304 = scmp.lt.s32.totalorder %s19, 1
      %s305 = scalar_select %p304, %s19, 1
      %s306 = smul.addr %s305, 8
      %s307 = scalar_lea.vmem %s0, %s306
      %p308 = scmp.lt.s32.totalorder %s19, 1
      %s309 = scalar_select %p308, %s19, 1
      %s310 = scalar_lea.vmem %s5, %s309
      %p311 = scmp.lt.s32.totalorder %s19, 1
      %s312 = scalar_select %p311, %s19, 1
      %s313 = smul.addr %s312, 8
      %s314 = scalar_lea.vmem %s8, %s313
      %v316 = vld [vmem:[%s307] sm:$0xff]
      %v317 = vpack.c.bf16 %v316, %v316
      %v318 = vld [vmem:[%s1] sm:$0xff]
      %v319 = vld [vmem:[%s1 + $0x8] sm:$0xf]
      %v320 = vld [vmem:[%s1 + $0xc] sm:$0xff]
      %v321 = vld [vmem:[%s1 + $0x14] sm:$0xf]
      %v322 = vld [vmem:[%s1 + $0x18] sm:$0xff]
      %v323 = vld [vmem:[%s1 + $0x20] sm:$0xf]
      %v324 = vld [vmem:[%s1 + $0x24] sm:$0xff]
      %v325 = vld [vmem:[%s1 + $0x2c] sm:$0xf]
      %v326 = vld [vmem:[%s1 + $0x30] sm:$0xff]
      %v327 = vld [vmem:[%s1 + $0x38] sm:$0xf]
      %v328 = vld [vmem:[%s1 + $0x3c] sm:$0xff]
      %v329 = vld [vmem:[%s1 + $0x44] sm:$0xf]
      %v330 = vld [vmem:[%s1 + $0x48] sm:$0xff]
      %v331 = vld [vmem:[%s1 + $0x50] sm:$0xf]
      %v332 = vld [vmem:[%s1 + $0x54] sm:$0xff]
      %v333 = vld [vmem:[%s1 + $0x5c] sm:$0xf]
      %v334 = vld [vmem:[%s1 + $0x60] sm:$0xff]
      %v335 = vld [vmem:[%s1 + $0x68] sm:$0xf]
      %v336 = vld [vmem:[%s1 + $0x6c] sm:$0xff]
      %v337 = vld [vmem:[%s1 + $0x74] sm:$0xf]
      %v338 = vld [vmem:[%s1 + $0x78] sm:$0xff]
      %v339 = vld [vmem:[%s1 + $0x80] sm:$0xf]
      %v340 = vld [vmem:[%s1 + $0x84] sm:$0xff]
      %v341 = vld [vmem:[%s1 + $0x8c] sm:$0xf]
      %v342 = vld [vmem:[%s1 + $0x90] sm:$0xff]
      %v343 = vld [vmem:[%s1 + $0x98] sm:$0xf]
      %v344 = vld [vmem:[%s1 + $0x9c] sm:$0xff]
      %v345 = vld [vmem:[%s1 + $0xa4] sm:$0xf]
      %v346 = vld [vmem:[%s1 + $0xa8] sm:$0xff]
      %v347 = vld [vmem:[%s1 + $0xb0] sm:$0xf]
      %v348 = vld [vmem:[%s1 + $0xb4] sm:$0xff]
      %v349 = vld [vmem:[%s1 + $0xbc] sm:$0xf]
      %v350 = vld [vmem:[%s2] sm:$0x7]
      %v352 = vlaneseq
      %v353 = vshrl.u32 %v352, 7
      %v354 = vsub.s32 0, %v353
      %v355 = vrot.slane %v350, %v354
      %v356 = vlaneseq
      %v357 = vshrl.u32 %v356, 7
      %v358 = vsub.s32 1, %v357
      %v359 = vrot.slane %v350, %v358
      %v360 = vlaneseq
      %v361 = vshrl.u32 %v360, 7
      %v362 = vsub.s32 2, %v361
      %v363 = vrot.slane %v350, %v362
      %v399 = vunpack.c.l.b16 %v318
      %v400 = vunpack.c.h.b16 %v318
      %v401 = vunpack.c.l.b16 %v319
      %v402 = vunpack.c.l.b16 %v320
      %v403 = vunpack.c.h.b16 %v320
      %v404 = vunpack.c.l.b16 %v321
      %v405 = vunpack.c.l.b16 %v322
      %v406 = vunpack.c.h.b16 %v322
      %v407 = vunpack.c.l.b16 %v323
      %v408 = vunpack.c.l.b16 %v324
      %v409 = vunpack.c.h.b16 %v324
      %v410 = vunpack.c.l.b16 %v325
      %v411 = vunpack.c.l.b16 %v326
      %v412 = vunpack.c.h.b16 %v326
      %v413 = vunpack.c.l.b16 %v327
      %v414 = vunpack.c.l.b16 %v328
      %v415 = vunpack.c.h.b16 %v328
      %v416 = vunpack.c.l.b16 %v329
      %v417 = vunpack.c.l.b16 %v330
      %v418 = vunpack.c.h.b16 %v330
      %v419 = vunpack.c.l.b16 %v331
      %v420 = vunpack.c.l.b16 %v332
      %v421 = vunpack.c.h.b16 %v332
      %v422 = vunpack.c.l.b16 %v333
      %v423 = vunpack.c.l.b16 %v334
      %v424 = vunpack.c.h.b16 %v334
      %v425 = vunpack.c.l.b16 %v335
      %v426 = vunpack.c.l.b16 %v336
      %v427 = vunpack.c.h.b16 %v336
      %v428 = vunpack.c.l.b16 %v337
      %v429 = vunpack.c.l.b16 %v338
      %v430 = vunpack.c.h.b16 %v338
      %v431 = vunpack.c.l.b16 %v339
      %v432 = vunpack.c.l.b16 %v340
      %v433 = vunpack.c.h.b16 %v340
      %v434 = vunpack.c.l.b16 %v341
      %v435 = vunpack.c.l.b16 %v342
      %v436 = vunpack.c.h.b16 %v342
      %v437 = vunpack.c.l.b16 %v343
      %v438 = vunpack.c.l.b16 %v344
      %v439 = vunpack.c.h.b16 %v344
      %v440 = vunpack.c.l.b16 %v345
      %v441 = vunpack.c.l.b16 %v346
      %v442 = vunpack.c.h.b16 %v346
      %v443 = vunpack.c.l.b16 %v347
      %v444 = vunpack.c.l.b16 %v348
      %v445 = vunpack.c.h.b16 %v348
      %v446 = vunpack.c.l.b16 %v349
      %v447 = vpack.c.b16 %v402, %v399
      %v448 = vpack.c.b16 %v403, %v400
      %v449 = vpack.c.b16 %v404, %v401
      %v450 = vpack.c.b16 %v408, %v405
      %v451 = vpack.c.b16 %v409, %v406
      %v452 = vpack.c.b16 %v410, %v407
      %v453 = vpack.c.b16 %v414, %v411
      %v454 = vpack.c.b16 %v415, %v412
      %v455 = vpack.c.b16 %v416, %v413
      %v456 = vpack.c.b16 %v420, %v417
      %v457 = vpack.c.b16 %v421, %v418
      %v458 = vpack.c.b16 %v422, %v419
      %v459 = vpack.c.b16 %v426, %v423
      %v460 = vpack.c.b16 %v427, %v424
      %v461 = vpack.c.b16 %v428, %v425
      %v462 = vpack.c.b16 %v432, %v429
      %v463 = vpack.c.b16 %v433, %v430
      %v464 = vpack.c.b16 %v434, %v431
      %v465 = vpack.c.b16 %v438, %v435
      %v466 = vpack.c.b16 %v439, %v436
      %v467 = vpack.c.b16 %v440, %v437
      %v468 = vpack.c.b16 %v444, %v441
      %v469 = vpack.c.b16 %v445, %v442
      %v470 = vpack.c.b16 %v446, %v443
      %495 = vmatprep.subr.bf16.mxu0 %v448
      %496 = vmatpush1.bf16.msra.mxu0 %v447
      %497 = vmatprep.subr.bf16.mxu0 %v451
      %498 = vmatpush1.bf16.msra.mxu0 %v450
      %499 = vmatprep.subr.bf16.mxu0 %v454
      %500 = vmatpush1.bf16.msra.mxu0 %v453
      %501 = vmatprep.subr.bf16.mxu0 %v457
      %502 = vmatpush1.bf16.msra.mxu0 %v456
      %503 = vmatprep.subr.bf16.mxu0 %v460
      %504 = vmatpush1.bf16.msra.mxu0 %v459
      %505 = vmatprep.subr.bf16.mxu0 %v463
      %506 = vmatpush1.bf16.msra.mxu0 %v462
      %507 = vmatprep.subr.bf16.mxu0 %v466
      %508 = vmatpush1.bf16.msra.mxu0 %v465
      %509 = vmatprep.subr.bf16.mxu0 %v469
      %510 = vmatpush1.bf16.msra.mxu0 %v468
      %511 = vmatprep.subr.bf16.mxu0 0
      %512 = vmatpush1.bf16.msra.mxu0 0
      %513 = vmatprep.subr.bf16.mxu0 0
      %514 = vmatpush1.bf16.msra.mxu0 0
      %515 = vmatprep.subr.bf16.mxu0 0
      %516 = vmatpush1.bf16.msra.mxu0 0
      %517 = vmatprep.subr.bf16.mxu0 0
      %518 = vmatpush1.bf16.msra.mxu0 0
      %519 = vmatprep.subr.bf16.mxu0 0
      %520 = vmatpush1.bf16.msra.mxu0 0
      %521 = vmatprep.subr.bf16.mxu0 0
      %522 = vmatpush1.bf16.msra.mxu0 0
      %523 = vmatprep.subr.bf16.mxu0 0
      %524 = vmatpush1.bf16.msra.mxu0 0
      %525 = vmatprep.subr.bf16.mxu0 0
      %526 = vmatpush1.bf16.msra.mxu0 0
      %527 = vmatprep.mubr.bf16.mxu0 0
      %528 = vmatmul.mubr.bf16.gmra.mrb[0].mxu0 %v317
      %v529 = vpop.f32.mrb[0].mxu0
      %v530 = vadd.f32 %v355, %v529
      %v531 = vpop.f32.mrb[0].mxu0
      %v532 = vadd.f32 %v359, %v531
      %v533 = vpop.f32.mrb[0].mxu0
      %v534 = vpop.f32.mrb[0].mxu0
      %535 = vdwg.mxu0
      %536 = vmatprep.subr.bf16.mxu0 0
      %537 = vmatpush1.bf16.msra.mxu0 %v449
      %538 = vmatprep.subr.bf16.mxu0 0
      %539 = vmatpush1.bf16.msra.mxu0 %v452
      %540 = vmatprep.subr.bf16.mxu0 0
      %541 = vmatpush1.bf16.msra.mxu0 %v455
      %542 = vmatprep.subr.bf16.mxu0 0
      %543 = vmatpush1.bf16.msra.mxu0 %v458
      %544 = vmatprep.subr.bf16.mxu0 0
      %545 = vmatpush1.bf16.msra.mxu0 %v461
      %546 = vmatprep.subr.bf16.mxu0 0
      %547 = vmatpush1.bf16.msra.mxu0 %v464
      %548 = vmatprep.subr.bf16.mxu0 0
      %549 = vmatpush1.bf16.msra.mxu0 %v467
      %550 = vmatprep.subr.bf16.mxu0 0
      %551 = vmatpush1.bf16.msra.mxu0 %v470
      %552 = vmatprep.subr.bf16.mxu0 0
      %553 = vmatpush1.bf16.msra.mxu0 0
      %554 = vmatprep.subr.bf16.mxu0 0
      %555 = vmatpush1.bf16.msra.mxu0 0
      %556 = vmatprep.subr.bf16.mxu0 0
      %557 = vmatpush1.bf16.msra.mxu0 0
      %558 = vmatprep.subr.bf16.mxu0 0
      %559 = vmatpush1.bf16.msra.mxu0 0
      %560 = vmatprep.subr.bf16.mxu0 0
      %561 = vmatpush1.bf16.msra.mxu0 0
      %562 = vmatprep.subr.bf16.mxu0 0
      %563 = vmatpush1.bf16.msra.mxu0 0
      %564 = vmatprep.subr.bf16.mxu0 0
      %565 = vmatpush1.bf16.msra.mxu0 0
      %566 = vmatprep.subr.bf16.mxu0 0
      %567 = vmatpush1.bf16.msra.mxu0 0
      %568 = vmatprep.mubr.bf16.mxu0 0
      %569 = vmatmul.mubr.bf16.gmra.mrb[0].mxu0 %v317
      %v570 = vpop.f32.mrb[0].mxu0
      %v571 = vadd.f32 %v363, %v570
      %v572 = vpop.f32.mrb[0].mxu0
      %v573 = vpop.f32.mrb[0].mxu0
      %v574 = vpop.f32.mrb[0].mxu0
      %575 = vdwg.mxu0
      %v576 = vld [vmem:[%s310] sm:$0x1]
      %v577 = vpack.c.bf16 %v530, %v530
      %v578 = vpack.c.bf16 %v532, %v532
      %vm579 = vcmask 261120
      %v581 = vsel %vm579, %v577, 0
      %v584 = vsel %vm579, %v578, 0
      %586 = vmatprep.subr.bf16.mxu0 0
      %587 = vmatpush1.bf16.xpose.msra.mxu0 %v584
      %588 = vmatprep.subr.bf16.mxu0 0
      %589 = vmatpush1.bf16.xpose.msra.mxu0 0
      %590 = vmatprep.subr.bf16.mxu0 0
      %591 = vmatpush1.bf16.xpose.msra.mxu0 0
      %592 = vmatprep.subr.bf16.mxu0 0
      %593 = vmatpush1.bf16.xpose.msra.mxu0 0
      %594 = vmatprep.subr.bf16.mxu0 0
      %595 = vmatpush1.bf16.xpose.msra.mxu0 0
      %596 = vmatprep.subr.bf16.mxu0 0
      %597 = vmatpush1.bf16.xpose.msra.mxu0 0
      %598 = vmatprep.subr.bf16.mxu0 0
      %599 = vmatpush1.bf16.xpose.msra.mxu0 0
      %600 = vmatprep.subr.bf16.mxu0 0
      %601 = vmatpush1.bf16.xpose.msra.mxu0 0
      %602 = vmatprep.subr.bf16.mxu0 0
      %603 = vmatpush1.bf16.xpose.msra.mxu0 0
      %604 = vmatprep.subr.bf16.mxu0 0
      %605 = vmatpush1.bf16.xpose.msra.mxu0 0
      %606 = vmatprep.subr.bf16.mxu0 0
      %607 = vmatpush1.bf16.xpose.msra.mxu0 0
      %608 = vmatprep.subr.bf16.mxu0 0
      %609 = vmatpush1.bf16.xpose.msra.mxu0 0
      %610 = vmatprep.subr.bf16.mxu0 0
      %611 = vmatpush1.bf16.xpose.msra.mxu0 0
      %612 = vmatprep.subr.bf16.mxu0 0
      %613 = vmatpush1.bf16.xpose.msra.mxu0 0
      %614 = vmatprep.subr.bf16.mxu0 0
      %615 = vmatpush1.bf16.xpose.msra.mxu0 0
      %616 = vmatprep.subr.bf16.mxu0 0
      %617 = vmatpush1.bf16.xpose.msra.mxu0 0
      %618 = vmatprep.mubr.bf16.mxu0 0
      %619 = vmatmul.mubr.bf16.gmra.mrb[0].mxu0 %v581
      %v620 = vpop.f32.mrb[0].mxu0
      %v621 = vadd.f32 0.0, %v620
      %v622 = vpop.f32.mrb[0].mxu0
      %v623 = vpop.f32.mrb[0].mxu0
      %v624 = vpop.f32.mrb[0].mxu0
      %625 = vdwg.mxu0
      %v626 = vmul.f32 %v621, 0.17677669
      %v628 = vlaneseq
      %v629 = vshrl.u32 %v628, 7
      %v630 = vsub.s32 0, %v629
      %v631 = vrot.slane %v576, %v630
      %v633 = vadd.f32 %v626, %v631
      %vm634 = vcmask 64512
      %v635 = vsel %vm634, %v633, -inf
      %636 = vmax.xlane.f32.xlu0 %v635
      %v637 = vpop.xlane.xlu0 %636
      %v638 = vsub.f32 %v633, %v637
      %v639 = vmul.f32 %v638, 1.442695
      %v640 = vpow.pop %v639
      %v641 = vsel %vm634, %v640, 0.0
      %642 = vadd.xlane.f32.xlu0 %v641
      %v643 = vpop.xlane.xlu0 %642
      %v644 = vrcp.pop %v643
      %v645 = vmul.f32 %v640, %v644
      %v646 = vpack.c.bf16 %v645, %v645
      %v647 = vpack.c.bf16 %v571, %v571
      %v649 = vsel %vm634, %v646, 0
      %vm651 = vcmask 1043456
      %v653 = vsel %vm651, %v647, 0
      %655 = vmatprep.subr.bf16.mxu0 0
      %656 = vmatpush1.bf16.msra.mxu0 %v653
      %657 = vmatprep.subr.bf16.mxu0 0
      %658 = vmatpush1.bf16.msra.mxu0 0
      %659 = vmatprep.subr.bf16.mxu0 0
      %660 = vmatpush1.bf16.msra.mxu0 0
      %661 = vmatprep.subr.bf16.mxu0 0
      %662 = vmatpush1.bf16.msra.mxu0 0
      %663 = vmatprep.subr.bf16.mxu0 0
      %664 = vmatpush1.bf16.msra.mxu0 0
      %665 = vmatprep.subr.bf16.mxu0 0
      %666 = vmatpush1.bf16.msra.mxu0 0
      %667 = vmatprep.subr.bf16.mxu0 0
      %668 = vmatpush1.bf16.msra.mxu0 0
      %669 = vmatprep.subr.bf16.mxu0 0
      %670 = vmatpush1.bf16.msra.mxu0 0
      %671 = vmatprep.subr.bf16.mxu0 0
      %672 = vmatpush1.bf16.msra.mxu0 0
      %673 = vmatprep.subr.bf16.mxu0 0
      %674 = vmatpush1.bf16.msra.mxu0 0
      %675 = vmatprep.subr.bf16.mxu0 0
      %676 = vmatpush1.bf16.msra.mxu0 0
      %677 = vmatprep.subr.bf16.mxu0 0
      %678 = vmatpush1.bf16.msra.mxu0 0
      %679 = vmatprep.subr.bf16.mxu0 0
      %680 = vmatpush1.bf16.msra.mxu0 0
      %681 = vmatprep.subr.bf16.mxu0 0
      %682 = vmatpush1.bf16.msra.mxu0 0
      %683 = vmatprep.subr.bf16.mxu0 0
      %684 = vmatpush1.bf16.msra.mxu0 0
      %685 = vmatprep.subr.bf16.mxu0 0
      %686 = vmatpush1.bf16.msra.mxu0 0
      %687 = vmatprep.mubr.bf16.mxu0 0
      %688 = vmatmul.mubr.bf16.gmra.mrb[0].mxu0 %v649
      %v689 = vpop.f32.mrb[0].mxu0
      %v690 = vadd.f32 0.0, %v689
      %v691 = vpop.f32.mrb[0].mxu0
      %v692 = vpop.f32.mrb[0].mxu0
      %v693 = vpop.f32.mrb[0].mxu0
      %694 = vdwg.mxu0
      %696 = vrot.lane.b32.xlu0 %v577, 96
      %v697 = vpop.permute.xlu0 %696
      %699 = vrot.lane.b32.xlu0 %v578, 96
      %v700 = vpop.permute.xlu0 %699
      %v702 = vsel %vm579, %v697, 0
      %v705 = vsel %vm579, %v700, 0
      %707 = vmatprep.subr.bf16.mxu0 0
      %708 = vmatpush1.bf16.xpose.msra.mxu0 %v705
      %709 = vmatprep.subr.bf16.mxu0 0
      %710 = vmatpush1.bf16.xpose.msra.mxu0 0
      %711 = vmatprep.subr.bf16.mxu0 0
      %712 = vmatpush1.bf16.xpose.msra.mxu0 0
      %713 = vmatprep.subr.bf16.mxu0 0
      %714 = vmatpush1.bf16.xpose.msra.mxu0 0
      %715 = vmatprep.subr.bf16.mxu0 0
      %716 = vmatpush1.bf16.xpose.msra.mxu0 0
      %717 = vmatprep.subr.bf16.mxu0 0
      %718 = vmatpush1.bf16.xpose.msra.mxu0 0
      %719 = vmatprep.subr.bf16.mxu0 0
      %720 = vmatpush1.bf16.xpose.msra.mxu0 0
      %721 = vmatprep.subr.bf16.mxu0 0
      %722 = vmatpush1.bf16.xpose.msra.mxu0 0
      %723 = vmatprep.subr.bf16.mxu0 0
      %724 = vmatpush1.bf16.xpose.msra.mxu0 0
      %725 = vmatprep.subr.bf16.mxu0 0
      %726 = vmatpush1.bf16.xpose.msra.mxu0 0
      %727 = vmatprep.subr.bf16.mxu0 0
      %728 = vmatpush1.bf16.xpose.msra.mxu0 0
      %729 = vmatprep.subr.bf16.mxu0 0
      %730 = vmatpush1.bf16.xpose.msra.mxu0 0
      %731 = vmatprep.subr.bf16.mxu0 0
      %732 = vmatpush1.bf16.xpose.msra.mxu0 0
      %733 = vmatprep.subr.bf16.mxu0 0
      %734 = vmatpush1.bf16.xpose.msra.mxu0 0
      %735 = vmatprep.subr.bf16.mxu0 0
      %736 = vmatpush1.bf16.xpose.msra.mxu0 0
      %737 = vmatprep.subr.bf16.mxu0 0
      %738 = vmatpush1.bf16.xpose.msra.mxu0 0
      %739 = vmatprep.mubr.bf16.mxu0 0
      %740 = vmatmul.mubr.bf16.gmra.mrb[0].mxu0 %v702
      %v741 = vpop.f32.mrb[0].mxu0
      %v742 = vadd.f32 0.0, %v741
      %v743 = vpop.f32.mrb[0].mxu0
      %v744 = vpop.f32.mrb[0].mxu0
      %v745 = vpop.f32.mrb[0].mxu0
      %746 = vdwg.mxu0
      %v747 = vmul.f32 %v742, 0.17677669
      %v748 = vadd.f32 %v747, %v631
      %v749 = vsel %vm634, %v748, -inf
      %750 = vmax.xlane.f32.xlu0 %v749
      %v751 = vpop.xlane.xlu0 %750
      %v752 = vsub.f32 %v748, %v751
      %v753 = vmul.f32 %v752, 1.442695
      %v754 = vpow.pop %v753
      %v755 = vsel %vm634, %v754, 0.0
      %756 = vadd.xlane.f32.xlu0 %v755
      %v757 = vpop.xlane.xlu0 %756
      %v758 = vrcp.pop %v757
      %v759 = vmul.f32 %v754, %v758
      %v760 = vpack.c.bf16 %v759, %v759
      %762 = vrot.lane.b32.xlu0 %v647, 96
      %v763 = vpop.permute.xlu0 %762
      %v765 = vsel %vm634, %v760, 0
      %v768 = vsel %vm651, %v763, 0
      %770 = vmatprep.subr.bf16.mxu0 0
      %771 = vmatpush1.bf16.msra.mxu0 %v768
      %772 = vmatprep.subr.bf16.mxu0 0
      %773 = vmatpush1.bf16.msra.mxu0 0
      %774 = vmatprep.subr.bf16.mxu0 0
      %775 = vmatpush1.bf16.msra.mxu0 0
      %776 = vmatprep.subr.bf16.mxu0 0
      %777 = vmatpush1.bf16.msra.mxu0 0
      %778 = vmatprep.subr.bf16.mxu0 0
      %779 = vmatpush1.bf16.msra.mxu0 0
      %780 = vmatprep.subr.bf16.mxu0 0
      %781 = vmatpush1.bf16.msra.mxu0 0
      %782 = vmatprep.subr.bf16.mxu0 0
      %783 = vmatpush1.bf16.msra.mxu0 0
      %784 = vmatprep.subr.bf16.mxu0 0
      %785 = vmatpush1.bf16.msra.mxu0 0
      %786 = vmatprep.subr.bf16.mxu0 0
      %787 = vmatpush1.bf16.msra.mxu0 0
      %788 = vmatprep.subr.bf16.mxu0 0
      %789 = vmatpush1.bf16.msra.mxu0 0
      %790 = vmatprep.subr.bf16.mxu0 0
      %791 = vmatpush1.bf16.msra.mxu0 0
      %792 = vmatprep.subr.bf16.mxu0 0
      %793 = vmatpush1.bf16.msra.mxu0 0
      %794 = vmatprep.subr.bf16.mxu0 0
      %795 = vmatpush1.bf16.msra.mxu0 0
      %796 = vmatprep.subr.bf16.mxu0 0
      %797 = vmatpush1.bf16.msra.mxu0 0
      %798 = vmatprep.subr.bf16.mxu0 0
      %799 = vmatpush1.bf16.msra.mxu0 0
      %800 = vmatprep.subr.bf16.mxu0 0
      %801 = vmatpush1.bf16.msra.mxu0 0
      %802 = vmatprep.mubr.bf16.mxu0 0
      %803 = vmatmul.mubr.bf16.gmra.mrb[0].mxu0 %v765
      %v804 = vpop.f32.mrb[0].mxu0
      %v805 = vadd.f32 0.0, %v804
      %v806 = vpop.f32.mrb[0].mxu0
      %v807 = vpop.f32.mrb[0].mxu0
      %v808 = vpop.f32.mrb[0].mxu0
      %809 = vdwg.mxu0
      %810 = vrot.lane.b32.xlu0 %v577, 64
      %v811 = vpop.permute.xlu0 %810
      %812 = vrot.lane.b32.xlu0 %v578, 64
      %v813 = vpop.permute.xlu0 %812
      %v815 = vsel %vm579, %v811, 0
      %v818 = vsel %vm579, %v813, 0
      %820 = vmatprep.subr.bf16.mxu0 0
      %821 = vmatpush1.bf16.xpose.msra.mxu0 %v818
      %822 = vmatprep.subr.bf16.mxu0 0
      %823 = vmatpush1.bf16.xpose.msra.mxu0 0
      %824 = vmatprep.subr.bf16.mxu0 0
      %825 = vmatpush1.bf16.xpose.msra.mxu0 0
      %826 = vmatprep.subr.bf16.mxu0 0
      %827 = vmatpush1.bf16.xpose.msra.mxu0 0
      %828 = vmatprep.subr.bf16.mxu0 0
      %829 = vmatpush1.bf16.xpose.msra.mxu0 0
      %830 = vmatprep.subr.bf16.mxu0 0
      %831 = vmatpush1.bf16.xpose.msra.mxu0 0
      %832 = vmatprep.subr.bf16.mxu0 0
      %833 = vmatpush1.bf16.xpose.msra.mxu0 0
      %834 = vmatprep.subr.bf16.mxu0 0
      %835 = vmatpush1.bf16.xpose.msra.mxu0 0
      %836 = vmatprep.subr.bf16.mxu0 0
      %837 = vmatpush1.bf16.xpose.msra.mxu0 0
      %838 = vmatprep.subr.bf16.mxu0 0
      %839 = vmatpush1.bf16.xpose.msra.mxu0 0
      %840 = vmatprep.subr.bf16.mxu0 0
      %841 = vmatpush1.bf16.xpose.msra.mxu0 0
      %842 = vmatprep.subr.bf16.mxu0 0
      %843 = vmatpush1.bf16.xpose.msra.mxu0 0
      %844 = vmatprep.subr.bf16.mxu0 0
      %845 = vmatpush1.bf16.xpose.msra.mxu0 0
      %846 = vmatprep.subr.bf16.mxu0 0
      %847 = vmatpush1.bf16.xpose.msra.mxu0 0
      %848 = vmatprep.subr.bf16.mxu0 0
      %849 = vmatpush1.bf16.xpose.msra.mxu0 0
      %850 = vmatprep.subr.bf16.mxu0 0
      %851 = vmatpush1.bf16.xpose.msra.mxu0 0
      %852 = vmatprep.mubr.bf16.mxu0 0
      %853 = vmatmul.mubr.bf16.gmra.mrb[0].mxu0 %v815
      %v854 = vpop.f32.mrb[0].mxu0
      %v855 = vadd.f32 0.0, %v854
      %v856 = vpop.f32.mrb[0].mxu0
      %v857 = vpop.f32.mrb[0].mxu0
      %v858 = vpop.f32.mrb[0].mxu0
      %859 = vdwg.mxu0
      %v860 = vmul.f32 %v855, 0.17677669
      %v861 = vadd.f32 %v860, %v631
      %v862 = vsel %vm634, %v861, -inf
      %863 = vmax.xlane.f32.xlu0 %v862
      %v864 = vpop.xlane.xlu0 %863
      %v865 = vsub.f32 %v861, %v864
      %v866 = vmul.f32 %v865, 1.442695
      %v867 = vpow.pop %v866
      %v868 = vsel %vm634, %v867, 0.0
      %869 = vadd.xlane.f32.xlu0 %v868
      %v870 = vpop.xlane.xlu0 %869
      %v871 = vrcp.pop %v870
      %v872 = vmul.f32 %v867, %v871
      %v873 = vpack.c.bf16 %v872, %v872
      %874 = vrot.lane.b32.xlu0 %v647, 64
      %v875 = vpop.permute.xlu0 %874
      %v877 = vsel %vm634, %v873, 0
      %v880 = vsel %vm651, %v875, 0
      %882 = vmatprep.subr.bf16.mxu0 0
      %883 = vmatpush1.bf16.msra.mxu0 %v880
      %884 = vmatprep.subr.bf16.mxu0 0
      %885 = vmatpush1.bf16.msra.mxu0 0
      %886 = vmatprep.subr.bf16.mxu0 0
      %887 = vmatpush1.bf16.msra.mxu0 0
      %888 = vmatprep.subr.bf16.mxu0 0
      %889 = vmatpush1.bf16.msra.mxu0 0
      %890 = vmatprep.subr.bf16.mxu0 0
      %891 = vmatpush1.bf16.msra.mxu0 0
      %892 = vmatprep.subr.bf16.mxu0 0
      %893 = vmatpush1.bf16.msra.mxu0 0
      %894 = vmatprep.subr.bf16.mxu0 0
      %895 = vmatpush1.bf16.msra.mxu0 0
      %896 = vmatprep.subr.bf16.mxu0 0
      %897 = vmatpush1.bf16.msra.mxu0 0
      %898 = vmatprep.subr.bf16.mxu0 0
      %899 = vmatpush1.bf16.msra.mxu0 0
      %900 = vmatprep.subr.bf16.mxu0 0
      %901 = vmatpush1.bf16.msra.mxu0 0
      %902 = vmatprep.subr.bf16.mxu0 0
      %903 = vmatpush1.bf16.msra.mxu0 0
      %904 = vmatprep.subr.bf16.mxu0 0
      %905 = vmatpush1.bf16.msra.mxu0 0
      %906 = vmatprep.subr.bf16.mxu0 0
      %907 = vmatpush1.bf16.msra.mxu0 0
      %908 = vmatprep.subr.bf16.mxu0 0
      %909 = vmatpush1.bf16.msra.mxu0 0
      %910 = vmatprep.subr.bf16.mxu0 0
      %911 = vmatpush1.bf16.msra.mxu0 0
      %912 = vmatprep.subr.bf16.mxu0 0
      %913 = vmatpush1.bf16.msra.mxu0 0
      %914 = vmatprep.mubr.bf16.mxu0 0
      %915 = vmatmul.mubr.bf16.gmra.mrb[0].mxu0 %v877
      %v916 = vpop.f32.mrb[0].mxu0
      %v917 = vadd.f32 0.0, %v916
      %v918 = vpop.f32.mrb[0].mxu0
      %v919 = vpop.f32.mrb[0].mxu0
      %v920 = vpop.f32.mrb[0].mxu0
      %921 = vdwg.mxu0
      %922 = vrot.lane.b32.xlu0 %v577, 32
      %v923 = vpop.permute.xlu0 %922
      %924 = vrot.lane.b32.xlu0 %v578, 32
      %v925 = vpop.permute.xlu0 %924
      %v927 = vsel %vm579, %v923, 0
      %v930 = vsel %vm579, %v925, 0
      %932 = vmatprep.subr.bf16.mxu0 0
      %933 = vmatpush1.bf16.xpose.msra.mxu0 %v930
      %934 = vmatprep.subr.bf16.mxu0 0
      %935 = vmatpush1.bf16.xpose.msra.mxu0 0
      %936 = vmatprep.subr.bf16.mxu0 0
      %937 = vmatpush1.bf16.xpose.msra.mxu0 0
      %938 = vmatprep.subr.bf16.mxu0 0
      %939 = vmatpush1.bf16.xpose.msra.mxu0 0
      %940 = vmatprep.subr.bf16.mxu0 0
      %941 = vmatpush1.bf16.xpose.msra.mxu0 0
      %942 = vmatprep.subr.bf16.mxu0 0
      %943 = vmatpush1.bf16.xpose.msra.mxu0 0
      %944 = vmatprep.subr.bf16.mxu0 0
      %945 = vmatpush1.bf16.xpose.msra.mxu0 0
      %946 = vmatprep.subr.bf16.mxu0 0
      %947 = vmatpush1.bf16.xpose.msra.mxu0 0
      %948 = vmatprep.subr.bf16.mxu0 0
      %949 = vmatpush1.bf16.xpose.msra.mxu0 0
      %950 = vmatprep.subr.bf16.mxu0 0
      %951 = vmatpush1.bf16.xpose.msra.mxu0 0
      %952 = vmatprep.subr.bf16.mxu0 0
      %953 = vmatpush1.bf16.xpose.msra.mxu0 0
      %954 = vmatprep.subr.bf16.mxu0 0
      %955 = vmatpush1.bf16.xpose.msra.mxu0 0
      %956 = vmatprep.subr.bf16.mxu0 0
      %957 = vmatpush1.bf16.xpose.msra.mxu0 0
      %958 = vmatprep.subr.bf16.mxu0 0
      %959 = vmatpush1.bf16.xpose.msra.mxu0 0
      %960 = vmatprep.subr.bf16.mxu0 0
      %961 = vmatpush1.bf16.xpose.msra.mxu0 0
      %962 = vmatprep.subr.bf16.mxu0 0
      %963 = vmatpush1.bf16.xpose.msra.mxu0 0
      %964 = vmatprep.mubr.bf16.mxu0 0
      %965 = vmatmul.mubr.bf16.gmra.mrb[0].mxu0 %v927
      %v966 = vpop.f32.mrb[0].mxu0
      %v967 = vadd.f32 0.0, %v966
      %v968 = vpop.f32.mrb[0].mxu0
      %v969 = vpop.f32.mrb[0].mxu0
      %v970 = vpop.f32.mrb[0].mxu0
      %971 = vdwg.mxu0
      %v972 = vmul.f32 %v967, 0.17677669
      %v973 = vadd.f32 %v972, %v631
      %v974 = vsel %vm634, %v973, -inf
      %975 = vmax.xlane.f32.xlu0 %v974
      %v976 = vpop.xlane.xlu0 %975
      %v977 = vsub.f32 %v973, %v976
      %v978 = vmul.f32 %v977, 1.442695
      %v979 = vpow.pop %v978
      %v980 = vsel %vm634, %v979, 0.0
      %981 = vadd.xlane.f32.xlu0 %v980
      %v982 = vpop.xlane.xlu0 %981
      %v983 = vrcp.pop %v982
      %v984 = vmul.f32 %v979, %v983
      %v985 = vpack.c.bf16 %v984, %v984
      %986 = vrot.lane.b32.xlu0 %v647, 32
      %v987 = vpop.permute.xlu0 %986
      %v989 = vsel %vm634, %v985, 0
      %v992 = vsel %vm651, %v987, 0
      %994 = vmatprep.subr.bf16.mxu0 0
      %995 = vmatpush1.bf16.msra.mxu0 %v992
      %996 = vmatprep.subr.bf16.mxu0 0
      %997 = vmatpush1.bf16.msra.mxu0 0
      %998 = vmatprep.subr.bf16.mxu0 0
      %999 = vmatpush1.bf16.msra.mxu0 0
      %1000 = vmatprep.subr.bf16.mxu0 0
      %1001 = vmatpush1.bf16.msra.mxu0 0
      %1002 = vmatprep.subr.bf16.mxu0 0
      %1003 = vmatpush1.bf16.msra.mxu0 0
      %1004 = vmatprep.subr.bf16.mxu0 0
      %1005 = vmatpush1.bf16.msra.mxu0 0
      %1006 = vmatprep.subr.bf16.mxu0 0
      %1007 = vmatpush1.bf16.msra.mxu0 0
      %1008 = vmatprep.subr.bf16.mxu0 0
      %1009 = vmatpush1.bf16.msra.mxu0 0
      %1010 = vmatprep.subr.bf16.mxu0 0
      %1011 = vmatpush1.bf16.msra.mxu0 0
      %1012 = vmatprep.subr.bf16.mxu0 0
      %1013 = vmatpush1.bf16.msra.mxu0 0
      %1014 = vmatprep.subr.bf16.mxu0 0
      %1015 = vmatpush1.bf16.msra.mxu0 0
      %1016 = vmatprep.subr.bf16.mxu0 0
      %1017 = vmatpush1.bf16.msra.mxu0 0
      %1018 = vmatprep.subr.bf16.mxu0 0
      %1019 = vmatpush1.bf16.msra.mxu0 0
      %1020 = vmatprep.subr.bf16.mxu0 0
      %1021 = vmatpush1.bf16.msra.mxu0 0
      %1022 = vmatprep.subr.bf16.mxu0 0
      %1023 = vmatpush1.bf16.msra.mxu0 0
      %1024 = vmatprep.subr.bf16.mxu0 0
      %1025 = vmatpush1.bf16.msra.mxu0 0
      %1026 = vmatprep.mubr.bf16.mxu0 0
      %1027 = vmatmul.mubr.bf16.gmra.mrb[0].mxu0 %v989
      %v1028 = vpop.f32.mrb[0].mxu0
      %v1029 = vadd.f32 0.0, %v1028
      %v1030 = vpop.f32.mrb[0].mxu0
      %v1031 = vpop.f32.mrb[0].mxu0
      %v1032 = vpop.f32.mrb[0].mxu0
      %1033 = vdwg.mxu0
      %1035 = vrot.lane.b32.xlu0 %v805, 32
      %v1036 = vpop.permute.xlu0 %1035
      %1039 = vrot.lane.b32.xlu0 %v917, 64
      %v1040 = vpop.permute.xlu0 %1039
      %1043 = vrot.lane.b32.xlu0 %v1029, 96
      %v1044 = vpop.permute.xlu0 %1043
      %v1046 = vsel %vm579, %v690, %v1036
      %vm1047 = vcmask 523264
      %v1048 = vsel %vm1047, %v1046, %v1040
      %vm1049 = vcmask 785408
      %v1050 = vsel %vm1049, %v1048, %v1044
      %v1051 = vpack.c.bf16 %v1050, %v1050
      %v1052 = vld [vmem:[%s3] sm:$0xf]
      %v1053 = vld [vmem:[%s3 + $0x4] sm:$0xf]
      %v1054 = vld [vmem:[%s3 + $0x8] sm:$0xf]
      %v1055 = vld [vmem:[%s3 + $0xc] sm:$0xf]
      %v1056 = vld [vmem:[%s3 + $0x10] sm:$0xf]
      %v1057 = vld [vmem:[%s3 + $0x14] sm:$0xf]
      %v1058 = vld [vmem:[%s3 + $0x18] sm:$0xf]
      %v1059 = vld [vmem:[%s3 + $0x1c] sm:$0xf]
      %v1060 = vld [vmem:[%s3 + $0x20] sm:$0xf]
      %v1061 = vld [vmem:[%s3 + $0x24] sm:$0xf]
      %v1062 = vld [vmem:[%s3 + $0x28] sm:$0xf]
      %v1063 = vld [vmem:[%s3 + $0x2c] sm:$0xf]
      %v1064 = vld [vmem:[%s3 + $0x30] sm:$0xf]
      %v1065 = vld [vmem:[%s3 + $0x34] sm:$0xf]
      %v1066 = vld [vmem:[%s3 + $0x38] sm:$0xf]
      %v1067 = vld [vmem:[%s3 + $0x3c] sm:$0xf]
      %v1068 = vld [vmem:[%s4] sm:$0x1]
      %v1070 = vlaneseq
      %v1071 = vshrl.u32 %v1070, 7
      %v1072 = vsub.s32 0, %v1071
      %v1073 = vrot.slane %v1068, %v1072
      %v1091 = vunpack.c.l.b16 %v1052
      %v1092 = vunpack.c.l.b16 %v1053
      %v1093 = vunpack.c.l.b16 %v1054
      %v1094 = vunpack.c.l.b16 %v1055
      %v1095 = vunpack.c.l.b16 %v1056
      %v1096 = vunpack.c.l.b16 %v1057
      %v1097 = vunpack.c.l.b16 %v1058
      %v1098 = vunpack.c.l.b16 %v1059
      %v1099 = vunpack.c.l.b16 %v1060
      %v1100 = vunpack.c.l.b16 %v1061
      %v1101 = vunpack.c.l.b16 %v1062
      %v1102 = vunpack.c.l.b16 %v1063
      %v1103 = vunpack.c.l.b16 %v1064
      %v1104 = vunpack.c.l.b16 %v1065
      %v1105 = vunpack.c.l.b16 %v1066
      %v1106 = vunpack.c.l.b16 %v1067
      %v1107 = vpack.c.b16 %v1092, %v1091
      %v1108 = vpack.c.b16 %v1094, %v1093
      %v1109 = vpack.c.b16 %v1096, %v1095
      %v1110 = vpack.c.b16 %v1098, %v1097
      %v1111 = vpack.c.b16 %v1100, %v1099
      %v1112 = vpack.c.b16 %v1102, %v1101
      %v1113 = vpack.c.b16 %v1104, %v1103
      %v1114 = vpack.c.b16 %v1106, %v1105
      %1123 = vmatprep.subr.bf16.mxu0 0
      %1124 = vmatpush1.bf16.msra.mxu0 %v1107
      %1125 = vmatprep.subr.bf16.mxu0 0
      %1126 = vmatpush1.bf16.msra.mxu0 %v1108
      %1127 = vmatprep.subr.bf16.mxu0 0
      %1128 = vmatpush1.bf16.msra.mxu0 %v1109
      %1129 = vmatprep.subr.bf16.mxu0 0
      %1130 = vmatpush1.bf16.msra.mxu0 %v1110
      %1131 = vmatprep.subr.bf16.mxu0 0
      %1132 = vmatpush1.bf16.msra.mxu0 %v1111
      %1133 = vmatprep.subr.bf16.mxu0 0
      %1134 = vmatpush1.bf16.msra.mxu0 %v1112
      %1135 = vmatprep.subr.bf16.mxu0 0
      %1136 = vmatpush1.bf16.msra.mxu0 %v1113
      %1137 = vmatprep.subr.bf16.mxu0 0
      %1138 = vmatpush1.bf16.msra.mxu0 %v1114
      %1139 = vmatprep.subr.bf16.mxu0 0
      %1140 = vmatpush1.bf16.msra.mxu0 0
      %1141 = vmatprep.subr.bf16.mxu0 0
      %1142 = vmatpush1.bf16.msra.mxu0 0
      %1143 = vmatprep.subr.bf16.mxu0 0
      %1144 = vmatpush1.bf16.msra.mxu0 0
      %1145 = vmatprep.subr.bf16.mxu0 0
      %1146 = vmatpush1.bf16.msra.mxu0 0
      %1147 = vmatprep.subr.bf16.mxu0 0
      %1148 = vmatpush1.bf16.msra.mxu0 0
      %1149 = vmatprep.subr.bf16.mxu0 0
      %1150 = vmatpush1.bf16.msra.mxu0 0
      %1151 = vmatprep.subr.bf16.mxu0 0
      %1152 = vmatpush1.bf16.msra.mxu0 0
      %1153 = vmatprep.subr.bf16.mxu0 0
      %1154 = vmatpush1.bf16.msra.mxu0 0
      %1155 = vmatprep.mubr.bf16.mxu0 0
      %1156 = vmatmul.mubr.bf16.gmra.mrb[0].mxu0 %v1051
      %v1157 = vpop.f32.mrb[0].mxu0
      %v1158 = vadd.f32 %v1073, %v1157
      %v1159 = vpop.f32.mrb[0].mxu0
      %v1160 = vpop.f32.mrb[0].mxu0
      %v1161 = vpop.f32.mrb[0].mxu0
      %1162 = vdwg.mxu0
      %v1163 = vadd.f32 %v1158, %v316
      %v1164 = vld [vmem:[%s6] sm:$0x1]
      %v1165 = vld [vmem:[%s7] sm:$0x1]
      %1166 = vadd.xlane.f32.xlu0 %v1163
      %v1167 = vpop.xlane.xlu0 %1166
      %v1168 = vrcp.pop 128.0
      %v1169 = vmul.f32 %v1167, %v1168
      %v1170 = vmul.f32 %v1163, %v1163
      %1171 = vadd.xlane.f32.xlu0 %v1170
      %v1172 = vpop.xlane.xlu0 %1171
      %v1173 = vmul.f32 %v1172, %v1168
      %v1174 = vmul.f32 %v1169, %v1169
      %v1175 = vsub.f32 %v1173, %v1174
      %v1176 = vmax.f32 %v1175, 0.0
      %v1177 = vsub.f32 %v1163, %v1169
      %v1178 = vadd.f32 %v1176, 1e-12
      %v1179 = vrsqrt.pop %v1178
      %v1180 = vmul.f32 %v1177, %v1179
      %v1182 = vlaneseq
      %v1183 = vshrl.u32 %v1182, 7
      %v1184 = vsub.s32 0, %v1183
      %v1185 = vrot.slane %v1164, %v1184
      %v1187 = vmul.f32 %v1180, %v1185
      %v1189 = vlaneseq
      %v1190 = vshrl.u32 %v1189, 7
      %v1191 = vsub.s32 0, %v1190
      %v1192 = vrot.slane %v1165, %v1191
      %v1194 = vadd.f32 %v1187, %v1192
      %1195 = vst [vmem:[%s314] sm:$0xff] %v1194
      %p1196 = scmp.lt.s32.totalorder %s19, 1
      %s1197 = scalar_select %p1196, %s19, 1
      %s1198 = smul.addr %s1197, 8
      %s1199 = scalar_lea.vmem %s8, %s1198
      // Predicated region
      $region53: #{sentence_multiclass_forward.7} parent=51 // pred_check
        %p1200 = pneg %p215
      $region54: #{sentence_multiclass_forward.7} parent=51 // pred_check_branch
        %1202 = sbr.rel (%p1200) target = $region56
      $region55: #{sentence_multiclass_forward.7} parent=51 // pred_region
        _
      $region56: #{sentence_multiclass_forward.7} parent=51 // pred_fallthru
        _
    $region52: #{sentence_multiclass_forward.7} parent=5 // pred_fallthru
      _
    %p1203 = scmp.le.s32.totalorder 2, %s14
    // Predicated region
    $region57: #{sentence_multiclass_forward.7} parent=5 // pred_check
      %p1204 = pneg %p1203
    $region58: #{sentence_multiclass_forward.7} parent=5 // pred_check_branch
      %1206 = sbr.rel (%p1204) target = $region60
    $region59: #{sentence_multiclass_forward.7} parent=5 // pred_region
      %s1207 = ssub.s32 %s14, 2
      // Predicated region
      $region61: #{sentence_multiclass_forward.7} parent=59 // pred_check
        %p1208 = pneg %p221
      $region62: #{sentence_multiclass_forward.7} parent=59 // pred_check_branch
        %1210 = sbr.rel (%p1208) target = $region64
      $region63: #{sentence_multiclass_forward.7} parent=59 // pred_region
        %p1211 = scmp.lt.s32.totalorder %s20, 1
        %s1212 = scalar_select %p1211, %s20, 1
        %s1213 = smul.addr %s1212, 8
        %s1214 = scalar_lea.vmem %s8, %s1213
      $region64: #{sentence_multiclass_forward.7} parent=59 // pred_fallthru
        _
    $region60: #{sentence_multiclass_forward.7} parent=5 // pred_fallthru
      _
  $region6: #{sentence_multiclass_forward.7} parent=0 // loop_footer
    %s18 = sadd.s32 1, %s14
  $region7: #{sentence_multiclass_forward.7} parent=0 // loop_footer_branch
    %13 = sbr.rel target = $region3
  $region8: #{sentence_multiclass_forward.7} parent=0 // loop_exit
    _

</llo_original>
